<compile_context>
chip_gen: v5e
topology: v5e:2x2
jax: 0.10.0
libtpu: 0.0.40
codegen_flags: <defaults>
</compile_context>

<pallas_src>
import jax
import jax.numpy as jnp
from jax.experimental import pallas as pl
from jax.experimental.pallas import tpu as pltpu

IN_BANDS = 4
N_CLASSES = 10
C1, C2, C3, C4 = 8, 128, 256, 64
K2, K3, K4 = 5, 7, 3
BATCH = 2
LENGTH = 64                  # must equal C4 (=64): nn.Linear acts on the time axis
NL = BATCH * LENGTH          # 128 packed lanes (full vreg lane width)
OUT_PAD = 64                 # per-sample padded FC width -> lane-dense (64,128) output
EPS = 1e-5
STACK_ROWS = K3 * C2 + 1     # 897: biggest stacked-K slab (conv3), scratch is reused


def lstm_cnn_kernel(x_ref,
                    w1_ref, w2_ref, w3_ref, w4_ref,
                    wfc_ref, bfc_ref,
                    out_ref,
                    stack_ref):
    lane_pos = jax.lax.broadcasted_iota(jnp.int32, (1, NL), 1) % LENGTH
    ones_row = jnp.ones((1, NL), jnp.bfloat16)

    def conv_stacked(y, w_ref, k, cin):
        """'same' conv1d over the packed lane axis as ONE stacked-K MXU matmul.

        y:     (cin, NL) f32, batch packed along lanes (lane j = n*LENGTH + l)
        w_ref: (Cout, k*cin + 1) bf16, taps stacked along K, bias as last column
        Builds the (k*cin + 1, NL) bf16 stack in the reused VMEM scratch.
        """
        pad = (k - 1) // 2
        for t in range(k):                               # static taps -> k slab stores
            d = t - pad
            if d == 0:
                chunk = y
            else:
                rolled = pltpu.roll(y, shift=(-d) % NL, axis=1)     # XLU, ~free
                valid = jnp.logical_and(lane_pos + d >= 0, lane_pos + d < LENGTH)
                chunk = jnp.where(valid, rolled, 0.0)               # f32 mask (v5e-safe)
            stack_ref[t * cin:(t + 1) * cin, :] = chunk.astype(jnp.bfloat16)
        # Bias row: all-ones, NEVER masked (bias applies at every output position).
        stack_ref[k * cin:k * cin + 1, :] = ones_row
        rows = k * cin + 1
        return jnp.dot(w_ref[...], stack_ref[:rows, :],
                       preferred_element_type=jnp.float32)          # single MXU matmul

    def bn_relu(y):
        # Single-pass batch-stat BN: two INDEPENDENT lane reductions (can dual-issue
        # on the XLUs), var = E[x^2] - m^2; rsqrt goes to the EUP slot.
        # gamma=1 / beta=0 (fresh-module default init) -> affine is identity, folded away.
        s1 = jnp.sum(y, axis=-1, keepdims=True)
        s2 = jnp.sum(y * y, axis=-1, keepdims=True)
        m = s1 * (1.0 / NL)
        v = s2 * (1.0 / NL) - m * m
        return jnp.maximum((y - m) * jax.lax.rsqrt(v + EPS), 0.0)

    x = x_ref[...]                                       # (IN_BANDS, NL) f32

    y = conv_stacked(x, w1_ref, 1, IN_BANDS)             # conv1 (1x1)        -> (8,   NL)
    y = conv_stacked(y, w2_ref, K2, C1)                  # conv2 k=5 p=2      -> (128, NL)
    y = conv_stacked(y, w3_ref, K3, C2)                  # conv3 k=7 p=3      -> (256, NL)
    y = bn_relu(y)                                       # bn_2 + ReLU
    y = conv_stacked(y, w4_ref, K4, C3)                  # conv4 k=3 p=1      -> (64,  NL)
    y = bn_relu(y)                                       # bn_3 + ReLU

    # FC over the time axis, batch-packed via a block-diagonal zero-padded weight
    # so the store is a lane-dense, unmasked (64, 128) write.
    out = jnp.dot(y.astype(jnp.bfloat16), wfc_ref[...],
                  preferred_element_type=jnp.float32) + bfc_ref[...]
    out_ref[...] = out.astype(out_ref.dtype)


def init_params(key):
    ks = jax.random.split(key, 10)

    def uni(k, shape, fan_in):
        bound = 1.0 / jnp.sqrt(jnp.float32(fan_in))
        return jax.random.uniform(k, shape, jnp.float32, -bound, bound)

    p = {}
    p["w1"] = uni(ks[0], (C1, IN_BANDS, 1), IN_BANDS * 1)
    p["b1"] = uni(ks[1], (C1,), IN_BANDS * 1)
    p["w2"] = uni(ks[2], (C2, C1, K2), C1 * K2)
    p["b2"] = uni(ks[3], (C2,), C1 * K2)
    p["w3"] = uni(ks[4], (C3, C2, K3), C2 * K3)
    p["b3"] = uni(ks[5], (C3,), C2 * K3)
    p["w4"] = uni(ks[6], (C4, C3, K4), C3 * K4)
    p["b4"] = uni(ks[7], (C4,), C3 * K4)
    p["wfc"] = uni(ks[8], (N_CLASSES, C4), C4)
    p["bfc"] = uni(ks[9], (N_CLASSES,), C4)
    return p


def prepare_params(p):
    """ONE-TIME weight preprocessing (out of the hot path).

    Stacked-K conv weights with bias folded in as the last column (bf16,
    lane-dense), block-diagonal zero-padded FC weight, padded FC bias.
    """
    f32, bf16 = jnp.float32, jnp.bfloat16

    def stack_w(w, b):
        cout, cin, k = w.shape
        # column index t*cin + c holds w[cout, c, t]; last column = bias
        taps = jnp.transpose(w, (0, 2, 1)).reshape(cout, k * cin)
        return jnp.concatenate([taps, b[:, None]], axis=1).astype(bf16)

    # block-diagonal, zero-padded FC weight: (N*L, N*OUT_PAD) = (128, 128)
    wfc_pad = jnp.zeros((LENGTH, OUT_PAD), f32).at[:, :N_CLASSES].set(p["wfc"].T)
    wfc_big = jnp.kron(jnp.eye(BATCH, dtype=f32), wfc_pad).astype(bf16)
    bfc_pad = jnp.zeros((OUT_PAD,), f32).at[:N_CLASSES].set(p["bfc"])
    bfc_big = jnp.tile(bfc_pad, BATCH)[None, :]                      # (1, N*OUT_PAD) f32

    return {
        "w1s": stack_w(p["w1"], p["b1"]),   # (8,   5)
        "w2s": stack_w(p["w2"], p["b2"]),   # (128, 41)   lane-dense (was (5,128,8))
        "w3s": stack_w(p["w3"], p["b3"]),   # (256, 897)
        "w4s": stack_w(p["w4"], p["b4"]),   # (64,  769)
        "wfc": wfc_big,                     # (128, 128) bf16
        "bfc": bfc_big,                     # (1, 128) f32
    }


@jax.jit
def lstm_cnn_forward(x, prep):
    n, cin, L = x.shape
    assert (n, cin, L) == (BATCH, IN_BANDS, LENGTH)

    # pack the batch into the lane axis: (N, Cin, L) -> (Cin, N*L); fuses under jit
    x_packed = jnp.transpose(x.astype(jnp.float32), (1, 0, 2)).reshape(cin, n * L)

    vmem = pl.BlockSpec(memory_space=pltpu.MemorySpace.VMEM)
    out_packed = pl.pallas_call(
        lstm_cnn_kernel,
        out_shape=jax.ShapeDtypeStruct((C4, BATCH * OUT_PAD), jnp.float32),
        in_specs=[vmem] * 7,
        out_specs=vmem,
        scratch_shapes=[pltpu.VMEM((STACK_ROWS, NL), jnp.bfloat16)],  # reused tap stack
        cost_estimate=pl.CostEstimate(flops=75_000_000,
                                      transcendentals=320,
                                      bytes_accessed=700_000),
    )(x_packed, prep["w1s"], prep["w2s"], prep["w3s"], prep["w4s"],
      prep["wfc"], prep["bfc"])

    # (C4, N*OUT_PAD) -> (N, C4, n_classes); fuses under jit
    return out_packed.reshape(C4, BATCH, OUT_PAD).transpose(1, 0, 2)[:, :, :N_CLASSES]


def ref_forward(x, p):
    """Pure-JAX reference (lax.conv, f32 HIGHEST precision), identical semantics."""
    hp = jax.lax.Precision.HIGHEST

    def conv1d(y, w, b, pad):
        out = jax.lax.conv_general_dilated(
            y, w, window_strides=(1,), padding=[(pad, pad)],
            dimension_numbers=("NCH", "OIH", "NCH"), precision=hp)
        return out + b[None, :, None]

    def bn_relu(y):
        m = y.mean(axis=(0, 2), keepdims=True)
        v = ((y - m) ** 2).mean(axis=(0, 2), keepdims=True)
        return jnp.maximum((y - m) / jnp.sqrt(v + EPS), 0.0)   # gamma=1, beta=0

    y = conv1d(x, p["w1"], p["b1"], 0)
    y = conv1d(y, p["w2"], p["b2"], 2)
    y = conv1d(y, p["w3"], p["b3"], 3)
    y = bn_relu(y)
    y = conv1d(y, p["w4"], p["b4"], 1)
    y = bn_relu(y)
    return (jnp.einsum("ncl,kl->nck", y, p["wfc"], precision=hp)
            + p["bfc"][None, None, :])


if __name__ == "__main__":
    key = jax.random.PRNGKey(0)
    kx, kp = jax.random.split(key)
    x = jax.random.normal(kx, (BATCH, IN_BANDS, LENGTH), jnp.float32)
    params = init_params(kp)

    prep = prepare_params(params)          # one-time weight prep, cached outside hot path
    out = jax.block_until_ready(lstm_cnn_forward(x, prep))
    ref = jax.block_until_ready(ref_forward(x, params))

    assert out.shape == (BATCH, C4, N_CLASSES)
    # bf16 MXU operands (f32 accumulation) through 5 matmul layers + 2 BatchNorms
    # -> compare at bf16-level tolerance against the f32 HIGHEST-precision ref.
    assert jnp.allclose(out, ref, atol=5e-2, rtol=5e-2)
    print("KERNEL_OK")
</pallas_src>

<mosaic_0001>
module attributes {stable_mosaic.version = 11 : i64} {
  func.func @lstm_cnn_kernel(%arg0: memref<4x128xf32, #tpu.memory_space<vmem>>, %arg1: memref<8x5xbf16, #tpu.memory_space<vmem>>, %arg2: memref<128x41xbf16, #tpu.memory_space<vmem>>, %arg3: memref<256x897xbf16, #tpu.memory_space<vmem>>, %arg4: memref<64x769xbf16, #tpu.memory_space<vmem>>, %arg5: memref<128x128xbf16, #tpu.memory_space<vmem>>, %arg6: memref<1x128xf32, #tpu.memory_space<vmem>>, %arg7: memref<64x128xf32, #tpu.memory_space<vmem>>, %arg8: memref<897x128xbf16, #tpu.memory_space<vmem>>) attributes {dimension_semantics = [], scalar_prefetch = 0 : i64, scratch_operands = 1 : i64, tpu.core_type = #tpu.core_type<tc>} {
    %0 = tpu.iota {dimensions = array<i32: 1>} : vector<1x128xi32>
    %c64_i32 = arith.constant 64 : i32
    %c0_i32 = arith.constant 0 : i32
    %1 = arith.cmpi eq, %c64_i32, %c0_i32 : i32
    %c1_i32 = arith.constant 1 : i32
    %2 = arith.select %1, %c1_i32, %c64_i32 : i32
    %3 = vector.broadcast %2 : i32 to vector<1x128xi32>
    %4 = arith.remsi %0, %3 : vector<1x128xi32>
    %c0_i32_0 = arith.constant 0 : i32
    %5 = vector.broadcast %c0_i32_0 : i32 to vector<1x128xi32>
    %6 = arith.cmpi ne, %4, %5 : vector<1x128xi32>
    %c0_i32_1 = arith.constant 0 : i32
    %7 = vector.broadcast %c0_i32_1 : i32 to vector<1x128xi32>
    %8 = arith.cmpi slt, %4, %7 : vector<1x128xi32>
    %c0_i32_2 = arith.constant 0 : i32
    %9 = arith.cmpi slt, %2, %c0_i32_2 : i32
    %10 = vector.broadcast %9 : i1 to vector<1x128xi1>
    %11 = vector.broadcast %10 : vector<1x128xi1> to vector<1x128xi1>
    %12 = arith.xori %8, %11 : vector<1x128xi1>
    %13 = arith.andi %12, %6 : vector<1x128xi1>
    %14 = vector.broadcast %2 : i32 to vector<1x128xi32>
    %15 = arith.addi %4, %14 : vector<1x128xi32>
    %16 = arith.select %13, %15, %4 : vector<1x128xi1>, vector<1x128xi32>
    %cst = arith.constant 1.000000e+00 : bf16
    %17 = vector.broadcast %cst : bf16 to vector<1x128xbf16>
    %c0 = arith.constant 0 : index
    %c0_3 = arith.constant 0 : index
    %18 = vector.load %arg0[%c0, %c0_3] : memref<4x128xf32, #tpu.memory_space<vmem>>, vector<4x128xf32>
    %19 = arith.truncf %18 : vector<4x128xf32> to vector<4x128xbf16>
    %c0_4 = arith.constant 0 : index
    %c0_5 = arith.constant 0 : index
    %20 = vector.load %arg8[%c0_4, %c0_5] : memref<897x128xbf16, #tpu.memory_space<vmem>>, vector<4x128xbf16>
    tpu.vector_store %arg8[%c0_4, %c0_5], %19 {strides = array<i32>} : memref<897x128xbf16, #tpu.memory_space<vmem>>, vector<4x128xbf16>,
    %c4 = arith.constant 4 : index
    %c0_6 = arith.constant 0 : index
    %21 = vector.load %arg8[%c4, %c0_6] : memref<897x128xbf16, #tpu.memory_space<vmem>>, vector<1x128xbf16>
    tpu.vector_store %arg8[%c4, %c0_6], %17 {strides = array<i32>} : memref<897x128xbf16, #tpu.memory_space<vmem>>, vector<1x128xbf16>,
    %c0_7 = arith.constant 0 : index
    %c0_8 = arith.constant 0 : index
    %22 = vector.load %arg1[%c0_7, %c0_8] : memref<8x5xbf16, #tpu.memory_space<vmem>>, vector<8x5xbf16>
    %c0_9 = arith.constant 0 : index
    %c0_10 = arith.constant 0 : index
    %23 = vector.load %arg8[%c0_9, %c0_10] : memref<897x128xbf16, #tpu.memory_space<vmem>>, vector<5x128xbf16>
    %cst_11 = arith.constant dense<0.000000e+00> : vector<8x128xf32>
    %24 = tpu.matmul %22, %23, %cst_11 {dimension_numbers = #tpu.dot_dimension_numbers<[1], [0], [0], [1], [0, 0, 1, 1], [], []>} : vector<8x5xbf16>, vector<5x128xbf16>, vector<8x128xf32> -> vector<8x128xf32>
    %c2_i32 = arith.constant 2 : i32
    %25 = tpu.dynamic_rotate %24 by %c2_i32 dim 1 : vector<8x128xf32>, i32 -> vector<8x128xf32>
    %c-2_i32 = arith.constant -2 : i32
    %26 = vector.broadcast %c-2_i32 : i32 to vector<1x128xi32>
    %27 = arith.addi %16, %26 : vector<1x128xi32>
    %c0_i32_12 = arith.constant 0 : i32
    %28 = vector.broadcast %c0_i32_12 : i32 to vector<1x128xi32>
    %29 = arith.cmpi sge, %27, %28 : vector<1x128xi32>
    %c-2_i32_13 = arith.constant -2 : i32
    %30 = vector.broadcast %c-2_i32_13 : i32 to vector<1x128xi32>
    %31 = arith.addi %16, %30 : vector<1x128xi32>
    %c64_i32_14 = arith.constant 64 : i32
    %32 = vector.broadcast %c64_i32_14 : i32 to vector<1x128xi32>
    %33 = arith.cmpi slt, %31, %32 : vector<1x128xi32>
    %34 = arith.andi %29, %33 : vector<1x128xi1>
    %cst_15 = arith.constant 0.000000e+00 : f32
    %35 = vector.shape_cast %34 : vector<1x128xi1> to vector<1x128xi1>
    %36 = vector.broadcast %35 : vector<1x128xi1> to vector<8x128xi1>
    %37 = vector.broadcast %cst_15 : f32 to vector<8x128xf32>
    %38 = arith.select %36, %25, %37 : vector<8x128xi1>, vector<8x128xf32>
    %39 = arith.truncf %38 : vector<8x128xf32> to vector<8x128xbf16>
    %c0_16 = arith.constant 0 : index
    %c0_17 = arith.constant 0 : index
    %40 = vector.load %arg8[%c0_16, %c0_17] : memref<897x128xbf16, #tpu.memory_space<vmem>>, vector<8x128xbf16>
    tpu.vector_store %arg8[%c0_16, %c0_17], %39 {strides = array<i32>} : memref<897x128xbf16, #tpu.memory_space<vmem>>, vector<8x128xbf16>,
    %c1_i32_18 = arith.constant 1 : i32
    %41 = tpu.dynamic_rotate %24 by %c1_i32_18 dim 1 : vector<8x128xf32>, i32 -> vector<8x128xf32>
    %c-1_i32 = arith.constant -1 : i32
    %42 = vector.broadcast %c-1_i32 : i32 to vector<1x128xi32>
    %43 = arith.addi %16, %42 : vector<1x128xi32>
    %c0_i32_19 = arith.constant 0 : i32
    %44 = vector.broadcast %c0_i32_19 : i32 to vector<1x128xi32>
    %45 = arith.cmpi sge, %43, %44 : vector<1x128xi32>
    %c-1_i32_20 = arith.constant -1 : i32
    %46 = vector.broadcast %c-1_i32_20 : i32 to vector<1x128xi32>
    %47 = arith.addi %16, %46 : vector<1x128xi32>
    %c64_i32_21 = arith.constant 64 : i32
    %48 = vector.broadcast %c64_i32_21 : i32 to vector<1x128xi32>
    %49 = arith.cmpi slt, %47, %48 : vector<1x128xi32>
    %50 = arith.andi %45, %49 : vector<1x128xi1>
    %cst_22 = arith.constant 0.000000e+00 : f32
    %51 = vector.shape_cast %50 : vector<1x128xi1> to vector<1x128xi1>
    %52 = vector.broadcast %51 : vector<1x128xi1> to vector<8x128xi1>
    %53 = vector.broadcast %cst_22 : f32 to vector<8x128xf32>
    %54 = arith.select %52, %41, %53 : vector<8x128xi1>, vector<8x128xf32>
    %55 = arith.truncf %54 : vector<8x128xf32> to vector<8x128xbf16>
    %c8 = arith.constant 8 : index
    %c0_23 = arith.constant 0 : index
    %56 = vector.load %arg8[%c8, %c0_23] : memref<897x128xbf16, #tpu.memory_space<vmem>>, vector<8x128xbf16>
    tpu.vector_store %arg8[%c8, %c0_23], %55 {strides = array<i32>} : memref<897x128xbf16, #tpu.memory_space<vmem>>, vector<8x128xbf16>,
    %57 = arith.truncf %24 : vector<8x128xf32> to vector<8x128xbf16>
    %c16 = arith.constant 16 : index
    %c0_24 = arith.constant 0 : index
    %58 = vector.load %arg8[%c16, %c0_24] : memref<897x128xbf16, #tpu.memory_space<vmem>>, vector<8x128xbf16>
    tpu.vector_store %arg8[%c16, %c0_24], %57 {strides = array<i32>} : memref<897x128xbf16, #tpu.memory_space<vmem>>, vector<8x128xbf16>,
    %c127_i32 = arith.constant 127 : i32
    %59 = tpu.dynamic_rotate %24 by %c127_i32 dim 1 : vector<8x128xf32>, i32 -> vector<8x128xf32>
    %c1_i32_25 = arith.constant 1 : i32
    %60 = vector.broadcast %c1_i32_25 : i32 to vector<1x128xi32>
    %61 = arith.addi %16, %60 : vector<1x128xi32>
    %c0_i32_26 = arith.constant 0 : i32
    %62 = vector.broadcast %c0_i32_26 : i32 to vector<1x128xi32>
    %63 = arith.cmpi sge, %61, %62 : vector<1x128xi32>
    %c1_i32_27 = arith.constant 1 : i32
    %64 = vector.broadcast %c1_i32_27 : i32 to vector<1x128xi32>
    %65 = arith.addi %16, %64 : vector<1x128xi32>
    %c64_i32_28 = arith.constant 64 : i32
    %66 = vector.broadcast %c64_i32_28 : i32 to vector<1x128xi32>
    %67 = arith.cmpi slt, %65, %66 : vector<1x128xi32>
    %68 = arith.andi %63, %67 : vector<1x128xi1>
    %cst_29 = arith.constant 0.000000e+00 : f32
    %69 = vector.shape_cast %68 : vector<1x128xi1> to vector<1x128xi1>
    %70 = vector.broadcast %69 : vector<1x128xi1> to vector<8x128xi1>
    %71 = vector.broadcast %cst_29 : f32 to vector<8x128xf32>
    %72 = arith.select %70, %59, %71 : vector<8x128xi1>, vector<8x128xf32>
    %73 = arith.truncf %72 : vector<8x128xf32> to vector<8x128xbf16>
    %c24 = arith.constant 24 : index
    %c0_30 = arith.constant 0 : index
    %74 = vector.load %arg8[%c24, %c0_30] : memref<897x128xbf16, #tpu.memory_space<vmem>>, vector<8x128xbf16>
    tpu.vector_store %arg8[%c24, %c0_30], %73 {strides = array<i32>} : memref<897x128xbf16, #tpu.memory_space<vmem>>, vector<8x128xbf16>,
    %c126_i32 = arith.constant 126 : i32
    %75 = tpu.dynamic_rotate %24 by %c126_i32 dim 1 : vector<8x128xf32>, i32 -> vector<8x128xf32>
    %c2_i32_31 = arith.constant 2 : i32
    %76 = vector.broadcast %c2_i32_31 : i32 to vector<1x128xi32>
    %77 = arith.addi %16, %76 : vector<1x128xi32>
    %c0_i32_32 = arith.constant 0 : i32
    %78 = vector.broadcast %c0_i32_32 : i32 to vector<1x128xi32>
    %79 = arith.cmpi sge, %77, %78 : vector<1x128xi32>
    %c2_i32_33 = arith.constant 2 : i32
    %80 = vector.broadcast %c2_i32_33 : i32 to vector<1x128xi32>
    %81 = arith.addi %16, %80 : vector<1x128xi32>
    %c64_i32_34 = arith.constant 64 : i32
    %82 = vector.broadcast %c64_i32_34 : i32 to vector<1x128xi32>
    %83 = arith.cmpi slt, %81, %82 : vector<1x128xi32>
    %84 = arith.andi %79, %83 : vector<1x128xi1>
    %cst_35 = arith.constant 0.000000e+00 : f32
    %85 = vector.shape_cast %84 : vector<1x128xi1> to vector<1x128xi1>
    %86 = vector.broadcast %85 : vector<1x128xi1> to vector<8x128xi1>
    %87 = vector.broadcast %cst_35 : f32 to vector<8x128xf32>
    %88 = arith.select %86, %75, %87 : vector<8x128xi1>, vector<8x128xf32>
    %89 = arith.truncf %88 : vector<8x128xf32> to vector<8x128xbf16>
    %c32 = arith.constant 32 : index
    %c0_36 = arith.constant 0 : index
    %90 = vector.load %arg8[%c32, %c0_36] : memref<897x128xbf16, #tpu.memory_space<vmem>>, vector<8x128xbf16>
    tpu.vector_store %arg8[%c32, %c0_36], %89 {strides = array<i32>} : memref<897x128xbf16, #tpu.memory_space<vmem>>, vector<8x128xbf16>,
    %c40 = arith.constant 40 : index
    %c0_37 = arith.constant 0 : index
    %91 = vector.load %arg8[%c40, %c0_37] : memref<897x128xbf16, #tpu.memory_space<vmem>>, vector<1x128xbf16>
    tpu.vector_store %arg8[%c40, %c0_37], %17 {strides = array<i32>} : memref<897x128xbf16, #tpu.memory_space<vmem>>, vector<1x128xbf16>,
    %c0_38 = arith.constant 0 : index
    %c0_39 = arith.constant 0 : index
    %92 = vector.load %arg2[%c0_38, %c0_39] : memref<128x41xbf16, #tpu.memory_space<vmem>>, vector<128x41xbf16>
    %c0_40 = arith.constant 0 : index
    %c0_41 = arith.constant 0 : index
    %93 = vector.load %arg8[%c0_40, %c0_41] : memref<897x128xbf16, #tpu.memory_space<vmem>>, vector<41x128xbf16>
    %cst_42 = arith.constant dense<0.000000e+00> : vector<128x128xf32>
    %94 = tpu.matmul %92, %93, %cst_42 {dimension_numbers = #tpu.dot_dimension_numbers<[1], [0], [0], [1], [0, 0, 1, 1], [], []>} : vector<128x41xbf16>, vector<41x128xbf16>, vector<128x128xf32> -> vector<128x128xf32>
    %c3_i32 = arith.constant 3 : i32
    %95 = tpu.dynamic_rotate %94 by %c3_i32 dim 1 : vector<128x128xf32>, i32 -> vector<128x128xf32>
    %c-3_i32 = arith.constant -3 : i32
    %96 = vector.broadcast %c-3_i32 : i32 to vector<1x128xi32>
    %97 = arith.addi %16, %96 : vector<1x128xi32>
    %c0_i32_43 = arith.constant 0 : i32
    %98 = vector.broadcast %c0_i32_43 : i32 to vector<1x128xi32>
    %99 = arith.cmpi sge, %97, %98 : vector<1x128xi32>
    %c-3_i32_44 = arith.constant -3 : i32
    %100 = vector.broadcast %c-3_i32_44 : i32 to vector<1x128xi32>
    %101 = arith.addi %16, %100 : vector<1x128xi32>
    %c64_i32_45 = arith.constant 64 : i32
    %102 = vector.broadcast %c64_i32_45 : i32 to vector<1x128xi32>
    %103 = arith.cmpi slt, %101, %102 : vector<1x128xi32>
    %104 = arith.andi %99, %103 : vector<1x128xi1>
    %cst_46 = arith.constant 0.000000e+00 : f32
    %105 = vector.shape_cast %104 : vector<1x128xi1> to vector<1x128xi1>
    %106 = vector.broadcast %105 : vector<1x128xi1> to vector<128x128xi1>
    %107 = vector.broadcast %cst_46 : f32 to vector<128x128xf32>
    %108 = arith.select %106, %95, %107 : vector<128x128xi1>, vector<128x128xf32>
    %109 = arith.truncf %108 : vector<128x128xf32> to vector<128x128xbf16>
    %c0_47 = arith.constant 0 : index
    %c0_48 = arith.constant 0 : index
    %110 = vector.load %arg8[%c0_47, %c0_48] : memref<897x128xbf16, #tpu.memory_space<vmem>>, vector<128x128xbf16>
    tpu.vector_store %arg8[%c0_47, %c0_48], %109 {strides = array<i32>} : memref<897x128xbf16, #tpu.memory_space<vmem>>, vector<128x128xbf16>,
    %c2_i32_49 = arith.constant 2 : i32
    %111 = tpu.dynamic_rotate %94 by %c2_i32_49 dim 1 : vector<128x128xf32>, i32 -> vector<128x128xf32>
    %c-2_i32_50 = arith.constant -2 : i32
    %112 = vector.broadcast %c-2_i32_50 : i32 to vector<1x128xi32>
    %113 = arith.addi %16, %112 : vector<1x128xi32>
    %c0_i32_51 = arith.constant 0 : i32
    %114 = vector.broadcast %c0_i32_51 : i32 to vector<1x128xi32>
    %115 = arith.cmpi sge, %113, %114 : vector<1x128xi32>
    %c-2_i32_52 = arith.constant -2 : i32
    %116 = vector.broadcast %c-2_i32_52 : i32 to vector<1x128xi32>
    %117 = arith.addi %16, %116 : vector<1x128xi32>
    %c64_i32_53 = arith.constant 64 : i32
    %118 = vector.broadcast %c64_i32_53 : i32 to vector<1x128xi32>
    %119 = arith.cmpi slt, %117, %118 : vector<1x128xi32>
    %120 = arith.andi %115, %119 : vector<1x128xi1>
    %cst_54 = arith.constant 0.000000e+00 : f32
    %121 = vector.shape_cast %120 : vector<1x128xi1> to vector<1x128xi1>
    %122 = vector.broadcast %121 : vector<1x128xi1> to vector<128x128xi1>
    %123 = vector.broadcast %cst_54 : f32 to vector<128x128xf32>
    %124 = arith.select %122, %111, %123 : vector<128x128xi1>, vector<128x128xf32>
    %125 = arith.truncf %124 : vector<128x128xf32> to vector<128x128xbf16>
    %c128 = arith.constant 128 : index
    %c0_55 = arith.constant 0 : index
    %126 = vector.load %arg8[%c128, %c0_55] : memref<897x128xbf16, #tpu.memory_space<vmem>>, vector<128x128xbf16>
    tpu.vector_store %arg8[%c128, %c0_55], %125 {strides = array<i32>} : memref<897x128xbf16, #tpu.memory_space<vmem>>, vector<128x128xbf16>,
    %c1_i32_56 = arith.constant 1 : i32
    %127 = tpu.dynamic_rotate %94 by %c1_i32_56 dim 1 : vector<128x128xf32>, i32 -> vector<128x128xf32>
    %c-1_i32_57 = arith.constant -1 : i32
    %128 = vector.broadcast %c-1_i32_57 : i32 to vector<1x128xi32>
    %129 = arith.addi %16, %128 : vector<1x128xi32>
    %c0_i32_58 = arith.constant 0 : i32
    %130 = vector.broadcast %c0_i32_58 : i32 to vector<1x128xi32>
    %131 = arith.cmpi sge, %129, %130 : vector<1x128xi32>
    %c-1_i32_59 = arith.constant -1 : i32
    %132 = vector.broadcast %c-1_i32_59 : i32 to vector<1x128xi32>
    %133 = arith.addi %16, %132 : vector<1x128xi32>
    %c64_i32_60 = arith.constant 64 : i32
    %134 = vector.broadcast %c64_i32_60 : i32 to vector<1x128xi32>
    %135 = arith.cmpi slt, %133, %134 : vector<1x128xi32>
    %136 = arith.andi %131, %135 : vector<1x128xi1>
    %cst_61 = arith.constant 0.000000e+00 : f32
    %137 = vector.shape_cast %136 : vector<1x128xi1> to vector<1x128xi1>
    %138 = vector.broadcast %137 : vector<1x128xi1> to vector<128x128xi1>
    %139 = vector.broadcast %cst_61 : f32 to vector<128x128xf32>
    %140 = arith.select %138, %127, %139 : vector<128x128xi1>, vector<128x128xf32>
    %141 = arith.truncf %140 : vector<128x128xf32> to vector<128x128xbf16>
    %c256 = arith.constant 256 : index
    %c0_62 = arith.constant 0 : index
    %142 = vector.load %arg8[%c256, %c0_62] : memref<897x128xbf16, #tpu.memory_space<vmem>>, vector<128x128xbf16>
    tpu.vector_store %arg8[%c256, %c0_62], %141 {strides = array<i32>} : memref<897x128xbf16, #tpu.memory_space<vmem>>, vector<128x128xbf16>,
    %143 = arith.truncf %94 : vector<128x128xf32> to vector<128x128xbf16>
    %c384 = arith.constant 384 : index
    %c0_63 = arith.constant 0 : index
    %144 = vector.load %arg8[%c384, %c0_63] : memref<897x128xbf16, #tpu.memory_space<vmem>>, vector<128x128xbf16>
    tpu.vector_store %arg8[%c384, %c0_63], %143 {strides = array<i32>} : memref<897x128xbf16, #tpu.memory_space<vmem>>, vector<128x128xbf16>,
    %c127_i32_64 = arith.constant 127 : i32
    %145 = tpu.dynamic_rotate %94 by %c127_i32_64 dim 1 : vector<128x128xf32>, i32 -> vector<128x128xf32>
    %c1_i32_65 = arith.constant 1 : i32
    %146 = vector.broadcast %c1_i32_65 : i32 to vector<1x128xi32>
    %147 = arith.addi %16, %146 : vector<1x128xi32>
    %c0_i32_66 = arith.constant 0 : i32
    %148 = vector.broadcast %c0_i32_66 : i32 to vector<1x128xi32>
    %149 = arith.cmpi sge, %147, %148 : vector<1x128xi32>
    %c1_i32_67 = arith.constant 1 : i32
    %150 = vector.broadcast %c1_i32_67 : i32 to vector<1x128xi32>
    %151 = arith.addi %16, %150 : vector<1x128xi32>
    %c64_i32_68 = arith.constant 64 : i32
    %152 = vector.broadcast %c64_i32_68 : i32 to vector<1x128xi32>
    %153 = arith.cmpi slt, %151, %152 : vector<1x128xi32>
    %154 = arith.andi %149, %153 : vector<1x128xi1>
    %cst_69 = arith.constant 0.000000e+00 : f32
    %155 = vector.shape_cast %154 : vector<1x128xi1> to vector<1x128xi1>
    %156 = vector.broadcast %155 : vector<1x128xi1> to vector<128x128xi1>
    %157 = vector.broadcast %cst_69 : f32 to vector<128x128xf32>
    %158 = arith.select %156, %145, %157 : vector<128x128xi1>, vector<128x128xf32>
    %159 = arith.truncf %158 : vector<128x128xf32> to vector<128x128xbf16>
    %c512 = arith.constant 512 : index
    %c0_70 = arith.constant 0 : index
    %160 = vector.load %arg8[%c512, %c0_70] : memref<897x128xbf16, #tpu.memory_space<vmem>>, vector<128x128xbf16>
    tpu.vector_store %arg8[%c512, %c0_70], %159 {strides = array<i32>} : memref<897x128xbf16, #tpu.memory_space<vmem>>, vector<128x128xbf16>,
    %c126_i32_71 = arith.constant 126 : i32
    %161 = tpu.dynamic_rotate %94 by %c126_i32_71 dim 1 : vector<128x128xf32>, i32 -> vector<128x128xf32>
    %c2_i32_72 = arith.constant 2 : i32
    %162 = vector.broadcast %c2_i32_72 : i32 to vector<1x128xi32>
    %163 = arith.addi %16, %162 : vector<1x128xi32>
    %c0_i32_73 = arith.constant 0 : i32
    %164 = vector.broadcast %c0_i32_73 : i32 to vector<1x128xi32>
    %165 = arith.cmpi sge, %163, %164 : vector<1x128xi32>
    %c2_i32_74 = arith.constant 2 : i32
    %166 = vector.broadcast %c2_i32_74 : i32 to vector<1x128xi32>
    %167 = arith.addi %16, %166 : vector<1x128xi32>
    %c64_i32_75 = arith.constant 64 : i32
    %168 = vector.broadcast %c64_i32_75 : i32 to vector<1x128xi32>
    %169 = arith.cmpi slt, %167, %168 : vector<1x128xi32>
    %170 = arith.andi %165, %169 : vector<1x128xi1>
    %cst_76 = arith.constant 0.000000e+00 : f32
    %171 = vector.shape_cast %170 : vector<1x128xi1> to vector<1x128xi1>
    %172 = vector.broadcast %171 : vector<1x128xi1> to vector<128x128xi1>
    %173 = vector.broadcast %cst_76 : f32 to vector<128x128xf32>
    %174 = arith.select %172, %161, %173 : vector<128x128xi1>, vector<128x128xf32>
    %175 = arith.truncf %174 : vector<128x128xf32> to vector<128x128xbf16>
    %c640 = arith.constant 640 : index
    %c0_77 = arith.constant 0 : index
    %176 = vector.load %arg8[%c640, %c0_77] : memref<897x128xbf16, #tpu.memory_space<vmem>>, vector<128x128xbf16>
    tpu.vector_store %arg8[%c640, %c0_77], %175 {strides = array<i32>} : memref<897x128xbf16, #tpu.memory_space<vmem>>, vector<128x128xbf16>,
    %c125_i32 = arith.constant 125 : i32
    %177 = tpu.dynamic_rotate %94 by %c125_i32 dim 1 : vector<128x128xf32>, i32 -> vector<128x128xf32>
    %c3_i32_78 = arith.constant 3 : i32
    %178 = vector.broadcast %c3_i32_78 : i32 to vector<1x128xi32>
    %179 = arith.addi %16, %178 : vector<1x128xi32>
    %c0_i32_79 = arith.constant 0 : i32
    %180 = vector.broadcast %c0_i32_79 : i32 to vector<1x128xi32>
    %181 = arith.cmpi sge, %179, %180 : vector<1x128xi32>
    %c3_i32_80 = arith.constant 3 : i32
    %182 = vector.broadcast %c3_i32_80 : i32 to vector<1x128xi32>
    %183 = arith.addi %16, %182 : vector<1x128xi32>
    %c64_i32_81 = arith.constant 64 : i32
    %184 = vector.broadcast %c64_i32_81 : i32 to vector<1x128xi32>
    %185 = arith.cmpi slt, %183, %184 : vector<1x128xi32>
    %186 = arith.andi %181, %185 : vector<1x128xi1>
    %cst_82 = arith.constant 0.000000e+00 : f32
    %187 = vector.shape_cast %186 : vector<1x128xi1> to vector<1x128xi1>
    %188 = vector.broadcast %187 : vector<1x128xi1> to vector<128x128xi1>
    %189 = vector.broadcast %cst_82 : f32 to vector<128x128xf32>
    %190 = arith.select %188, %177, %189 : vector<128x128xi1>, vector<128x128xf32>
    %191 = arith.truncf %190 : vector<128x128xf32> to vector<128x128xbf16>
    %c768 = arith.constant 768 : index
    %c0_83 = arith.constant 0 : index
    %192 = vector.load %arg8[%c768, %c0_83] : memref<897x128xbf16, #tpu.memory_space<vmem>>, vector<128x128xbf16>
    tpu.vector_store %arg8[%c768, %c0_83], %191 {strides = array<i32>} : memref<897x128xbf16, #tpu.memory_space<vmem>>, vector<128x128xbf16>,
    %c896 = arith.constant 896 : index
    %c0_84 = arith.constant 0 : index
    %193 = vector.load %arg8[%c896, %c0_84] : memref<897x128xbf16, #tpu.memory_space<vmem>>, vector<1x128xbf16>
    tpu.vector_store %arg8[%c896, %c0_84], %17 {strides = array<i32>} : memref<897x128xbf16, #tpu.memory_space<vmem>>, vector<1x128xbf16>,
    %c0_85 = arith.constant 0 : index
    %c0_86 = arith.constant 0 : index
    %194 = vector.load %arg3[%c0_85, %c0_86] : memref<256x897xbf16, #tpu.memory_space<vmem>>, vector<256x897xbf16>
    %c0_87 = arith.constant 0 : index
    %c0_88 = arith.constant 0 : index
    %195 = vector.load %arg8[%c0_87, %c0_88] : memref<897x128xbf16, #tpu.memory_space<vmem>>, vector<897x128xbf16>
    %cst_89 = arith.constant dense<0.000000e+00> : vector<256x128xf32>
    %196 = tpu.matmul %194, %195, %cst_89 {dimension_numbers = #tpu.dot_dimension_numbers<[1], [0], [0], [1], [0, 0, 1, 1], [], []>} : vector<256x897xbf16>, vector<897x128xbf16>, vector<256x128xf32> -> vector<256x128xf32>
    %cst_90 = arith.constant dense<0.000000e+00> : vector<256xf32>
    %197 = vector.multi_reduction <add>, %196, %cst_90 [1] : vector<256x128xf32> to vector<256xf32>
    %198 = vector.shape_cast %197 : vector<256xf32> to vector<256x1xf32>
    %199 = arith.mulf %196, %196 : vector<256x128xf32>
    %cst_91 = arith.constant dense<0.000000e+00> : vector<256xf32>
    %200 = vector.multi_reduction <add>, %199, %cst_91 [1] : vector<256x128xf32> to vector<256xf32>
    %201 = vector.shape_cast %200 : vector<256xf32> to vector<256x1xf32>
    %cst_92 = arith.constant 7.812500e-03 : f32
    %202 = vector.broadcast %cst_92 : f32 to vector<256x1xf32>
    %203 = arith.mulf %198, %202 : vector<256x1xf32>
    %cst_93 = arith.constant 7.812500e-03 : f32
    %204 = vector.broadcast %cst_93 : f32 to vector<256x1xf32>
    %205 = arith.mulf %201, %204 : vector<256x1xf32>
    %206 = arith.mulf %203, %203 : vector<256x1xf32>
    %207 = arith.subf %205, %206 : vector<256x1xf32>
    %208 = vector.broadcast %203 : vector<256x1xf32> to vector<256x128xf32>
    %209 = arith.subf %196, %208 : vector<256x128xf32>
    %cst_94 = arith.constant 9.99999974E-6 : f32
    %210 = vector.broadcast %cst_94 : f32 to vector<256x1xf32>
    %211 = arith.addf %207, %210 : vector<256x1xf32>
    %212 = math.rsqrt %211 : vector<256x1xf32>
    %213 = vector.broadcast %212 : vector<256x1xf32> to vector<256x128xf32>
    %214 = arith.mulf %209, %213 : vector<256x128xf32>
    %cst_95 = arith.constant 0.000000e+00 : f32
    %215 = vector.broadcast %cst_95 : f32 to vector<256x128xf32>
    %216 = arith.maximumf %214, %215 : vector<256x128xf32>
    %c1_i32_96 = arith.constant 1 : i32
    %217 = tpu.dynamic_rotate %216 by %c1_i32_96 dim 1 : vector<256x128xf32>, i32 -> vector<256x128xf32>
    %c-1_i32_97 = arith.constant -1 : i32
    %218 = vector.broadcast %c-1_i32_97 : i32 to vector<1x128xi32>
    %219 = arith.addi %16, %218 : vector<1x128xi32>
    %c0_i32_98 = arith.constant 0 : i32
    %220 = vector.broadcast %c0_i32_98 : i32 to vector<1x128xi32>
    %221 = arith.cmpi sge, %219, %220 : vector<1x128xi32>
    %c-1_i32_99 = arith.constant -1 : i32
    %222 = vector.broadcast %c-1_i32_99 : i32 to vector<1x128xi32>
    %223 = arith.addi %16, %222 : vector<1x128xi32>
    %c64_i32_100 = arith.constant 64 : i32
    %224 = vector.broadcast %c64_i32_100 : i32 to vector<1x128xi32>
    %225 = arith.cmpi slt, %223, %224 : vector<1x128xi32>
    %226 = arith.andi %221, %225 : vector<1x128xi1>
    %cst_101 = arith.constant 0.000000e+00 : f32
    %227 = vector.shape_cast %226 : vector<1x128xi1> to vector<1x128xi1>
    %228 = vector.broadcast %227 : vector<1x128xi1> to vector<256x128xi1>
    %229 = vector.broadcast %cst_101 : f32 to vector<256x128xf32>
    %230 = arith.select %228, %217, %229 : vector<256x128xi1>, vector<256x128xf32>
    %231 = arith.truncf %230 : vector<256x128xf32> to vector<256x128xbf16>
    %c0_102 = arith.constant 0 : index
    %c0_103 = arith.constant 0 : index
    %232 = vector.load %arg8[%c0_102, %c0_103] : memref<897x128xbf16, #tpu.memory_space<vmem>>, vector<256x128xbf16>
    tpu.vector_store %arg8[%c0_102, %c0_103], %231 {strides = array<i32>} : memref<897x128xbf16, #tpu.memory_space<vmem>>, vector<256x128xbf16>,
    %233 = arith.truncf %216 : vector<256x128xf32> to vector<256x128xbf16>
    %c256_104 = arith.constant 256 : index
    %c0_105 = arith.constant 0 : index
    %234 = vector.load %arg8[%c256_104, %c0_105] : memref<897x128xbf16, #tpu.memory_space<vmem>>, vector<256x128xbf16>
    tpu.vector_store %arg8[%c256_104, %c0_105], %233 {strides = array<i32>} : memref<897x128xbf16, #tpu.memory_space<vmem>>, vector<256x128xbf16>,
    %c127_i32_106 = arith.constant 127 : i32
    %235 = tpu.dynamic_rotate %216 by %c127_i32_106 dim 1 : vector<256x128xf32>, i32 -> vector<256x128xf32>
    %c1_i32_107 = arith.constant 1 : i32
    %236 = vector.broadcast %c1_i32_107 : i32 to vector<1x128xi32>
    %237 = arith.addi %16, %236 : vector<1x128xi32>
    %c0_i32_108 = arith.constant 0 : i32
    %238 = vector.broadcast %c0_i32_108 : i32 to vector<1x128xi32>
    %239 = arith.cmpi sge, %237, %238 : vector<1x128xi32>
    %c1_i32_109 = arith.constant 1 : i32
    %240 = vector.broadcast %c1_i32_109 : i32 to vector<1x128xi32>
    %241 = arith.addi %16, %240 : vector<1x128xi32>
    %c64_i32_110 = arith.constant 64 : i32
    %242 = vector.broadcast %c64_i32_110 : i32 to vector<1x128xi32>
    %243 = arith.cmpi slt, %241, %242 : vector<1x128xi32>
    %244 = arith.andi %239, %243 : vector<1x128xi1>
    %cst_111 = arith.constant 0.000000e+00 : f32
    %245 = vector.shape_cast %244 : vector<1x128xi1> to vector<1x128xi1>
    %246 = vector.broadcast %245 : vector<1x128xi1> to vector<256x128xi1>
    %247 = vector.broadcast %cst_111 : f32 to vector<256x128xf32>
    %248 = arith.select %246, %235, %247 : vector<256x128xi1>, vector<256x128xf32>
    %249 = arith.truncf %248 : vector<256x128xf32> to vector<256x128xbf16>
    %c512_112 = arith.constant 512 : index
    %c0_113 = arith.constant 0 : index
    %250 = vector.load %arg8[%c512_112, %c0_113] : memref<897x128xbf16, #tpu.memory_space<vmem>>, vector<256x128xbf16>
    tpu.vector_store %arg8[%c512_112, %c0_113], %249 {strides = array<i32>} : memref<897x128xbf16, #tpu.memory_space<vmem>>, vector<256x128xbf16>,
    %c768_114 = arith.constant 768 : index
    %c0_115 = arith.constant 0 : index
    %251 = vector.load %arg8[%c768_114, %c0_115] : memref<897x128xbf16, #tpu.memory_space<vmem>>, vector<1x128xbf16>
    tpu.vector_store %arg8[%c768_114, %c0_115], %17 {strides = array<i32>} : memref<897x128xbf16, #tpu.memory_space<vmem>>, vector<1x128xbf16>,
    %c0_116 = arith.constant 0 : index
    %c0_117 = arith.constant 0 : index
    %252 = vector.load %arg4[%c0_116, %c0_117] : memref<64x769xbf16, #tpu.memory_space<vmem>>, vector<64x769xbf16>
    %c0_118 = arith.constant 0 : index
    %c0_119 = arith.constant 0 : index
    %253 = vector.load %arg8[%c0_118, %c0_119] : memref<897x128xbf16, #tpu.memory_space<vmem>>, vector<769x128xbf16>
    %cst_120 = arith.constant dense<0.000000e+00> : vector<64x128xf32>
    %254 = tpu.matmul %252, %253, %cst_120 {dimension_numbers = #tpu.dot_dimension_numbers<[1], [0], [0], [1], [0, 0, 1, 1], [], []>} : vector<64x769xbf16>, vector<769x128xbf16>, vector<64x128xf32> -> vector<64x128xf32>
    %cst_121 = arith.constant dense<0.000000e+00> : vector<64xf32>
    %255 = vector.multi_reduction <add>, %254, %cst_121 [1] : vector<64x128xf32> to vector<64xf32>
    %256 = vector.shape_cast %255 : vector<64xf32> to vector<64x1xf32>
    %257 = arith.mulf %254, %254 : vector<64x128xf32>
    %cst_122 = arith.constant dense<0.000000e+00> : vector<64xf32>
    %258 = vector.multi_reduction <add>, %257, %cst_122 [1] : vector<64x128xf32> to vector<64xf32>
    %259 = vector.shape_cast %258 : vector<64xf32> to vector<64x1xf32>
    %cst_123 = arith.constant 7.812500e-03 : f32
    %260 = vector.broadcast %cst_123 : f32 to vector<64x1xf32>
    %261 = arith.mulf %256, %260 : vector<64x1xf32>
    %cst_124 = arith.constant 7.812500e-03 : f32
    %262 = vector.broadcast %cst_124 : f32 to vector<64x1xf32>
    %263 = arith.mulf %259, %262 : vector<64x1xf32>
    %264 = arith.mulf %261, %261 : vector<64x1xf32>
    %265 = arith.subf %263, %264 : vector<64x1xf32>
    %266 = vector.broadcast %261 : vector<64x1xf32> to vector<64x128xf32>
    %267 = arith.subf %254, %266 : vector<64x128xf32>
    %cst_125 = arith.constant 9.99999974E-6 : f32
    %268 = vector.broadcast %cst_125 : f32 to vector<64x1xf32>
    %269 = arith.addf %265, %268 : vector<64x1xf32>
    %270 = math.rsqrt %269 : vector<64x1xf32>
    %271 = vector.broadcast %270 : vector<64x1xf32> to vector<64x128xf32>
    %272 = arith.mulf %267, %271 : vector<64x128xf32>
    %cst_126 = arith.constant 0.000000e+00 : f32
    %273 = vector.broadcast %cst_126 : f32 to vector<64x128xf32>
    %274 = arith.maximumf %272, %273 : vector<64x128xf32>
    %275 = arith.truncf %274 : vector<64x128xf32> to vector<64x128xbf16>
    %c0_127 = arith.constant 0 : index
    %c0_128 = arith.constant 0 : index
    %276 = vector.load %arg5[%c0_127, %c0_128] : memref<128x128xbf16, #tpu.memory_space<vmem>>, vector<128x128xbf16>
    %cst_129 = arith.constant dense<0.000000e+00> : vector<64x128xf32>
    %277 = tpu.matmul %275, %276, %cst_129 {dimension_numbers = #tpu.dot_dimension_numbers<[1], [0], [0], [1], [0, 0, 1, 1], [], []>} : vector<64x128xbf16>, vector<128x128xbf16>, vector<64x128xf32> -> vector<64x128xf32>
    %c0_130 = arith.constant 0 : index
    %c0_131 = arith.constant 0 : index
    %278 = vector.load %arg6[%c0_130, %c0_131] : memref<1x128xf32, #tpu.memory_space<vmem>>, vector<1x128xf32>
    %279 = vector.broadcast %278 : vector<1x128xf32> to vector<64x128xf32>
    %280 = arith.addf %277, %279 : vector<64x128xf32>
    %c0_132 = arith.constant 0 : index
    %c0_133 = arith.constant 0 : index
    %281 = vector.load %arg7[%c0_132, %c0_133] : memref<64x128xf32, #tpu.memory_space<vmem>>, vector<64x128xf32>
    tpu.vector_store %arg7[%c0_132, %c0_133], %280 {strides = array<i32>} : memref<64x128xf32, #tpu.memory_space<vmem>>, vector<64x128xf32>,
    return
  }
}

</mosaic_0001>

<llo_original>
// kernel: lstm_cnn_forward.1
$region0: #{lstm_cnn_forward.1}
  #allocation0 [shape = 'u32[]', space=smem, size = 0x4, offset = 0x4, fixed_abs, tag = 'smem constant byte address 0x4 - core index']
  #allocation1 [shape = 'u32[72,128]{1,0:T(1,128)}', space=vmem, size = 0x9000, scoped, tag = 'internal scratch']
  #allocation2 [shape = 'bf16[897,128]{1,0:T(8,128)(2,1)}', space=vmem, size = 0x38800, scoped, tag = 'scratch operand']
  %s0 = inlined_call_operand.vmem [shape: f32[4,128], index: 0, kind: input, shape index: {}]
  %s1 = inlined_call_operand.vmem [shape: bf16[8,5], index: 1, kind: input, shape index: {}]
  %s2 = inlined_call_operand.vmem [shape: bf16[128,41], index: 2, kind: input, shape index: {}]
  %s3 = inlined_call_operand.vmem [shape: bf16[256,897], index: 3, kind: input, shape index: {}]
  %s4 = inlined_call_operand.vmem [shape: bf16[64,769], index: 4, kind: input, shape index: {}]
  %s5 = inlined_call_operand.vmem [shape: bf16[128,128], index: 5, kind: input, shape index: {}]
  %s6 = inlined_call_operand.vmem [shape: f32[1,128], index: 6, kind: input, shape index: {}]
  %s7 = inlined_call_operand.vmem [shape: f32[64,128], index: 7, kind: output, shape index: {}]
  %s8 = sld [smem:[#allocation0]]
  $region38: #{lstm_cnn_forward.1} parent=0
    _
  %s10 = ssub.s32 1, %s8
  %s11 = scalar_select 0, %s10, %s8
  // Predicated region
  $region2: #{lstm_cnn_forward.1} parent=0 // pred_check
    _
  $region3: #{lstm_cnn_forward.1} parent=0 // pred_check_branch
    %13 = sbr.rel (0) target = $region5
  $region4: #{lstm_cnn_forward.1} parent=0 // pred_region
    _
  $region5: #{lstm_cnn_forward.1} parent=0 // pred_fallthru
    _
  // Predicated region
  $region6: #{lstm_cnn_forward.1} parent=0 // pred_check
    _
  $region7: #{lstm_cnn_forward.1} parent=0 // pred_check_branch
    %15 = sbr.rel (0) target = $region9
  $region8: #{lstm_cnn_forward.1} parent=0 // pred_region
    _
  $region9: #{lstm_cnn_forward.1} parent=0 // pred_fallthru
    _
  // Predicated region
  $region10: #{lstm_cnn_forward.1} parent=0 // pred_check
    _
  $region11: #{lstm_cnn_forward.1} parent=0 // pred_check_branch
    %17 = sbr.rel (0) target = $region13
  $region12: #{lstm_cnn_forward.1} parent=0 // pred_region
    _
  $region13: #{lstm_cnn_forward.1} parent=0 // pred_fallthru
    _
  // Predicated region
  $region14: #{lstm_cnn_forward.1} parent=0 // pred_check
    _
  $region15: #{lstm_cnn_forward.1} parent=0 // pred_check_branch
    %19 = sbr.rel (0) target = $region17
  $region16: #{lstm_cnn_forward.1} parent=0 // pred_region
    _
  $region17: #{lstm_cnn_forward.1} parent=0 // pred_fallthru
    _
  // Predicated region
  $region18: #{lstm_cnn_forward.1} parent=0 // pred_check
    _
  $region19: #{lstm_cnn_forward.1} parent=0 // pred_check_branch
    %21 = sbr.rel (0) target = $region21
  $region20: #{lstm_cnn_forward.1} parent=0 // pred_region
    _
  $region21: #{lstm_cnn_forward.1} parent=0 // pred_fallthru
    _
  // Predicated region
  $region22: #{lstm_cnn_forward.1} parent=0 // pred_check
    _
  $region23: #{lstm_cnn_forward.1} parent=0 // pred_check_branch
    %23 = sbr.rel (0) target = $region25
  $region24: #{lstm_cnn_forward.1} parent=0 // pred_region
    _
  $region25: #{lstm_cnn_forward.1} parent=0 // pred_fallthru
    _
  // Predicated region
  $region26: #{lstm_cnn_forward.1} parent=0 // pred_check
    _
  $region27: #{lstm_cnn_forward.1} parent=0 // pred_check_branch
    %25 = sbr.rel (0) target = $region29
  $region28: #{lstm_cnn_forward.1} parent=0 // pred_region
    _
  $region29: #{lstm_cnn_forward.1} parent=0 // pred_fallthru
    _
  %v28 = vlaneseq
  %v29 = vand.u32 %v28, 127
  %vm30 = vcmp.lt.s32.totalorder %v29, 0
  %v31 = vsub.s32 0, %v29
  %v32 = vsel %vm30, %v31, %v29
  %v33 = vshrl.u32 %v32, 6
  %v34 = vand.u32 %v32, 63
  %v35 = vsub.s32 0, %v34
  %v36 = vsel %vm30, %v35, %v34
  %vm37 = vcmp.ne.s32.totalorder %v36, 0
  %vm38 = vcmp.lt.s32.totalorder %v36, 0
  %vm39 = vmand %vm38, %vm37
  %v40 = vadd.s32 %v36, 64
  %v41 = vsel %vm39, %v40, %v36
  %v42 = vld [vmem:[%s0] sm:$0xf]
  %v43 = vpack.c.bf16 %v42, %v42
  %44 = vst [vmem:[#allocation2] sm:$0x3] %v43
  %vm45 = vcmask 1042434
  %vm46 = vsmask.f32 2304
  %vm47 = vmand %vm45, %vm46
  %v48 = vld [vmem:[#allocation2] sm:$0x4]
  %v49 = vsel %vm47, 1065369472, %v48
  %50 = vst [vmem:[#allocation2] sm:$0x4] %v49
  %v51 = vld [vmem:[%s1] sm:$0xf]
  %v52 = vld [vmem:[#allocation2] sm:$0x7]
  %vm53 = vcmask 39936
  %v55 = vsel %vm53, %v51, 0
  %vm57 = vcmask 1041408
  %vm58 = vcmask 1042432
  %v59 = vsel %vm57, 4294967295, 65535
  %v60 = vsel %vm58, %v59, 0
  %v62 = vand.u32 %v52, %v60
  %64 = vmatpush.bf16.msra.mxu0 0
  %65 = vmatpush.bf16.msra.mxu0 0
  %66 = vmatpush.bf16.msra.mxu0 0
  %67 = vmatpush.bf16.msra.mxu0 0
  %68 = vmatpush.bf16.msra.mxu0 0
  %69 = vmatpush.bf16.msra.mxu0 0
  %70 = vmatpush.bf16.msra.mxu0 0
  %71 = vmatpush.bf16.msra.mxu0 %v62
  %72 = vmatmul.bf16.gmra.mxu0 %v55
  %v73 = vpop.f32.mrf.mxu0
  %v74 = vadd.f32 0.0, %v73
  %v75 = vpop.f32.mrf.mxu0
  %76 = vdwg.mxu0
  %77 = vrot.lane.b32.xlu0 %v74, 2
  %v78 = vpop.permute.xlu0 %77
  %v79 = vadd.s32 %v41, 4294967294
  %vm80 = vcmp.ge.s32.totalorder %v79, 0
  %vm81 = vcmp.lt.s32.totalorder %v79, 64
  %vm82 = vmand %vm80, %vm81
  %v83 = vsel %vm82, 1, 0
  %vm84 = vcmp.eq.s32.totalorder %v83, 1
  %v85 = vsel %vm84, %v78, 0.0
  %v86 = vpack.c.bf16 %v85, %v85
  %87 = vst [vmem:[#allocation2] sm:$0xf] %v86
  %88 = vrot.lane.b32.xlu0 %v74, 1
  %v89 = vpop.permute.xlu0 %88
  %v90 = vadd.s32 %v41, 4294967295
  %vm91 = vcmp.ge.s32.totalorder %v90, 0
  %vm92 = vcmp.lt.s32.totalorder %v90, 64
  %vm93 = vmand %vm91, %vm92
  %v94 = vsel %vm93, 1, 0
  %vm95 = vcmp.eq.s32.totalorder %v94, 1
  %v96 = vsel %vm95, %v89, 0.0
  %v97 = vpack.c.bf16 %v96, %v96
  %98 = vst [vmem:[#allocation2 + $0x4] sm:$0xf] %v97
  %v99 = vpack.c.bf16 %v74, %v74
  %100 = vst [vmem:[#allocation2 + $0x8] sm:$0xf] %v99
  %101 = vrot.lane.b32.xlu0 %v74, 127
  %v102 = vpop.permute.xlu0 %101
  %v103 = vadd.s32 %v41, 1
  %vm104 = vcmp.ge.s32.totalorder %v103, 0
  %vm105 = vcmp.lt.s32.totalorder %v103, 64
  %vm106 = vmand %vm104, %vm105
  %v107 = vsel %vm106, 1, 0
  %vm108 = vcmp.eq.s32.totalorder %v107, 1
  %v109 = vsel %vm108, %v102, 0.0
  %v110 = vpack.c.bf16 %v109, %v109
  %111 = vst [vmem:[#allocation2 + $0xc] sm:$0xf] %v110
  %112 = vrot.lane.b32.xlu0 %v74, 126
  %v113 = vpop.permute.xlu0 %112
  %v114 = vadd.s32 %v41, 2
  %vm115 = vcmp.ge.s32.totalorder %v114, 0
  %vm116 = vcmp.lt.s32.totalorder %v114, 64
  %vm117 = vmand %vm115, %vm116
  %v118 = vsel %vm117, 1, 0
  %vm119 = vcmp.eq.s32.totalorder %v118, 1
  %v120 = vsel %vm119, %v113, 0.0
  %v121 = vpack.c.bf16 %v120, %v120
  %122 = vst [vmem:[#allocation2 + $0x10] sm:$0xf] %v121
  %vm123 = vcmask 1040384
  %vm124 = vsmask.f32 256
  %vm125 = vmand %vm123, %vm124
  %v126 = vld [vmem:[#allocation2 + $0x14] sm:$0x1]
  %v127 = vsel %vm125, 1065369472, %v126
  %128 = vst [vmem:[#allocation2 + $0x14] sm:$0x1] %v127
  %v129 = vld [vmem:[%s2] sm:$0xf]
  %v130 = vld [vmem:[%s2 + $0x4] sm:$0xf]
  %v131 = vld [vmem:[%s2 + $0x8] sm:$0xf]
  %v132 = vld [vmem:[%s2 + $0xc] sm:$0xf]
  %v133 = vld [vmem:[%s2 + $0x10] sm:$0xf]
  %v134 = vld [vmem:[%s2 + $0x14] sm:$0xf]
  %v135 = vld [vmem:[%s2 + $0x18] sm:$0xf]
  %v136 = vld [vmem:[%s2 + $0x1c] sm:$0xf]
  %v137 = vld [vmem:[%s2 + $0x20] sm:$0xf]
  %v138 = vld [vmem:[%s2 + $0x24] sm:$0xf]
  %v139 = vld [vmem:[%s2 + $0x28] sm:$0xf]
  %v140 = vld [vmem:[%s2 + $0x2c] sm:$0xf]
  %v141 = vld [vmem:[%s2 + $0x30] sm:$0xf]
  %v142 = vld [vmem:[%s2 + $0x34] sm:$0xf]
  %v143 = vld [vmem:[%s2 + $0x38] sm:$0xf]
  %v144 = vld [vmem:[%s2 + $0x3c] sm:$0xf]
  %v145 = vld [vmem:[#allocation2] sm:$0xf]
  %v146 = vld [vmem:[#allocation2 + $0x4] sm:$0xf]
  %v147 = vld [vmem:[#allocation2 + $0x8] sm:$0xf]
  %v148 = vld [vmem:[#allocation2 + $0xc] sm:$0xf]
  %v149 = vld [vmem:[#allocation2 + $0x10] sm:$0xf]
  %v150 = vld [vmem:[#allocation2 + $0x14] sm:$0x1]
  %v167 = vunpack.c.l.b16 %v129
  %v168 = vunpack.c.l.b16 %v130
  %v169 = vunpack.c.l.b16 %v131
  %v170 = vunpack.c.l.b16 %v132
  %v171 = vunpack.c.l.b16 %v133
  %v172 = vunpack.c.l.b16 %v134
  %v173 = vunpack.c.l.b16 %v135
  %v174 = vunpack.c.l.b16 %v136
  %v175 = vunpack.c.l.b16 %v137
  %v176 = vunpack.c.l.b16 %v138
  %v177 = vunpack.c.l.b16 %v139
  %v178 = vunpack.c.l.b16 %v140
  %v179 = vunpack.c.l.b16 %v141
  %v180 = vunpack.c.l.b16 %v142
  %v181 = vunpack.c.l.b16 %v143
  %v182 = vunpack.c.l.b16 %v144
  %v183 = vpack.c.b16 %v168, %v167
  %v184 = vpack.c.b16 %v170, %v169
  %v185 = vpack.c.b16 %v172, %v171
  %v186 = vpack.c.b16 %v174, %v173
  %v187 = vpack.c.b16 %v176, %v175
  %v188 = vpack.c.b16 %v178, %v177
  %v189 = vpack.c.b16 %v180, %v179
  %v190 = vpack.c.b16 %v182, %v181
  %v197 = vunpack.c.l.b16 %v145
  %v198 = vunpack.c.l.b16 %v146
  %v199 = vunpack.c.l.b16 %v147
  %v200 = vunpack.c.l.b16 %v148
  %v201 = vunpack.c.l.b16 %v149
  %v202 = vunpack.c.l.b16 %v150
  %v203 = vpack.c.b16 %v198, %v197
  %v204 = vpack.c.b16 %v200, %v199
  %v205 = vpack.c.b16 %v202, %v201
  %vm208 = vcmask 334848
  %v210 = vsel %vm208, %v183, 0
  %v213 = vsel %vm208, %v184, 0
  %v216 = vsel %vm208, %v185, 0
  %v219 = vsel %vm208, %v186, 0
  %v222 = vsel %vm208, %v187, 0
  %v225 = vsel %vm208, %v188, 0
  %v228 = vsel %vm208, %v189, 0
  %v231 = vsel %vm208, %v190, 0
  %vm233 = vcmask 1043456
  %vm234 = vcmask 1044480
  %v235 = vsel %vm233, 4294967295, 65535
  %v236 = vsel %vm234, %v235, 0
  %v238 = vand.u32 %v205, %v236
  %240 = vmatpush.bf16.msra.mxu0 0
  %241 = vmatpush.bf16.msra.mxu0 0
  %242 = vmatpush.bf16.msra.mxu0 0
  %243 = vmatpush.bf16.msra.mxu0 0
  %244 = vmatpush.bf16.msra.mxu0 0
  %245 = vmatpush.bf16.msra.mxu0 %v238
  %246 = vmatpush.bf16.msra.mxu0 %v204
  %247 = vmatpush.bf16.msra.mxu0 %v203
  %248 = vmatmul.bf16.gmra.mxu0 %v210
  %v249 = vpop.f32.mrf.mxu0
  %v250 = vadd.f32 0.0, %v249
  %v251 = vpop.f32.mrf.mxu0
  %v252 = vadd.f32 0.0, %v251
  %253 = vmatmul.bf16.gmra.mxu0 %v213
  %v254 = vpop.f32.mrf.mxu0
  %v255 = vadd.f32 0.0, %v254
  %v256 = vpop.f32.mrf.mxu0
  %v257 = vadd.f32 0.0, %v256
  %258 = vmatmul.bf16.gmra.mxu0 %v216
  %v259 = vpop.f32.mrf.mxu0
  %v260 = vadd.f32 0.0, %v259
  %v261 = vpop.f32.mrf.mxu0
  %v262 = vadd.f32 0.0, %v261
  %263 = vmatmul.bf16.gmra.mxu0 %v219
  %v264 = vpop.f32.mrf.mxu0
  %v265 = vadd.f32 0.0, %v264
  %v266 = vpop.f32.mrf.mxu0
  %v267 = vadd.f32 0.0, %v266
  %268 = vmatmul.bf16.gmra.mxu0 %v222
  %v269 = vpop.f32.mrf.mxu0
  %v270 = vadd.f32 0.0, %v269
  %v271 = vpop.f32.mrf.mxu0
  %v272 = vadd.f32 0.0, %v271
  %273 = vmatmul.bf16.gmra.mxu0 %v225
  %v274 = vpop.f32.mrf.mxu0
  %v275 = vadd.f32 0.0, %v274
  %v276 = vpop.f32.mrf.mxu0
  %v277 = vadd.f32 0.0, %v276
  %278 = vmatmul.bf16.gmra.mxu0 %v228
  %v279 = vpop.f32.mrf.mxu0
  %v280 = vadd.f32 0.0, %v279
  %v281 = vpop.f32.mrf.mxu0
  %v282 = vadd.f32 0.0, %v281
  %283 = vmatmul.bf16.gmra.mxu0 %v231
  %v284 = vpop.f32.mrf.mxu0
  %v285 = vadd.f32 0.0, %v284
  %v286 = vpop.f32.mrf.mxu0
  %v287 = vadd.f32 0.0, %v286
  %288 = vdwg.mxu0
  %289 = vrot.lane.b32.xlu0 %v250, 3
  %v290 = vpop.permute.xlu0 %289
  %291 = vrot.lane.b32.xlu0 %v252, 3
  %v292 = vpop.permute.xlu0 %291
  %293 = vrot.lane.b32.xlu0 %v255, 3
  %v294 = vpop.permute.xlu0 %293
  %295 = vrot.lane.b32.xlu0 %v257, 3
  %v296 = vpop.permute.xlu0 %295
  %297 = vrot.lane.b32.xlu0 %v260, 3
  %v298 = vpop.permute.xlu0 %297
  %299 = vrot.lane.b32.xlu0 %v262, 3
  %v300 = vpop.permute.xlu0 %299
  %301 = vrot.lane.b32.xlu0 %v265, 3
  %v302 = vpop.permute.xlu0 %301
  %303 = vrot.lane.b32.xlu0 %v267, 3
  %v304 = vpop.permute.xlu0 %303
  %305 = vrot.lane.b32.xlu0 %v270, 3
  %v306 = vpop.permute.xlu0 %305
  %307 = vrot.lane.b32.xlu0 %v272, 3
  %v308 = vpop.permute.xlu0 %307
  %309 = vrot.lane.b32.xlu0 %v275, 3
  %v310 = vpop.permute.xlu0 %309
  %311 = vrot.lane.b32.xlu0 %v277, 3
  %v312 = vpop.permute.xlu0 %311
  %313 = vrot.lane.b32.xlu0 %v280, 3
  %v314 = vpop.permute.xlu0 %313
  %315 = vrot.lane.b32.xlu0 %v282, 3
  %v316 = vpop.permute.xlu0 %315
  %317 = vrot.lane.b32.xlu0 %v285, 3
  %v318 = vpop.permute.xlu0 %317
  %319 = vrot.lane.b32.xlu0 %v287, 3
  %v320 = vpop.permute.xlu0 %319
  %v321 = vadd.s32 %v41, 4294967293
  %vm322 = vcmp.ge.s32.totalorder %v321, 0
  %vm323 = vcmp.lt.s32.totalorder %v321, 64
  %vm324 = vmand %vm322, %vm323
  %v325 = vsel %vm324, 1, 0
  %vm326 = vcmp.eq.s32.totalorder %v325, 1
  %v327 = vsel %vm326, %v290, 0.0
  %v328 = vsel %vm326, %v292, 0.0
  %v329 = vsel %vm326, %v294, 0.0
  %v330 = vsel %vm326, %v296, 0.0
  %v331 = vsel %vm326, %v298, 0.0
  %v332 = vsel %vm326, %v300, 0.0
  %v333 = vsel %vm326, %v302, 0.0
  %v334 = vsel %vm326, %v304, 0.0
  %v335 = vsel %vm326, %v306, 0.0
  %v336 = vsel %vm326, %v308, 0.0
  %v337 = vsel %vm326, %v310, 0.0
  %v338 = vsel %vm326, %v312, 0.0
  %v339 = vsel %vm326, %v314, 0.0
  %v340 = vsel %vm326, %v316, 0.0
  %v341 = vsel %vm326, %v318, 0.0
  %v342 = vsel %vm326, %v320, 0.0
  %v343 = vpack.c.bf16 %v327, %v327
  %v344 = vpack.c.bf16 %v328, %v328
  %v345 = vpack.c.bf16 %v329, %v329
  %v346 = vpack.c.bf16 %v330, %v330
  %v347 = vpack.c.bf16 %v331, %v331
  %v348 = vpack.c.bf16 %v332, %v332
  %v349 = vpack.c.bf16 %v333, %v333
  %v350 = vpack.c.bf16 %v334, %v334
  %v351 = vpack.c.bf16 %v335, %v335
  %v352 = vpack.c.bf16 %v336, %v336
  %v353 = vpack.c.bf16 %v337, %v337
  %v354 = vpack.c.bf16 %v338, %v338
  %v355 = vpack.c.bf16 %v339, %v339
  %v356 = vpack.c.bf16 %v340, %v340
  %v357 = vpack.c.bf16 %v341, %v341
  %v358 = vpack.c.bf16 %v342, %v342
  %359 = vst [vmem:[#allocation2] sm:$0xf] %v343
  %360 = vst [vmem:[#allocation2 + $0x4] sm:$0xf] %v344
  %361 = vst [vmem:[#allocation2 + $0x8] sm:$0xf] %v345
  %362 = vst [vmem:[#allocation2 + $0xc] sm:$0xf] %v346
  %363 = vst [vmem:[#allocation2 + $0x10] sm:$0xf] %v347
  %364 = vst [vmem:[#allocation2 + $0x14] sm:$0xf] %v348
  %365 = vst [vmem:[#allocation2 + $0x18] sm:$0xf] %v349
  %366 = vst [vmem:[#allocation2 + $0x1c] sm:$0xf] %v350
  %367 = vst [vmem:[#allocation2 + $0x20] sm:$0xf] %v351
  %368 = vst [vmem:[#allocation2 + $0x24] sm:$0xf] %v352
  %369 = vst [vmem:[#allocation2 + $0x28] sm:$0xf] %v353
  %370 = vst [vmem:[#allocation2 + $0x2c] sm:$0xf] %v354
  %371 = vst [vmem:[#allocation2 + $0x30] sm:$0xf] %v355
  %372 = vst [vmem:[#allocation2 + $0x34] sm:$0xf] %v356
  %373 = vst [vmem:[#allocation2 + $0x38] sm:$0xf] %v357
  %374 = vst [vmem:[#allocation2 + $0x3c] sm:$0xf] %v358
  %375 = vrot.lane.b32.xlu0 %v250, 2
  %v376 = vpop.permute.xlu0 %375
  %377 = vrot.lane.b32.xlu0 %v252, 2
  %v378 = vpop.permute.xlu0 %377
  %379 = vrot.lane.b32.xlu0 %v255, 2
  %v380 = vpop.permute.xlu0 %379
  %381 = vrot.lane.b32.xlu0 %v257, 2
  %v382 = vpop.permute.xlu0 %381
  %383 = vrot.lane.b32.xlu0 %v260, 2
  %v384 = vpop.permute.xlu0 %383
  %385 = vrot.lane.b32.xlu0 %v262, 2
  %v386 = vpop.permute.xlu0 %385
  %387 = vrot.lane.b32.xlu0 %v265, 2
  %v388 = vpop.permute.xlu0 %387
  %389 = vrot.lane.b32.xlu0 %v267, 2
  %v390 = vpop.permute.xlu0 %389
  %391 = vrot.lane.b32.xlu0 %v270, 2
  %v392 = vpop.permute.xlu0 %391
  %393 = vrot.lane.b32.xlu0 %v272, 2
  %v394 = vpop.permute.xlu0 %393
  %395 = vrot.lane.b32.xlu0 %v275, 2
  %v396 = vpop.permute.xlu0 %395
  %397 = vrot.lane.b32.xlu0 %v277, 2
  %v398 = vpop.permute.xlu0 %397
  %399 = vrot.lane.b32.xlu0 %v280, 2
  %v400 = vpop.permute.xlu0 %399
  %401 = vrot.lane.b32.xlu0 %v282, 2
  %v402 = vpop.permute.xlu0 %401
  %403 = vrot.lane.b32.xlu0 %v285, 2
  %v404 = vpop.permute.xlu0 %403
  %405 = vrot.lane.b32.xlu0 %v287, 2
  %v406 = vpop.permute.xlu0 %405
  %v407 = vsel %vm84, %v376, 0.0
  %v408 = vsel %vm84, %v378, 0.0
  %v409 = vsel %vm84, %v380, 0.0
  %v410 = vsel %vm84, %v382, 0.0
  %v411 = vsel %vm84, %v384, 0.0
  %v412 = vsel %vm84, %v386, 0.0
  %v413 = vsel %vm84, %v388, 0.0
  %v414 = vsel %vm84, %v390, 0.0
  %v415 = vsel %vm84, %v392, 0.0
  %v416 = vsel %vm84, %v394, 0.0
  %v417 = vsel %vm84, %v396, 0.0
  %v418 = vsel %vm84, %v398, 0.0
  %v419 = vsel %vm84, %v400, 0.0
  %v420 = vsel %vm84, %v402, 0.0
  %v421 = vsel %vm84, %v404, 0.0
  %v422 = vsel %vm84, %v406, 0.0
  %v423 = vpack.c.bf16 %v407, %v407
  %v424 = vpack.c.bf16 %v408, %v408
  %v425 = vpack.c.bf16 %v409, %v409
  %v426 = vpack.c.bf16 %v410, %v410
  %v427 = vpack.c.bf16 %v411, %v411
  %v428 = vpack.c.bf16 %v412, %v412
  %v429 = vpack.c.bf16 %v413, %v413
  %v430 = vpack.c.bf16 %v414, %v414
  %v431 = vpack.c.bf16 %v415, %v415
  %v432 = vpack.c.bf16 %v416, %v416
  %v433 = vpack.c.bf16 %v417, %v417
  %v434 = vpack.c.bf16 %v418, %v418
  %v435 = vpack.c.bf16 %v419, %v419
  %v436 = vpack.c.bf16 %v420, %v420
  %v437 = vpack.c.bf16 %v421, %v421
  %v438 = vpack.c.bf16 %v422, %v422
  %439 = vst [vmem:[#allocation2 + $0x40] sm:$0xf] %v423
  %440 = vst [vmem:[#allocation2 + $0x44] sm:$0xf] %v424
  %441 = vst [vmem:[#allocation2 + $0x48] sm:$0xf] %v425
  %442 = vst [vmem:[#allocation2 + $0x4c] sm:$0xf] %v426
  %443 = vst [vmem:[#allocation2 + $0x50] sm:$0xf] %v427
  %444 = vst [vmem:[#allocation2 + $0x54] sm:$0xf] %v428
  %445 = vst [vmem:[#allocation2 + $0x58] sm:$0xf] %v429
  %446 = vst [vmem:[#allocation2 + $0x5c] sm:$0xf] %v430
  %447 = vst [vmem:[#allocation2 + $0x60] sm:$0xf] %v431
  %448 = vst [vmem:[#allocation2 + $0x64] sm:$0xf] %v432
  %449 = vst [vmem:[#allocation2 + $0x68] sm:$0xf] %v433
  %450 = vst [vmem:[#allocation2 + $0x6c] sm:$0xf] %v434
  %451 = vst [vmem:[#allocation2 + $0x70] sm:$0xf] %v435
  %452 = vst [vmem:[#allocation2 + $0x74] sm:$0xf] %v436
  %453 = vst [vmem:[#allocation2 + $0x78] sm:$0xf] %v437
  %454 = vst [vmem:[#allocation2 + $0x7c] sm:$0xf] %v438
  %455 = vrot.lane.b32.xlu0 %v250, 1
  %v456 = vpop.permute.xlu0 %455
  %457 = vrot.lane.b32.xlu0 %v252, 1
  %v458 = vpop.permute.xlu0 %457
  %459 = vrot.lane.b32.xlu0 %v255, 1
  %v460 = vpop.permute.xlu0 %459
  %461 = vrot.lane.b32.xlu0 %v257, 1
  %v462 = vpop.permute.xlu0 %461
  %463 = vrot.lane.b32.xlu0 %v260, 1
  %v464 = vpop.permute.xlu0 %463
  %465 = vrot.lane.b32.xlu0 %v262, 1
  %v466 = vpop.permute.xlu0 %465
  %467 = vrot.lane.b32.xlu0 %v265, 1
  %v468 = vpop.permute.xlu0 %467
  %469 = vrot.lane.b32.xlu0 %v267, 1
  %v470 = vpop.permute.xlu0 %469
  %471 = vrot.lane.b32.xlu0 %v270, 1
  %v472 = vpop.permute.xlu0 %471
  %473 = vrot.lane.b32.xlu0 %v272, 1
  %v474 = vpop.permute.xlu0 %473
  %475 = vrot.lane.b32.xlu0 %v275, 1
  %v476 = vpop.permute.xlu0 %475
  %477 = vrot.lane.b32.xlu0 %v277, 1
  %v478 = vpop.permute.xlu0 %477
  %479 = vrot.lane.b32.xlu0 %v280, 1
  %v480 = vpop.permute.xlu0 %479
  %481 = vrot.lane.b32.xlu0 %v282, 1
  %v482 = vpop.permute.xlu0 %481
  %483 = vrot.lane.b32.xlu0 %v285, 1
  %v484 = vpop.permute.xlu0 %483
  %485 = vrot.lane.b32.xlu0 %v287, 1
  %v486 = vpop.permute.xlu0 %485
  %v487 = vsel %vm95, %v456, 0.0
  %v488 = vsel %vm95, %v458, 0.0
  %v489 = vsel %vm95, %v460, 0.0
  %v490 = vsel %vm95, %v462, 0.0
  %v491 = vsel %vm95, %v464, 0.0
  %v492 = vsel %vm95, %v466, 0.0
  %v493 = vsel %vm95, %v468, 0.0
  %v494 = vsel %vm95, %v470, 0.0
  %v495 = vsel %vm95, %v472, 0.0
  %v496 = vsel %vm95, %v474, 0.0
  %v497 = vsel %vm95, %v476, 0.0
  %v498 = vsel %vm95, %v478, 0.0
  %v499 = vsel %vm95, %v480, 0.0
  %v500 = vsel %vm95, %v482, 0.0
  %v501 = vsel %vm95, %v484, 0.0
  %v502 = vsel %vm95, %v486, 0.0
  %v503 = vpack.c.bf16 %v487, %v487
  %v504 = vpack.c.bf16 %v488, %v488
  %v505 = vpack.c.bf16 %v489, %v489
  %v506 = vpack.c.bf16 %v490, %v490
  %v507 = vpack.c.bf16 %v491, %v491
  %v508 = vpack.c.bf16 %v492, %v492
  %v509 = vpack.c.bf16 %v493, %v493
  %v510 = vpack.c.bf16 %v494, %v494
  %v511 = vpack.c.bf16 %v495, %v495
  %v512 = vpack.c.bf16 %v496, %v496
  %v513 = vpack.c.bf16 %v497, %v497
  %v514 = vpack.c.bf16 %v498, %v498
  %v515 = vpack.c.bf16 %v499, %v499
  %v516 = vpack.c.bf16 %v500, %v500
  %v517 = vpack.c.bf16 %v501, %v501
  %v518 = vpack.c.bf16 %v502, %v502
  %519 = vst [vmem:[#allocation2 + $0x80] sm:$0xf] %v503
  %520 = vst [vmem:[#allocation2 + $0x84] sm:$0xf] %v504
  %521 = vst [vmem:[#allocation2 + $0x88] sm:$0xf] %v505
  %522 = vst [vmem:[#allocation2 + $0x8c] sm:$0xf] %v506
  %523 = vst [vmem:[#allocation2 + $0x90] sm:$0xf] %v507
  %524 = vst [vmem:[#allocation2 + $0x94] sm:$0xf] %v508
  %525 = vst [vmem:[#allocation2 + $0x98] sm:$0xf] %v509
  %526 = vst [vmem:[#allocation2 + $0x9c] sm:$0xf] %v510
  %527 = vst [vmem:[#allocation2 + $0xa0] sm:$0xf] %v511
  %528 = vst [vmem:[#allocation2 + $0xa4] sm:$0xf] %v512
  %529 = vst [vmem:[#allocation2 + $0xa8] sm:$0xf] %v513
  %530 = vst [vmem:[#allocation2 + $0xac] sm:$0xf] %v514
  %531 = vst [vmem:[#allocation2 + $0xb0] sm:$0xf] %v515
  %532 = vst [vmem:[#allocation2 + $0xb4] sm:$0xf] %v516
  %533 = vst [vmem:[#allocation2 + $0xb8] sm:$0xf] %v517
  %534 = vst [vmem:[#allocation2 + $0xbc] sm:$0xf] %v518
  %v535 = vpack.c.bf16 %v250, %v250
  %v536 = vpack.c.bf16 %v252, %v252
  %v537 = vpack.c.bf16 %v255, %v255
  %v538 = vpack.c.bf16 %v257, %v257
  %v539 = vpack.c.bf16 %v260, %v260
  %v540 = vpack.c.bf16 %v262, %v262
  %v541 = vpack.c.bf16 %v265, %v265
  %v542 = vpack.c.bf16 %v267, %v267
  %v543 = vpack.c.bf16 %v270, %v270
  %v544 = vpack.c.bf16 %v272, %v272
  %v545 = vpack.c.bf16 %v275, %v275
  %v546 = vpack.c.bf16 %v277, %v277
  %v547 = vpack.c.bf16 %v280, %v280
  %v548 = vpack.c.bf16 %v282, %v282
  %v549 = vpack.c.bf16 %v285, %v285
  %v550 = vpack.c.bf16 %v287, %v287
  %551 = vst [vmem:[#allocation2 + $0xc0] sm:$0xf] %v535
  %552 = vst [vmem:[#allocation2 + $0xc4] sm:$0xf] %v536
  %553 = vst [vmem:[#allocation2 + $0xc8] sm:$0xf] %v537
  %554 = vst [vmem:[#allocation2 + $0xcc] sm:$0xf] %v538
  %555 = vst [vmem:[#allocation2 + $0xd0] sm:$0xf] %v539
  %556 = vst [vmem:[#allocation2 + $0xd4] sm:$0xf] %v540
  %557 = vst [vmem:[#allocation2 + $0xd8] sm:$0xf] %v541
  %558 = vst [vmem:[#allocation2 + $0xdc] sm:$0xf] %v542
  %559 = vst [vmem:[#allocation2 + $0xe0] sm:$0xf] %v543
  %560 = vst [vmem:[#allocation2 + $0xe4] sm:$0xf] %v544
  %561 = vst [vmem:[#allocation2 + $0xe8] sm:$0xf] %v545
  %562 = vst [vmem:[#allocation2 + $0xec] sm:$0xf] %v546
  %563 = vst [vmem:[#allocation2 + $0xf0] sm:$0xf] %v547
  %564 = vst [vmem:[#allocation2 + $0xf4] sm:$0xf] %v548
  %565 = vst [vmem:[#allocation2 + $0xf8] sm:$0xf] %v549
  %566 = vst [vmem:[#allocation2 + $0xfc] sm:$0xf] %v550
  %567 = vrot.lane.b32.xlu0 %v250, 127
  %v568 = vpop.permute.xlu0 %567
  %569 = vrot.lane.b32.xlu0 %v252, 127
  %v570 = vpop.permute.xlu0 %569
  %571 = vrot.lane.b32.xlu0 %v255, 127
  %v572 = vpop.permute.xlu0 %571
  %573 = vrot.lane.b32.xlu0 %v257, 127
  %v574 = vpop.permute.xlu0 %573
  %575 = vrot.lane.b32.xlu0 %v260, 127
  %v576 = vpop.permute.xlu0 %575
  %577 = vrot.lane.b32.xlu0 %v262, 127
  %v578 = vpop.permute.xlu0 %577
  %579 = vrot.lane.b32.xlu0 %v265, 127
  %v580 = vpop.permute.xlu0 %579
  %581 = vrot.lane.b32.xlu0 %v267, 127
  %v582 = vpop.permute.xlu0 %581
  %583 = vrot.lane.b32.xlu0 %v270, 127
  %v584 = vpop.permute.xlu0 %583
  %585 = vrot.lane.b32.xlu0 %v272, 127
  %v586 = vpop.permute.xlu0 %585
  %587 = vrot.lane.b32.xlu0 %v275, 127
  %v588 = vpop.permute.xlu0 %587
  %589 = vrot.lane.b32.xlu0 %v277, 127
  %v590 = vpop.permute.xlu0 %589
  %591 = vrot.lane.b32.xlu0 %v280, 127
  %v592 = vpop.permute.xlu0 %591
  %593 = vrot.lane.b32.xlu0 %v282, 127
  %v594 = vpop.permute.xlu0 %593
  %595 = vrot.lane.b32.xlu0 %v285, 127
  %v596 = vpop.permute.xlu0 %595
  %597 = vrot.lane.b32.xlu0 %v287, 127
  %v598 = vpop.permute.xlu0 %597
  %v599 = vsel %vm108, %v568, 0.0
  %v600 = vsel %vm108, %v570, 0.0
  %v601 = vsel %vm108, %v572, 0.0
  %v602 = vsel %vm108, %v574, 0.0
  %v603 = vsel %vm108, %v576, 0.0
  %v604 = vsel %vm108, %v578, 0.0
  %v605 = vsel %vm108, %v580, 0.0
  %v606 = vsel %vm108, %v582, 0.0
  %v607 = vsel %vm108, %v584, 0.0
  %v608 = vsel %vm108, %v586, 0.0
  %v609 = vsel %vm108, %v588, 0.0
  %v610 = vsel %vm108, %v590, 0.0
  %v611 = vsel %vm108, %v592, 0.0
  %v612 = vsel %vm108, %v594, 0.0
  %v613 = vsel %vm108, %v596, 0.0
  %v614 = vsel %vm108, %v598, 0.0
  %v615 = vpack.c.bf16 %v599, %v599
  %v616 = vpack.c.bf16 %v600, %v600
  %v617 = vpack.c.bf16 %v601, %v601
  %v618 = vpack.c.bf16 %v602, %v602
  %v619 = vpack.c.bf16 %v603, %v603
  %v620 = vpack.c.bf16 %v604, %v604
  %v621 = vpack.c.bf16 %v605, %v605
  %v622 = vpack.c.bf16 %v606, %v606
  %v623 = vpack.c.bf16 %v607, %v607
  %v624 = vpack.c.bf16 %v608, %v608
  %v625 = vpack.c.bf16 %v609, %v609
  %v626 = vpack.c.bf16 %v610, %v610
  %v627 = vpack.c.bf16 %v611, %v611
  %v628 = vpack.c.bf16 %v612, %v612
  %v629 = vpack.c.bf16 %v613, %v613
  %v630 = vpack.c.bf16 %v614, %v614
  %631 = vst [vmem:[#allocation2 + $0x100] sm:$0xf] %v615
  %632 = vst [vmem:[#allocation2 + $0x104] sm:$0xf] %v616
  %633 = vst [vmem:[#allocation2 + $0x108] sm:$0xf] %v617
  %634 = vst [vmem:[#allocation2 + $0x10c] sm:$0xf] %v618
  %635 = vst [vmem:[#allocation2 + $0x110] sm:$0xf] %v619
  %636 = vst [vmem:[#allocation2 + $0x114] sm:$0xf] %v620
  %637 = vst [vmem:[#allocation2 + $0x118] sm:$0xf] %v621
  %638 = vst [vmem:[#allocation2 + $0x11c] sm:$0xf] %v622
  %639 = vst [vmem:[#allocation2 + $0x120] sm:$0xf] %v623
  %640 = vst [vmem:[#allocation2 + $0x124] sm:$0xf] %v624
  %641 = vst [vmem:[#allocation2 + $0x128] sm:$0xf] %v625
  %642 = vst [vmem:[#allocation2 + $0x12c] sm:$0xf] %v626
  %643 = vst [vmem:[#allocation2 + $0x130] sm:$0xf] %v627
  %644 = vst [vmem:[#allocation2 + $0x134] sm:$0xf] %v628
  %645 = vst [vmem:[#allocation2 + $0x138] sm:$0xf] %v629
  %646 = vst [vmem:[#allocation2 + $0x13c] sm:$0xf] %v630
  %647 = vrot.lane.b32.xlu0 %v250, 126
  %v648 = vpop.permute.xlu0 %647
  %649 = vrot.lane.b32.xlu0 %v252, 126
  %v650 = vpop.permute.xlu0 %649
  %651 = vrot.lane.b32.xlu0 %v255, 126
  %v652 = vpop.permute.xlu0 %651
  %653 = vrot.lane.b32.xlu0 %v257, 126
  %v654 = vpop.permute.xlu0 %653
  %655 = vrot.lane.b32.xlu0 %v260, 126
  %v656 = vpop.permute.xlu0 %655
  %657 = vrot.lane.b32.xlu0 %v262, 126
  %v658 = vpop.permute.xlu0 %657
  %659 = vrot.lane.b32.xlu0 %v265, 126
  %v660 = vpop.permute.xlu0 %659
  %661 = vrot.lane.b32.xlu0 %v267, 126
  %v662 = vpop.permute.xlu0 %661
  %663 = vrot.lane.b32.xlu0 %v270, 126
  %v664 = vpop.permute.xlu0 %663
  %665 = vrot.lane.b32.xlu0 %v272, 126
  %v666 = vpop.permute.xlu0 %665
  %667 = vrot.lane.b32.xlu0 %v275, 126
  %v668 = vpop.permute.xlu0 %667
  %669 = vrot.lane.b32.xlu0 %v277, 126
  %v670 = vpop.permute.xlu0 %669
  %671 = vrot.lane.b32.xlu0 %v280, 126
  %v672 = vpop.permute.xlu0 %671
  %673 = vrot.lane.b32.xlu0 %v282, 126
  %v674 = vpop.permute.xlu0 %673
  %675 = vrot.lane.b32.xlu0 %v285, 126
  %v676 = vpop.permute.xlu0 %675
  %677 = vrot.lane.b32.xlu0 %v287, 126
  %v678 = vpop.permute.xlu0 %677
  %v679 = vsel %vm119, %v648, 0.0
  %v680 = vsel %vm119, %v650, 0.0
  %v681 = vsel %vm119, %v652, 0.0
  %v682 = vsel %vm119, %v654, 0.0
  %v683 = vsel %vm119, %v656, 0.0
  %v684 = vsel %vm119, %v658, 0.0
  %v685 = vsel %vm119, %v660, 0.0
  %v686 = vsel %vm119, %v662, 0.0
  %v687 = vsel %vm119, %v664, 0.0
  %v688 = vsel %vm119, %v666, 0.0
  %v689 = vsel %vm119, %v668, 0.0
  %v690 = vsel %vm119, %v670, 0.0
  %v691 = vsel %vm119, %v672, 0.0
  %v692 = vsel %vm119, %v674, 0.0
  %v693 = vsel %vm119, %v676, 0.0
  %v694 = vsel %vm119, %v678, 0.0
  %v695 = vpack.c.bf16 %v679, %v679
  %v696 = vpack.c.bf16 %v680, %v680
  %v697 = vpack.c.bf16 %v681, %v681
  %v698 = vpack.c.bf16 %v682, %v682
  %v699 = vpack.c.bf16 %v683, %v683
  %v700 = vpack.c.bf16 %v684, %v684
  %v701 = vpack.c.bf16 %v685, %v685
  %v702 = vpack.c.bf16 %v686, %v686
  %v703 = vpack.c.bf16 %v687, %v687
  %v704 = vpack.c.bf16 %v688, %v688
  %v705 = vpack.c.bf16 %v689, %v689
  %v706 = vpack.c.bf16 %v690, %v690
  %v707 = vpack.c.bf16 %v691, %v691
  %v708 = vpack.c.bf16 %v692, %v692
  %v709 = vpack.c.bf16 %v693, %v693
  %v710 = vpack.c.bf16 %v694, %v694
  %711 = vst [vmem:[#allocation2 + $0x140] sm:$0xf] %v695
  %712 = vst [vmem:[#allocation2 + $0x144] sm:$0xf] %v696
  %713 = vst [vmem:[#allocation2 + $0x148] sm:$0xf] %v697
  %714 = vst [vmem:[#allocation2 + $0x14c] sm:$0xf] %v698
  %715 = vst [vmem:[#allocation2 + $0x150] sm:$0xf] %v699
  %716 = vst [vmem:[#allocation2 + $0x154] sm:$0xf] %v700
  %717 = vst [vmem:[#allocation2 + $0x158] sm:$0xf] %v701
  %718 = vst [vmem:[#allocation2 + $0x15c] sm:$0xf] %v702
  %719 = vst [vmem:[#allocation2 + $0x160] sm:$0xf] %v703
  %720 = vst [vmem:[#allocation2 + $0x164] sm:$0xf] %v704
  %721 = vst [vmem:[#allocation2 + $0x168] sm:$0xf] %v705
  %722 = vst [vmem:[#allocation2 + $0x16c] sm:$0xf] %v706
  %723 = vst [vmem:[#allocation2 + $0x170] sm:$0xf] %v707
  %724 = vst [vmem:[#allocation2 + $0x174] sm:$0xf] %v708
  %725 = vst [vmem:[#allocation2 + $0x178] sm:$0xf] %v709
  %726 = vst [vmem:[#allocation2 + $0x17c] sm:$0xf] %v710
  %727 = vrot.lane.b32.xlu0 %v250, 125
  %v728 = vpop.permute.xlu0 %727
  %729 = vrot.lane.b32.xlu0 %v252, 125
  %v730 = vpop.permute.xlu0 %729
  %731 = vrot.lane.b32.xlu0 %v255, 125
  %v732 = vpop.permute.xlu0 %731
  %733 = vrot.lane.b32.xlu0 %v257, 125
  %v734 = vpop.permute.xlu0 %733
  %735 = vrot.lane.b32.xlu0 %v260, 125
  %v736 = vpop.permute.xlu0 %735
  %737 = vrot.lane.b32.xlu0 %v262, 125
  %v738 = vpop.permute.xlu0 %737
  %739 = vrot.lane.b32.xlu0 %v265, 125
  %v740 = vpop.permute.xlu0 %739
  %741 = vrot.lane.b32.xlu0 %v267, 125
  %v742 = vpop.permute.xlu0 %741
  %743 = vrot.lane.b32.xlu0 %v270, 125
  %v744 = vpop.permute.xlu0 %743
  %745 = vrot.lane.b32.xlu0 %v272, 125
  %v746 = vpop.permute.xlu0 %745
  %747 = vrot.lane.b32.xlu0 %v275, 125
  %v748 = vpop.permute.xlu0 %747
  %749 = vrot.lane.b32.xlu0 %v277, 125
  %v750 = vpop.permute.xlu0 %749
  %751 = vrot.lane.b32.xlu0 %v280, 125
  %v752 = vpop.permute.xlu0 %751
  %753 = vrot.lane.b32.xlu0 %v282, 125
  %v754 = vpop.permute.xlu0 %753
  %755 = vrot.lane.b32.xlu0 %v285, 125
  %v756 = vpop.permute.xlu0 %755
  %757 = vrot.lane.b32.xlu0 %v287, 125
  %v758 = vpop.permute.xlu0 %757
  %v759 = vadd.s32 %v41, 3
  %vm760 = vcmp.ge.s32.totalorder %v759, 0
  %vm761 = vcmp.lt.s32.totalorder %v759, 64
  %vm762 = vmand %vm760, %vm761
  %v763 = vsel %vm762, 1, 0
  %vm764 = vcmp.eq.s32.totalorder %v763, 1
  %v765 = vsel %vm764, %v728, 0.0
  %v766 = vsel %vm764, %v730, 0.0
  %v767 = vsel %vm764, %v732, 0.0
  %v768 = vsel %vm764, %v734, 0.0
  %v769 = vsel %vm764, %v736, 0.0
  %v770 = vsel %vm764, %v738, 0.0
  %v771 = vsel %vm764, %v740, 0.0
  %v772 = vsel %vm764, %v742, 0.0
  %v773 = vsel %vm764, %v744, 0.0
  %v774 = vsel %vm764, %v746, 0.0
  %v775 = vsel %vm764, %v748, 0.0
  %v776 = vsel %vm764, %v750, 0.0
  %v777 = vsel %vm764, %v752, 0.0
  %v778 = vsel %vm764, %v754, 0.0
  %v779 = vsel %vm764, %v756, 0.0
  %v780 = vsel %vm764, %v758, 0.0
  %v781 = vpack.c.bf16 %v765, %v765
  %v782 = vpack.c.bf16 %v766, %v766
  %v783 = vpack.c.bf16 %v767, %v767
  %v784 = vpack.c.bf16 %v768, %v768
  %v785 = vpack.c.bf16 %v769, %v769
  %v786 = vpack.c.bf16 %v770, %v770
  %v787 = vpack.c.bf16 %v771, %v771
  %v788 = vpack.c.bf16 %v772, %v772
  %v789 = vpack.c.bf16 %v773, %v773
  %v790 = vpack.c.bf16 %v774, %v774
  %v791 = vpack.c.bf16 %v775, %v775
  %v792 = vpack.c.bf16 %v776, %v776
  %v793 = vpack.c.bf16 %v777, %v777
  %v794 = vpack.c.bf16 %v778, %v778
  %v795 = vpack.c.bf16 %v779, %v779
  %v796 = vpack.c.bf16 %v780, %v780
  %797 = vst [vmem:[#allocation2 + $0x180] sm:$0xf] %v781
  %798 = vst [vmem:[#allocation2 + $0x184] sm:$0xf] %v782
  %799 = vst [vmem:[#allocation2 + $0x188] sm:$0xf] %v783
  %800 = vst [vmem:[#allocation2 + $0x18c] sm:$0xf] %v784
  %801 = vst [vmem:[#allocation2 + $0x190] sm:$0xf] %v785
  %802 = vst [vmem:[#allocation2 + $0x194] sm:$0xf] %v786
  %803 = vst [vmem:[#allocation2 + $0x198] sm:$0xf] %v787
  %804 = vst [vmem:[#allocation2 + $0x19c] sm:$0xf] %v788
  %805 = vst [vmem:[#allocation2 + $0x1a0] sm:$0xf] %v789
  %806 = vst [vmem:[#allocation2 + $0x1a4] sm:$0xf] %v790
  %807 = vst [vmem:[#allocation2 + $0x1a8] sm:$0xf] %v791
  %808 = vst [vmem:[#allocation2 + $0x1ac] sm:$0xf] %v792
  %809 = vst [vmem:[#allocation2 + $0x1b0] sm:$0xf] %v793
  %810 = vst [vmem:[#allocation2 + $0x1b4] sm:$0xf] %v794
  %811 = vst [vmem:[#allocation2 + $0x1b8] sm:$0xf] %v795
  %812 = vst [vmem:[#allocation2 + $0x1bc] sm:$0xf] %v796
  %v813 = vld [vmem:[#allocation2 + $0x1c0] sm:$0x1]
  %v814 = vsel %vm125, 1065369472, %v813
  %815 = vst [vmem:[#allocation2 + $0x1c0] sm:$0x1] %v814
  %v816 = vld [vmem:[%s3] sm:$0xff]
  %v817 = vld [vmem:[%s3 + $0x8] sm:$0xff]
  %v818 = vld [vmem:[%s3 + $0x10] sm:$0xff]
  %v819 = vld [vmem:[%s3 + $0x18] sm:$0xff]
  %v820 = vld [vmem:[%s3 + $0x20] sm:$0xff]
  %v821 = vld [vmem:[%s3 + $0x28] sm:$0xff]
  %v822 = vld [vmem:[%s3 + $0x30] sm:$0xff]
  %v823 = vld [vmem:[%s3 + $0x38] sm:$0xff]
  %v824 = vld [vmem:[%s3 + $0x40] sm:$0xff]
  %v825 = vld [vmem:[%s3 + $0x48] sm:$0xff]
  %v826 = vld [vmem:[%s3 + $0x50] sm:$0xff]
  %v827 = vld [vmem:[%s3 + $0x58] sm:$0xff]
  %v828 = vld [vmem:[%s3 + $0x60] sm:$0xff]
  %v829 = vld [vmem:[%s3 + $0x68] sm:$0xff]
  %v830 = vld [vmem:[%s3 + $0x70] sm:$0xff]
  %v831 = vld [vmem:[%s3 + $0x78] sm:$0xff]
  %v832 = vld [vmem:[%s3 + $0x80] sm:$0xff]
  %v833 = vld [vmem:[%s3 + $0x88] sm:$0xff]
  %v834 = vld [vmem:[%s3 + $0x90] sm:$0xff]
  %v835 = vld [vmem:[%s3 + $0x98] sm:$0xff]
  %v836 = vld [vmem:[%s3 + $0xa0] sm:$0xff]
  %v837 = vld [vmem:[%s3 + $0xa8] sm:$0xff]
  %v838 = vld [vmem:[%s3 + $0xb0] sm:$0xff]
  %v839 = vld [vmem:[%s3 + $0xb8] sm:$0xff]
  %v840 = vld [vmem:[%s3 + $0xc0] sm:$0xff]
  %v841 = vld [vmem:[%s3 + $0xc8] sm:$0xff]
  %v842 = vld [vmem:[%s3 + $0xd0] sm:$0xff]
  %v843 = vld [vmem:[%s3 + $0xd8] sm:$0xff]
  %v844 = vld [vmem:[%s3 + $0xe0] sm:$0xff]
  %v845 = vld [vmem:[%s3 + $0xe8] sm:$0xff]
  %v846 = vld [vmem:[%s3 + $0xf0] sm:$0xff]
  %v847 = vld [vmem:[%s3 + $0xf8] sm:$0xff]
  %v848 = vld [vmem:[%s3 + $0x100] sm:$0xff]
  %v849 = vld [vmem:[%s3 + $0x108] sm:$0xff]
  %v850 = vld [vmem:[%s3 + $0x110] sm:$0xff]
  %v851 = vld [vmem:[%s3 + $0x118] sm:$0xff]
  %v852 = vld [vmem:[%s3 + $0x120] sm:$0xff]
  %v853 = vld [vmem:[%s3 + $0x128] sm:$0xff]
  %v854 = vld [vmem:[%s3 + $0x130] sm:$0xff]
  %v855 = vld [vmem:[%s3 + $0x138] sm:$0xff]
  %v856 = vld [vmem:[%s3 + $0x140] sm:$0xff]
  %v857 = vld [vmem:[%s3 + $0x148] sm:$0xff]
  %v858 = vld [vmem:[%s3 + $0x150] sm:$0xff]
  %v859 = vld [vmem:[%s3 + $0x158] sm:$0xff]
  %v860 = vld [vmem:[%s3 + $0x160] sm:$0xff]
  %v861 = vld [vmem:[%s3 + $0x168] sm:$0xff]
  %v862 = vld [vmem:[%s3 + $0x170] sm:$0xff]
  %v863 = vld [vmem:[%s3 + $0x178] sm:$0xff]
  %v864 = vld [vmem:[%s3 + $0x180] sm:$0xff]
  %v865 = vld [vmem:[%s3 + $0x188] sm:$0xff]
  %v866 = vld [vmem:[%s3 + $0x190] sm:$0xff]
  %v867 = vld [vmem:[%s3 + $0x198] sm:$0xff]
  %v868 = vld [vmem:[%s3 + $0x1a0] sm:$0xff]
  %v869 = vld [vmem:[%s3 + $0x1a8] sm:$0xff]
  %v870 = vld [vmem:[%s3 + $0x1b0] sm:$0xff]
  %v871 = vld [vmem:[%s3 + $0x1b8] sm:$0xff]
  %v872 = vld [vmem:[%s3 + $0x1c0] sm:$0xff]
  %v873 = vld [vmem:[%s3 + $0x1c8] sm:$0xff]
  %v874 = vld [vmem:[%s3 + $0x1d0] sm:$0xff]
  %v875 = vld [vmem:[%s3 + $0x1d8] sm:$0xff]
  %v876 = vld [vmem:[%s3 + $0x1e0] sm:$0xff]
  %v877 = vld [vmem:[%s3 + $0x1e8] sm:$0xff]
  %v878 = vld [vmem:[%s3 + $0x1f0] sm:$0xff]
  %v879 = vld [vmem:[%s3 + $0x1f8] sm:$0xff]
  %v880 = vld [vmem:[%s3 + $0x200] sm:$0xff]
  %v881 = vld [vmem:[%s3 + $0x208] sm:$0xff]
  %v882 = vld [vmem:[%s3 + $0x210] sm:$0xff]
  %v883 = vld [vmem:[%s3 + $0x218] sm:$0xff]
  %v884 = vld [vmem:[%s3 + $0x220] sm:$0xff]
  %v885 = vld [vmem:[%s3 + $0x228] sm:$0xff]
  %v886 = vld [vmem:[%s3 + $0x230] sm:$0xff]
  %v887 = vld [vmem:[%s3 + $0x238] sm:$0xff]
  %v888 = vld [vmem:[%s3 + $0x240] sm:$0xff]
  %v889 = vld [vmem:[%s3 + $0x248] sm:$0xff]
  %v890 = vld [vmem:[%s3 + $0x250] sm:$0xff]
  %v891 = vld [vmem:[%s3 + $0x258] sm:$0xff]
  %v892 = vld [vmem:[%s3 + $0x260] sm:$0xff]
  %v893 = vld [vmem:[%s3 + $0x268] sm:$0xff]
  %v894 = vld [vmem:[%s3 + $0x270] sm:$0xff]
  %v895 = vld [vmem:[%s3 + $0x278] sm:$0xff]
  %v896 = vld [vmem:[%s3 + $0x280] sm:$0xff]
  %v897 = vld [vmem:[%s3 + $0x288] sm:$0xff]
  %v898 = vld [vmem:[%s3 + $0x290] sm:$0xff]
  %v899 = vld [vmem:[%s3 + $0x298] sm:$0xff]
  %v900 = vld [vmem:[%s3 + $0x2a0] sm:$0xff]
  %v901 = vld [vmem:[%s3 + $0x2a8] sm:$0xff]
  %v902 = vld [vmem:[%s3 + $0x2b0] sm:$0xff]
  %v903 = vld [vmem:[%s3 + $0x2b8] sm:$0xff]
  %v904 = vld [vmem:[%s3 + $0x2c0] sm:$0xff]
  %v905 = vld [vmem:[%s3 + $0x2c8] sm:$0xff]
  %v906 = vld [vmem:[%s3 + $0x2d0] sm:$0xff]
  %v907 = vld [vmem:[%s3 + $0x2d8] sm:$0xff]
  %v908 = vld [vmem:[%s3 + $0x2e0] sm:$0xff]
  %v909 = vld [vmem:[%s3 + $0x2e8] sm:$0xff]
  %v910 = vld [vmem:[%s3 + $0x2f0] sm:$0xff]
  %v911 = vld [vmem:[%s3 + $0x2f8] sm:$0xff]
  %v912 = vld [vmem:[%s3 + $0x300] sm:$0xff]
  %v913 = vld [vmem:[%s3 + $0x308] sm:$0xff]
  %v914 = vld [vmem:[%s3 + $0x310] sm:$0xff]
  %v915 = vld [vmem:[%s3 + $0x318] sm:$0xff]
  %v916 = vld [vmem:[%s3 + $0x320] sm:$0xff]
  %v917 = vld [vmem:[%s3 + $0x328] sm:$0xff]
  %v918 = vld [vmem:[%s3 + $0x330] sm:$0xff]
  %v919 = vld [vmem:[%s3 + $0x338] sm:$0xff]
  %v920 = vld [vmem:[%s3 + $0x340] sm:$0xff]
  %v921 = vld [vmem:[%s3 + $0x348] sm:$0xff]
  %v922 = vld [vmem:[%s3 + $0x350] sm:$0xff]
  %v923 = vld [vmem:[%s3 + $0x358] sm:$0xff]
  %v924 = vld [vmem:[%s3 + $0x360] sm:$0xff]
  %v925 = vld [vmem:[%s3 + $0x368] sm:$0xff]
  %v926 = vld [vmem:[%s3 + $0x370] sm:$0xff]
  %v927 = vld [vmem:[%s3 + $0x378] sm:$0xff]
  %v928 = vld [vmem:[%s3 + $0x380] sm:$0xff]
  %v929 = vld [vmem:[%s3 + $0x388] sm:$0xff]
  %v930 = vld [vmem:[%s3 + $0x390] sm:$0xff]
  %v931 = vld [vmem:[%s3 + $0x398] sm:$0xff]
  %v932 = vld [vmem:[%s3 + $0x3a0] sm:$0xff]
  %v933 = vld [vmem:[%s3 + $0x3a8] sm:$0xff]
  %v934 = vld [vmem:[%s3 + $0x3b0] sm:$0xff]
  %v935 = vld [vmem:[%s3 + $0x3b8] sm:$0xff]
  %v936 = vld [vmem:[%s3 + $0x3c0] sm:$0xff]
  %v937 = vld [vmem:[%s3 + $0x3c8] sm:$0xff]
  %v938 = vld [vmem:[%s3 + $0x3d0] sm:$0xff]
  %v939 = vld [vmem:[%s3 + $0x3d8] sm:$0xff]
  %v940 = vld [vmem:[%s3 + $0x3e0] sm:$0xff]
  %v941 = vld [vmem:[%s3 + $0x3e8] sm:$0xff]
  %v942 = vld [vmem:[%s3 + $0x3f0] sm:$0xff]
  %v943 = vld [vmem:[%s3 + $0x3f8] sm:$0xff]
  %v944 = vld [vmem:[#allocation2] sm:$0xf]
  %v945 = vld [vmem:[#allocation2 + $0x4] sm:$0xf]
  %v946 = vld [vmem:[#allocation2 + $0x8] sm:$0xf]
  %v947 = vld [vmem:[#allocation2 + $0xc] sm:$0xf]
  %v948 = vld [vmem:[#allocation2 + $0x10] sm:$0xf]
  %v949 = vld [vmem:[#allocation2 + $0x14] sm:$0xf]
  %v950 = vld [vmem:[#allocation2 + $0x18] sm:$0xf]
  %v951 = vld [vmem:[#allocation2 + $0x1c] sm:$0xf]
  %v952 = vld [vmem:[#allocation2 + $0x20] sm:$0xf]
  %v953 = vld [vmem:[#allocation2 + $0x24] sm:$0xf]
  %v954 = vld [vmem:[#allocation2 + $0x28] sm:$0xf]
  %v955 = vld [vmem:[#allocation2 + $0x2c] sm:$0xf]
  %v956 = vld [vmem:[#allocation2 + $0x30] sm:$0xf]
  %v957 = vld [vmem:[#allocation2 + $0x34] sm:$0xf]
  %v958 = vld [vmem:[#allocation2 + $0x38] sm:$0xf]
  %v959 = vld [vmem:[#allocation2 + $0x3c] sm:$0xf]
  %v960 = vld [vmem:[#allocation2 + $0x40] sm:$0xf]
  %v961 = vld [vmem:[#allocation2 + $0x44] sm:$0xf]
  %v962 = vld [vmem:[#allocation2 + $0x48] sm:$0xf]
  %v963 = vld [vmem:[#allocation2 + $0x4c] sm:$0xf]
  %v964 = vld [vmem:[#allocation2 + $0x50] sm:$0xf]
  %v965 = vld [vmem:[#allocation2 + $0x54] sm:$0xf]
  %v966 = vld [vmem:[#allocation2 + $0x58] sm:$0xf]
  %v967 = vld [vmem:[#allocation2 + $0x5c] sm:$0xf]
  %v968 = vld [vmem:[#allocation2 + $0x60] sm:$0xf]
  %v969 = vld [vmem:[#allocation2 + $0x64] sm:$0xf]
  %v970 = vld [vmem:[#allocation2 + $0x68] sm:$0xf]
  %v971 = vld [vmem:[#allocation2 + $0x6c] sm:$0xf]
  %v972 = vld [vmem:[#allocation2 + $0x70] sm:$0xf]
  %v973 = vld [vmem:[#allocation2 + $0x74] sm:$0xf]
  %v974 = vld [vmem:[#allocation2 + $0x78] sm:$0xf]
  %v975 = vld [vmem:[#allocation2 + $0x7c] sm:$0xf]
  %v976 = vld [vmem:[#allocation2 + $0x80] sm:$0xf]
  %v977 = vld [vmem:[#allocation2 + $0x84] sm:$0xf]
  %v978 = vld [vmem:[#allocation2 + $0x88] sm:$0xf]
  %v979 = vld [vmem:[#allocation2 + $0x8c] sm:$0xf]
  %v980 = vld [vmem:[#allocation2 + $0x90] sm:$0xf]
  %v981 = vld [vmem:[#allocation2 + $0x94] sm:$0xf]
  %v982 = vld [vmem:[#allocation2 + $0x98] sm:$0xf]
  %v983 = vld [vmem:[#allocation2 + $0x9c] sm:$0xf]
  %v984 = vld [vmem:[#allocation2 + $0xa0] sm:$0xf]
  %v985 = vld [vmem:[#allocation2 + $0xa4] sm:$0xf]
  %v986 = vld [vmem:[#allocation2 + $0xa8] sm:$0xf]
  %v987 = vld [vmem:[#allocation2 + $0xac] sm:$0xf]
  %v988 = vld [vmem:[#allocation2 + $0xb0] sm:$0xf]
  %v989 = vld [vmem:[#allocation2 + $0xb4] sm:$0xf]
  %v990 = vld [vmem:[#allocation2 + $0xb8] sm:$0xf]
  %v991 = vld [vmem:[#allocation2 + $0xbc] sm:$0xf]
  %v992 = vld [vmem:[#allocation2 + $0xc0] sm:$0xf]
  %v993 = vld [vmem:[#allocation2 + $0xc4] sm:$0xf]
  %v994 = vld [vmem:[#allocation2 + $0xc8] sm:$0xf]
  %v995 = vld [vmem:[#allocation2 + $0xcc] sm:$0xf]
  %v996 = vld [vmem:[#allocation2 + $0xd0] sm:$0xf]
  %v997 = vld [vmem:[#allocation2 + $0xd4] sm:$0xf]
  %v998 = vld [vmem:[#allocation2 + $0xd8] sm:$0xf]
  %v999 = vld [vmem:[#allocation2 + $0xdc] sm:$0xf]
  %v1000 = vld [vmem:[#allocation2 + $0xe0] sm:$0xf]
  %v1001 = vld [vmem:[#allocation2 + $0xe4] sm:$0xf]
  %v1002 = vld [vmem:[#allocation2 + $0xe8] sm:$0xf]
  %v1003 = vld [vmem:[#allocation2 + $0xec] sm:$0xf]
  %v1004 = vld [vmem:[#allocation2 + $0xf0] sm:$0xf]
  %v1005 = vld [vmem:[#allocation2 + $0xf4] sm:$0xf]
  %v1006 = vld [vmem:[#allocation2 + $0xf8] sm:$0xf]
  %v1007 = vld [vmem:[#allocation2 + $0xfc] sm:$0xf]
  %v1008 = vld [vmem:[#allocation2 + $0x100] sm:$0xf]
  %v1009 = vld [vmem:[#allocation2 + $0x104] sm:$0xf]
  %v1010 = vld [vmem:[#allocation2 + $0x108] sm:$0xf]
  %v1011 = vld [vmem:[#allocation2 + $0x10c] sm:$0xf]
  %v1012 = vld [vmem:[#allocation2 + $0x110] sm:$0xf]
  %v1013 = vld [vmem:[#allocation2 + $0x114] sm:$0xf]
  %v1014 = vld [vmem:[#allocation2 + $0x118] sm:$0xf]
  %v1015 = vld [vmem:[#allocation2 + $0x11c] sm:$0xf]
  %v1016 = vld [vmem:[#allocation2 + $0x120] sm:$0xf]
  %v1017 = vld [vmem:[#allocation2 + $0x124] sm:$0xf]
  %v1018 = vld [vmem:[#allocation2 + $0x128] sm:$0xf]
  %v1019 = vld [vmem:[#allocation2 + $0x12c] sm:$0xf]
  %v1020 = vld [vmem:[#allocation2 + $0x130] sm:$0xf]
  %v1021 = vld [vmem:[#allocation2 + $0x134] sm:$0xf]
  %v1022 = vld [vmem:[#allocation2 + $0x138] sm:$0xf]
  %v1023 = vld [vmem:[#allocation2 + $0x13c] sm:$0xf]
  %v1024 = vld [vmem:[#allocation2 + $0x140] sm:$0xf]
  %v1025 = vld [vmem:[#allocation2 + $0x144] sm:$0xf]
  %v1026 = vld [vmem:[#allocation2 + $0x148] sm:$0xf]
  %v1027 = vld [vmem:[#allocation2 + $0x14c] sm:$0xf]
  %v1028 = vld [vmem:[#allocation2 + $0x150] sm:$0xf]
  %v1029 = vld [vmem:[#allocation2 + $0x154] sm:$0xf]
  %v1030 = vld [vmem:[#allocation2 + $0x158] sm:$0xf]
  %v1031 = vld [vmem:[#allocation2 + $0x15c] sm:$0xf]
  %v1032 = vld [vmem:[#allocation2 + $0x160] sm:$0xf]
  %v1033 = vld [vmem:[#allocation2 + $0x164] sm:$0xf]
  %v1034 = vld [vmem:[#allocation2 + $0x168] sm:$0xf]
  %v1035 = vld [vmem:[#allocation2 + $0x16c] sm:$0xf]
  %v1036 = vld [vmem:[#allocation2 + $0x170] sm:$0xf]
  %v1037 = vld [vmem:[#allocation2 + $0x174] sm:$0xf]
  %v1038 = vld [vmem:[#allocation2 + $0x178] sm:$0xf]
  %v1039 = vld [vmem:[#allocation2 + $0x17c] sm:$0xf]
  %v1040 = vld [vmem:[#allocation2 + $0x180] sm:$0xf]
  %v1041 = vld [vmem:[#allocation2 + $0x184] sm:$0xf]
  %v1042 = vld [vmem:[#allocation2 + $0x188] sm:$0xf]
  %v1043 = vld [vmem:[#allocation2 + $0x18c] sm:$0xf]
  %v1044 = vld [vmem:[#allocation2 + $0x190] sm:$0xf]
  %v1045 = vld [vmem:[#allocation2 + $0x194] sm:$0xf]
  %v1046 = vld [vmem:[#allocation2 + $0x198] sm:$0xf]
  %v1047 = vld [vmem:[#allocation2 + $0x19c] sm:$0xf]
  %v1048 = vld [vmem:[#allocation2 + $0x1a0] sm:$0xf]
  %v1049 = vld [vmem:[#allocation2 + $0x1a4] sm:$0xf]
  %v1050 = vld [vmem:[#allocation2 + $0x1a8] sm:$0xf]
  %v1051 = vld [vmem:[#allocation2 + $0x1ac] sm:$0xf]
  %v1052 = vld [vmem:[#allocation2 + $0x1b0] sm:$0xf]
  %v1053 = vld [vmem:[#allocation2 + $0x1b4] sm:$0xf]
  %v1054 = vld [vmem:[#allocation2 + $0x1b8] sm:$0xf]
  %v1055 = vld [vmem:[#allocation2 + $0x1bc] sm:$0xf]
  %v1056 = vld [vmem:[#allocation2 + $0x1c0] sm:$0x1]
  %v1185 = vunpack.c.l.b16 %v816
  %v1186 = vunpack.c.h.b16 %v816
  %v1187 = vunpack.c.l.b16 %v817
  %v1188 = vunpack.c.h.b16 %v817
  %v1189 = vunpack.c.l.b16 %v818
  %v1190 = vunpack.c.h.b16 %v818
  %v1191 = vunpack.c.l.b16 %v819
  %v1192 = vunpack.c.h.b16 %v819
  %v1193 = vunpack.c.l.b16 %v820
  %v1194 = vunpack.c.h.b16 %v820
  %v1195 = vunpack.c.l.b16 %v821
  %v1196 = vunpack.c.h.b16 %v821
  %v1197 = vunpack.c.l.b16 %v822
  %v1198 = vunpack.c.h.b16 %v822
  %v1199 = vunpack.c.l.b16 %v823
  %v1200 = vunpack.c.h.b16 %v823
  %v1201 = vunpack.c.l.b16 %v824
  %v1202 = vunpack.c.h.b16 %v824
  %v1203 = vunpack.c.l.b16 %v825
  %v1204 = vunpack.c.h.b16 %v825
  %v1205 = vunpack.c.l.b16 %v826
  %v1206 = vunpack.c.h.b16 %v826
  %v1207 = vunpack.c.l.b16 %v827
  %v1208 = vunpack.c.h.b16 %v827
  %v1209 = vunpack.c.l.b16 %v828
  %v1210 = vunpack.c.h.b16 %v828
  %v1211 = vunpack.c.l.b16 %v829
  %v1212 = vunpack.c.h.b16 %v829
  %v1213 = vunpack.c.l.b16 %v830
  %v1214 = vunpack.c.h.b16 %v830
  %v1215 = vunpack.c.l.b16 %v831
  %v1216 = vunpack.c.h.b16 %v831
  %v1217 = vunpack.c.l.b16 %v832
  %v1218 = vunpack.c.h.b16 %v832
  %v1219 = vunpack.c.l.b16 %v833
  %v1220 = vunpack.c.h.b16 %v833
  %v1221 = vunpack.c.l.b16 %v834
  %v1222 = vunpack.c.h.b16 %v834
  %v1223 = vunpack.c.l.b16 %v835
  %v1224 = vunpack.c.h.b16 %v835
  %v1225 = vunpack.c.l.b16 %v836
  %v1226 = vunpack.c.h.b16 %v836
  %v1227 = vunpack.c.l.b16 %v837
  %v1228 = vunpack.c.h.b16 %v837
  %v1229 = vunpack.c.l.b16 %v838
  %v1230 = vunpack.c.h.b16 %v838
  %v1231 = vunpack.c.l.b16 %v839
  %v1232 = vunpack.c.h.b16 %v839
  %v1233 = vunpack.c.l.b16 %v840
  %v1234 = vunpack.c.h.b16 %v840
  %v1235 = vunpack.c.l.b16 %v841
  %v1236 = vunpack.c.h.b16 %v841
  %v1237 = vunpack.c.l.b16 %v842
  %v1238 = vunpack.c.h.b16 %v842
  %v1239 = vunpack.c.l.b16 %v843
  %v1240 = vunpack.c.h.b16 %v843
  %v1241 = vunpack.c.l.b16 %v844
  %v1242 = vunpack.c.h.b16 %v844
  %v1243 = vunpack.c.l.b16 %v845
  %v1244 = vunpack.c.h.b16 %v845
  %v1245 = vunpack.c.l.b16 %v846
  %v1246 = vunpack.c.h.b16 %v846
  %v1247 = vunpack.c.l.b16 %v847
  %v1248 = vunpack.c.h.b16 %v847
  %v1249 = vunpack.c.l.b16 %v848
  %v1250 = vunpack.c.h.b16 %v848
  %v1251 = vunpack.c.l.b16 %v849
  %v1252 = vunpack.c.h.b16 %v849
  %v1253 = vunpack.c.l.b16 %v850
  %v1254 = vunpack.c.h.b16 %v850
  %v1255 = vunpack.c.l.b16 %v851
  %v1256 = vunpack.c.h.b16 %v851
  %v1257 = vunpack.c.l.b16 %v852
  %v1258 = vunpack.c.h.b16 %v852
  %v1259 = vunpack.c.l.b16 %v853
  %v1260 = vunpack.c.h.b16 %v853
  %v1261 = vunpack.c.l.b16 %v854
  %v1262 = vunpack.c.h.b16 %v854
  %v1263 = vunpack.c.l.b16 %v855
  %v1264 = vunpack.c.h.b16 %v855
  %v1265 = vunpack.c.l.b16 %v856
  %v1266 = vunpack.c.h.b16 %v856
  %v1267 = vunpack.c.l.b16 %v857
  %v1268 = vunpack.c.h.b16 %v857
  %v1269 = vunpack.c.l.b16 %v858
  %v1270 = vunpack.c.h.b16 %v858
  %v1271 = vunpack.c.l.b16 %v859
  %v1272 = vunpack.c.h.b16 %v859
  %v1273 = vunpack.c.l.b16 %v860
  %v1274 = vunpack.c.h.b16 %v860
  %v1275 = vunpack.c.l.b16 %v861
  %v1276 = vunpack.c.h.b16 %v861
  %v1277 = vunpack.c.l.b16 %v862
  %v1278 = vunpack.c.h.b16 %v862
  %v1279 = vunpack.c.l.b16 %v863
  %v1280 = vunpack.c.h.b16 %v863
  %v1281 = vunpack.c.l.b16 %v864
  %v1282 = vunpack.c.h.b16 %v864
  %v1283 = vunpack.c.l.b16 %v865
  %v1284 = vunpack.c.h.b16 %v865
  %v1285 = vunpack.c.l.b16 %v866
  %v1286 = vunpack.c.h.b16 %v866
  %v1287 = vunpack.c.l.b16 %v867
  %v1288 = vunpack.c.h.b16 %v867
  %v1289 = vunpack.c.l.b16 %v868
  %v1290 = vunpack.c.h.b16 %v868
  %v1291 = vunpack.c.l.b16 %v869
  %v1292 = vunpack.c.h.b16 %v869
  %v1293 = vunpack.c.l.b16 %v870
  %v1294 = vunpack.c.h.b16 %v870
  %v1295 = vunpack.c.l.b16 %v871
  %v1296 = vunpack.c.h.b16 %v871
  %v1297 = vunpack.c.l.b16 %v872
  %v1298 = vunpack.c.h.b16 %v872
  %v1299 = vunpack.c.l.b16 %v873
  %v1300 = vunpack.c.h.b16 %v873
  %v1301 = vunpack.c.l.b16 %v874
  %v1302 = vunpack.c.h.b16 %v874
  %v1303 = vunpack.c.l.b16 %v875
  %v1304 = vunpack.c.h.b16 %v875
  %v1305 = vunpack.c.l.b16 %v876
  %v1306 = vunpack.c.h.b16 %v876
  %v1307 = vunpack.c.l.b16 %v877
  %v1308 = vunpack.c.h.b16 %v877
  %v1309 = vunpack.c.l.b16 %v878
  %v1310 = vunpack.c.h.b16 %v878
  %v1311 = vunpack.c.l.b16 %v879
  %v1312 = vunpack.c.h.b16 %v879
  %v1313 = vunpack.c.l.b16 %v880
  %v1314 = vunpack.c.h.b16 %v880
  %v1315 = vunpack.c.l.b16 %v881
  %v1316 = vunpack.c.h.b16 %v881
  %v1317 = vunpack.c.l.b16 %v882
  %v1318 = vunpack.c.h.b16 %v882
  %v1319 = vunpack.c.l.b16 %v883
  %v1320 = vunpack.c.h.b16 %v883
  %v1321 = vunpack.c.l.b16 %v884
  %v1322 = vunpack.c.h.b16 %v884
  %v1323 = vunpack.c.l.b16 %v885
  %v1324 = vunpack.c.h.b16 %v885
  %v1325 = vunpack.c.l.b16 %v886
  %v1326 = vunpack.c.h.b16 %v886
  %v1327 = vunpack.c.l.b16 %v887
  %v1328 = vunpack.c.h.b16 %v887
  %v1329 = vunpack.c.l.b16 %v888
  %v1330 = vunpack.c.h.b16 %v888
  %v1331 = vunpack.c.l.b16 %v889
  %v1332 = vunpack.c.h.b16 %v889
  %v1333 = vunpack.c.l.b16 %v890
  %v1334 = vunpack.c.h.b16 %v890
  %v1335 = vunpack.c.l.b16 %v891
  %v1336 = vunpack.c.h.b16 %v891
  %v1337 = vunpack.c.l.b16 %v892
  %v1338 = vunpack.c.h.b16 %v892
  %v1339 = vunpack.c.l.b16 %v893
  %v1340 = vunpack.c.h.b16 %v893
  %v1341 = vunpack.c.l.b16 %v894
  %v1342 = vunpack.c.h.b16 %v894
  %v1343 = vunpack.c.l.b16 %v895
  %v1344 = vunpack.c.h.b16 %v895
  %v1345 = vunpack.c.l.b16 %v896
  %v1346 = vunpack.c.h.b16 %v896
  %v1347 = vunpack.c.l.b16 %v897
  %v1348 = vunpack.c.h.b16 %v897
  %v1349 = vunpack.c.l.b16 %v898
  %v1350 = vunpack.c.h.b16 %v898
  %v1351 = vunpack.c.l.b16 %v899
  %v1352 = vunpack.c.h.b16 %v899
  %v1353 = vunpack.c.l.b16 %v900
  %v1354 = vunpack.c.h.b16 %v900
  %v1355 = vunpack.c.l.b16 %v901
  %v1356 = vunpack.c.h.b16 %v901
  %v1357 = vunpack.c.l.b16 %v902
  %v1358 = vunpack.c.h.b16 %v902
  %v1359 = vunpack.c.l.b16 %v903
  %v1360 = vunpack.c.h.b16 %v903
  %v1361 = vunpack.c.l.b16 %v904
  %v1362 = vunpack.c.h.b16 %v904
  %v1363 = vunpack.c.l.b16 %v905
  %v1364 = vunpack.c.h.b16 %v905
  %v1365 = vunpack.c.l.b16 %v906
  %v1366 = vunpack.c.h.b16 %v906
  %v1367 = vunpack.c.l.b16 %v907
  %v1368 = vunpack.c.h.b16 %v907
  %v1369 = vunpack.c.l.b16 %v908
  %v1370 = vunpack.c.h.b16 %v908
  %v1371 = vunpack.c.l.b16 %v909
  %v1372 = vunpack.c.h.b16 %v909
  %v1373 = vunpack.c.l.b16 %v910
  %v1374 = vunpack.c.h.b16 %v910
  %v1375 = vunpack.c.l.b16 %v911
  %v1376 = vunpack.c.h.b16 %v911
  %v1377 = vunpack.c.l.b16 %v912
  %v1378 = vunpack.c.h.b16 %v912
  %v1379 = vunpack.c.l.b16 %v913
  %v1380 = vunpack.c.h.b16 %v913
  %v1381 = vunpack.c.l.b16 %v914
  %v1382 = vunpack.c.h.b16 %v914
  %v1383 = vunpack.c.l.b16 %v915
  %v1384 = vunpack.c.h.b16 %v915
  %v1385 = vunpack.c.l.b16 %v916
  %v1386 = vunpack.c.h.b16 %v916
  %v1387 = vunpack.c.l.b16 %v917
  %v1388 = vunpack.c.h.b16 %v917
  %v1389 = vunpack.c.l.b16 %v918
  %v1390 = vunpack.c.h.b16 %v918
  %v1391 = vunpack.c.l.b16 %v919
  %v1392 = vunpack.c.h.b16 %v919
  %v1393 = vunpack.c.l.b16 %v920
  %v1394 = vunpack.c.h.b16 %v920
  %v1395 = vunpack.c.l.b16 %v921
  %v1396 = vunpack.c.h.b16 %v921
  %v1397 = vunpack.c.l.b16 %v922
  %v1398 = vunpack.c.h.b16 %v922
  %v1399 = vunpack.c.l.b16 %v923
  %v1400 = vunpack.c.h.b16 %v923
  %v1401 = vunpack.c.l.b16 %v924
  %v1402 = vunpack.c.h.b16 %v924
  %v1403 = vunpack.c.l.b16 %v925
  %v1404 = vunpack.c.h.b16 %v925
  %v1405 = vunpack.c.l.b16 %v926
  %v1406 = vunpack.c.h.b16 %v926
  %v1407 = vunpack.c.l.b16 %v927
  %v1408 = vunpack.c.h.b16 %v927
  %v1409 = vunpack.c.l.b16 %v928
  %v1410 = vunpack.c.h.b16 %v928
  %v1411 = vunpack.c.l.b16 %v929
  %v1412 = vunpack.c.h.b16 %v929
  %v1413 = vunpack.c.l.b16 %v930
  %v1414 = vunpack.c.h.b16 %v930
  %v1415 = vunpack.c.l.b16 %v931
  %v1416 = vunpack.c.h.b16 %v931
  %v1417 = vunpack.c.l.b16 %v932
  %v1418 = vunpack.c.h.b16 %v932
  %v1419 = vunpack.c.l.b16 %v933
  %v1420 = vunpack.c.h.b16 %v933
  %v1421 = vunpack.c.l.b16 %v934
  %v1422 = vunpack.c.h.b16 %v934
  %v1423 = vunpack.c.l.b16 %v935
  %v1424 = vunpack.c.h.b16 %v935
  %v1425 = vunpack.c.l.b16 %v936
  %v1426 = vunpack.c.h.b16 %v936
  %v1427 = vunpack.c.l.b16 %v937
  %v1428 = vunpack.c.h.b16 %v937
  %v1429 = vunpack.c.l.b16 %v938
  %v1430 = vunpack.c.h.b16 %v938
  %v1431 = vunpack.c.l.b16 %v939
  %v1432 = vunpack.c.h.b16 %v939
  %v1433 = vunpack.c.l.b16 %v940
  %v1434 = vunpack.c.h.b16 %v940
  %v1435 = vunpack.c.l.b16 %v941
  %v1436 = vunpack.c.h.b16 %v941
  %v1437 = vunpack.c.l.b16 %v942
  %v1438 = vunpack.c.h.b16 %v942
  %v1439 = vunpack.c.l.b16 %v943
  %v1440 = vunpack.c.h.b16 %v943
  %v1441 = vpack.c.b16 %v1193, %v1185
  %v1442 = vpack.c.b16 %v1194, %v1186
  %v1443 = vpack.c.b16 %v1195, %v1187
  %v1444 = vpack.c.b16 %v1196, %v1188
  %v1445 = vpack.c.b16 %v1197, %v1189
  %v1446 = vpack.c.b16 %v1198, %v1190
  %v1447 = vpack.c.b16 %v1199, %v1191
  %v1448 = vpack.c.b16 %v1200, %v1192
  %v1449 = vpack.c.b16 %v1209, %v1201
  %v1450 = vpack.c.b16 %v1210, %v1202
  %v1451 = vpack.c.b16 %v1211, %v1203
  %v1452 = vpack.c.b16 %v1212, %v1204
  %v1453 = vpack.c.b16 %v1213, %v1205
  %v1454 = vpack.c.b16 %v1214, %v1206
  %v1455 = vpack.c.b16 %v1215, %v1207
  %v1456 = vpack.c.b16 %v1216, %v1208
  %v1457 = vpack.c.b16 %v1225, %v1217
  %v1458 = vpack.c.b16 %v1226, %v1218
  %v1459 = vpack.c.b16 %v1227, %v1219
  %v1460 = vpack.c.b16 %v1228, %v1220
  %v1461 = vpack.c.b16 %v1229, %v1221
  %v1462 = vpack.c.b16 %v1230, %v1222
  %v1463 = vpack.c.b16 %v1231, %v1223
  %v1464 = vpack.c.b16 %v1232, %v1224
  %v1465 = vpack.c.b16 %v1241, %v1233
  %v1466 = vpack.c.b16 %v1242, %v1234
  %v1467 = vpack.c.b16 %v1243, %v1235
  %v1468 = vpack.c.b16 %v1244, %v1236
  %v1469 = vpack.c.b16 %v1245, %v1237
  %v1470 = vpack.c.b16 %v1246, %v1238
  %v1471 = vpack.c.b16 %v1247, %v1239
  %v1472 = vpack.c.b16 %v1248, %v1240
  %v1473 = vpack.c.b16 %v1257, %v1249
  %v1474 = vpack.c.b16 %v1258, %v1250
  %v1475 = vpack.c.b16 %v1259, %v1251
  %v1476 = vpack.c.b16 %v1260, %v1252
  %v1477 = vpack.c.b16 %v1261, %v1253
  %v1478 = vpack.c.b16 %v1262, %v1254
  %v1479 = vpack.c.b16 %v1263, %v1255
  %v1480 = vpack.c.b16 %v1264, %v1256
  %v1481 = vpack.c.b16 %v1273, %v1265
  %v1482 = vpack.c.b16 %v1274, %v1266
  %v1483 = vpack.c.b16 %v1275, %v1267
  %v1484 = vpack.c.b16 %v1276, %v1268
  %v1485 = vpack.c.b16 %v1277, %v1269
  %v1486 = vpack.c.b16 %v1278, %v1270
  %v1487 = vpack.c.b16 %v1279, %v1271
  %v1488 = vpack.c.b16 %v1280, %v1272
  %v1489 = vpack.c.b16 %v1289, %v1281
  %v1490 = vpack.c.b16 %v1290, %v1282
  %v1491 = vpack.c.b16 %v1291, %v1283
  %v1492 = vpack.c.b16 %v1292, %v1284
  %v1493 = vpack.c.b16 %v1293, %v1285
  %v1494 = vpack.c.b16 %v1294, %v1286
  %v1495 = vpack.c.b16 %v1295, %v1287
  %v1496 = vpack.c.b16 %v1296, %v1288
  %v1497 = vpack.c.b16 %v1305, %v1297
  %v1498 = vpack.c.b16 %v1306, %v1298
  %v1499 = vpack.c.b16 %v1307, %v1299
  %v1500 = vpack.c.b16 %v1308, %v1300
  %v1501 = vpack.c.b16 %v1309, %v1301
  %v1502 = vpack.c.b16 %v1310, %v1302
  %v1503 = vpack.c.b16 %v1311, %v1303
  %v1504 = vpack.c.b16 %v1312, %v1304
  %v1505 = vpack.c.b16 %v1321, %v1313
  %v1506 = vpack.c.b16 %v1322, %v1314
  %v1507 = vpack.c.b16 %v1323, %v1315
  %v1508 = vpack.c.b16 %v1324, %v1316
  %v1509 = vpack.c.b16 %v1325, %v1317
  %v1510 = vpack.c.b16 %v1326, %v1318
  %v1511 = vpack.c.b16 %v1327, %v1319
  %v1512 = vpack.c.b16 %v1328, %v1320
  %v1513 = vpack.c.b16 %v1337, %v1329
  %v1514 = vpack.c.b16 %v1338, %v1330
  %v1515 = vpack.c.b16 %v1339, %v1331
  %v1516 = vpack.c.b16 %v1340, %v1332
  %v1517 = vpack.c.b16 %v1341, %v1333
  %v1518 = vpack.c.b16 %v1342, %v1334
  %v1519 = vpack.c.b16 %v1343, %v1335
  %v1520 = vpack.c.b16 %v1344, %v1336
  %v1521 = vpack.c.b16 %v1353, %v1345
  %v1522 = vpack.c.b16 %v1354, %v1346
  %v1523 = vpack.c.b16 %v1355, %v1347
  %v1524 = vpack.c.b16 %v1356, %v1348
  %v1525 = vpack.c.b16 %v1357, %v1349
  %v1526 = vpack.c.b16 %v1358, %v1350
  %v1527 = vpack.c.b16 %v1359, %v1351
  %v1528 = vpack.c.b16 %v1360, %v1352
  %v1529 = vpack.c.b16 %v1369, %v1361
  %v1530 = vpack.c.b16 %v1370, %v1362
  %v1531 = vpack.c.b16 %v1371, %v1363
  %v1532 = vpack.c.b16 %v1372, %v1364
  %v1533 = vpack.c.b16 %v1373, %v1365
  %v1534 = vpack.c.b16 %v1374, %v1366
  %v1535 = vpack.c.b16 %v1375, %v1367
  %v1536 = vpack.c.b16 %v1376, %v1368
  %v1537 = vpack.c.b16 %v1385, %v1377
  %v1538 = vpack.c.b16 %v1386, %v1378
  %v1539 = vpack.c.b16 %v1387, %v1379
  %v1540 = vpack.c.b16 %v1388, %v1380
  %v1541 = vpack.c.b16 %v1389, %v1381
  %v1542 = vpack.c.b16 %v1390, %v1382
  %v1543 = vpack.c.b16 %v1391, %v1383
  %v1544 = vpack.c.b16 %v1392, %v1384
  %v1545 = vpack.c.b16 %v1401, %v1393
  %v1546 = vpack.c.b16 %v1402, %v1394
  %v1547 = vpack.c.b16 %v1403, %v1395
  %v1548 = vpack.c.b16 %v1404, %v1396
  %v1549 = vpack.c.b16 %v1405, %v1397
  %v1550 = vpack.c.b16 %v1406, %v1398
  %v1551 = vpack.c.b16 %v1407, %v1399
  %v1552 = vpack.c.b16 %v1408, %v1400
  %v1553 = vpack.c.b16 %v1417, %v1409
  %v1554 = vpack.c.b16 %v1418, %v1410
  %v1555 = vpack.c.b16 %v1419, %v1411
  %v1556 = vpack.c.b16 %v1420, %v1412
  %v1557 = vpack.c.b16 %v1421, %v1413
  %v1558 = vpack.c.b16 %v1422, %v1414
  %v1559 = vpack.c.b16 %v1423, %v1415
  %v1560 = vpack.c.b16 %v1424, %v1416
  %v1561 = vpack.c.b16 %v1433, %v1425
  %v1562 = vpack.c.b16 %v1434, %v1426
  %v1563 = vpack.c.b16 %v1435, %v1427
  %v1564 = vpack.c.b16 %v1436, %v1428
  %v1565 = vpack.c.b16 %v1437, %v1429
  %v1566 = vpack.c.b16 %v1438, %v1430
  %v1567 = vpack.c.b16 %v1439, %v1431
  %v1568 = vpack.c.b16 %v1440, %v1432
  %v1794 = vunpack.c.l.b16 %v944
  %v1795 = vunpack.c.l.b16 %v945
  %v1796 = vunpack.c.l.b16 %v946
  %v1797 = vunpack.c.l.b16 %v947
  %v1798 = vunpack.c.l.b16 %v948
  %v1799 = vunpack.c.l.b16 %v949
  %v1800 = vunpack.c.l.b16 %v950
  %v1801 = vunpack.c.l.b16 %v951
  %v1802 = vunpack.c.l.b16 %v952
  %v1803 = vunpack.c.l.b16 %v953
  %v1804 = vunpack.c.l.b16 %v954
  %v1805 = vunpack.c.l.b16 %v955
  %v1806 = vunpack.c.l.b16 %v956
  %v1807 = vunpack.c.l.b16 %v957
  %v1808 = vunpack.c.l.b16 %v958
  %v1809 = vunpack.c.l.b16 %v959
  %v1810 = vunpack.c.l.b16 %v960
  %v1811 = vunpack.c.l.b16 %v961
  %v1812 = vunpack.c.l.b16 %v962
  %v1813 = vunpack.c.l.b16 %v963
  %v1814 = vunpack.c.l.b16 %v964
  %v1815 = vunpack.c.l.b16 %v965
  %v1816 = vunpack.c.l.b16 %v966
  %v1817 = vunpack.c.l.b16 %v967
  %v1818 = vunpack.c.l.b16 %v968
  %v1819 = vunpack.c.l.b16 %v969
  %v1820 = vunpack.c.l.b16 %v970
  %v1821 = vunpack.c.l.b16 %v971
  %v1822 = vunpack.c.l.b16 %v972
  %v1823 = vunpack.c.l.b16 %v973
  %v1824 = vunpack.c.l.b16 %v974
  %v1825 = vunpack.c.l.b16 %v975
  %v1826 = vunpack.c.l.b16 %v976
  %v1827 = vunpack.c.l.b16 %v977
  %v1828 = vunpack.c.l.b16 %v978
  %v1829 = vunpack.c.l.b16 %v979
  %v1830 = vunpack.c.l.b16 %v980
  %v1831 = vunpack.c.l.b16 %v981
  %v1832 = vunpack.c.l.b16 %v982
  %v1833 = vunpack.c.l.b16 %v983
  %v1834 = vunpack.c.l.b16 %v984
  %v1835 = vunpack.c.l.b16 %v985
  %v1836 = vunpack.c.l.b16 %v986
  %v1837 = vunpack.c.l.b16 %v987
  %v1838 = vunpack.c.l.b16 %v988
  %v1839 = vunpack.c.l.b16 %v989
  %v1840 = vunpack.c.l.b16 %v990
  %v1841 = vunpack.c.l.b16 %v991
  %v1842 = vunpack.c.l.b16 %v992
  %v1843 = vunpack.c.l.b16 %v993
  %v1844 = vunpack.c.l.b16 %v994
  %v1845 = vunpack.c.l.b16 %v995
  %v1846 = vunpack.c.l.b16 %v996
  %v1847 = vunpack.c.l.b16 %v997
  %v1848 = vunpack.c.l.b16 %v998
  %v1849 = vunpack.c.l.b16 %v999
  %v1850 = vunpack.c.l.b16 %v1000
  %v1851 = vunpack.c.l.b16 %v1001
  %v1852 = vunpack.c.l.b16 %v1002
  %v1853 = vunpack.c.l.b16 %v1003
  %v1854 = vunpack.c.l.b16 %v1004
  %v1855 = vunpack.c.l.b16 %v1005
  %v1856 = vunpack.c.l.b16 %v1006
  %v1857 = vunpack.c.l.b16 %v1007
  %v1858 = vunpack.c.l.b16 %v1008
  %v1859 = vunpack.c.l.b16 %v1009
  %v1860 = vunpack.c.l.b16 %v1010
  %v1861 = vunpack.c.l.b16 %v1011
  %v1862 = vunpack.c.l.b16 %v1012
  %v1863 = vunpack.c.l.b16 %v1013
  %v1864 = vunpack.c.l.b16 %v1014
  %v1865 = vunpack.c.l.b16 %v1015
  %v1866 = vunpack.c.l.b16 %v1016
  %v1867 = vunpack.c.l.b16 %v1017
  %v1868 = vunpack.c.l.b16 %v1018
  %v1869 = vunpack.c.l.b16 %v1019
  %v1870 = vunpack.c.l.b16 %v1020
  %v1871 = vunpack.c.l.b16 %v1021
  %v1872 = vunpack.c.l.b16 %v1022
  %v1873 = vunpack.c.l.b16 %v1023
  %v1874 = vunpack.c.l.b16 %v1024
  %v1875 = vunpack.c.l.b16 %v1025
  %v1876 = vunpack.c.l.b16 %v1026
  %v1877 = vunpack.c.l.b16 %v1027
  %v1878 = vunpack.c.l.b16 %v1028
  %v1879 = vunpack.c.l.b16 %v1029
  %v1880 = vunpack.c.l.b16 %v1030
  %v1881 = vunpack.c.l.b16 %v1031
  %v1882 = vunpack.c.l.b16 %v1032
  %v1883 = vunpack.c.l.b16 %v1033
  %v1884 = vunpack.c.l.b16 %v1034
  %v1885 = vunpack.c.l.b16 %v1035
  %v1886 = vunpack.c.l.b16 %v1036
  %v1887 = vunpack.c.l.b16 %v1037
  %v1888 = vunpack.c.l.b16 %v1038
  %v1889 = vunpack.c.l.b16 %v1039
  %v1890 = vunpack.c.l.b16 %v1040
  %v1891 = vunpack.c.l.b16 %v1041
  %v1892 = vunpack.c.l.b16 %v1042
  %v1893 = vunpack.c.l.b16 %v1043
  %v1894 = vunpack.c.l.b16 %v1044
  %v1895 = vunpack.c.l.b16 %v1045
  %v1896 = vunpack.c.l.b16 %v1046
  %v1897 = vunpack.c.l.b16 %v1047
  %v1898 = vunpack.c.l.b16 %v1048
  %v1899 = vunpack.c.l.b16 %v1049
  %v1900 = vunpack.c.l.b16 %v1050
  %v1901 = vunpack.c.l.b16 %v1051
  %v1902 = vunpack.c.l.b16 %v1052
  %v1903 = vunpack.c.l.b16 %v1053
  %v1904 = vunpack.c.l.b16 %v1054
  %v1905 = vunpack.c.l.b16 %v1055
  %v1906 = vunpack.c.l.b16 %v1056
  %v1907 = vpack.c.b16 %v1795, %v1794
  %v1908 = vpack.c.b16 %v1797, %v1796
  %v1909 = vpack.c.b16 %v1799, %v1798
  %v1910 = vpack.c.b16 %v1801, %v1800
  %v1911 = vpack.c.b16 %v1803, %v1802
  %v1912 = vpack.c.b16 %v1805, %v1804
  %v1913 = vpack.c.b16 %v1807, %v1806
  %v1914 = vpack.c.b16 %v1809, %v1808
  %v1915 = vpack.c.b16 %v1811, %v1810
  %v1916 = vpack.c.b16 %v1813, %v1812
  %v1917 = vpack.c.b16 %v1815, %v1814
  %v1918 = vpack.c.b16 %v1817, %v1816
  %v1919 = vpack.c.b16 %v1819, %v1818
  %v1920 = vpack.c.b16 %v1821, %v1820
  %v1921 = vpack.c.b16 %v1823, %v1822
  %v1922 = vpack.c.b16 %v1825, %v1824
  %v1923 = vpack.c.b16 %v1827, %v1826
  %v1924 = vpack.c.b16 %v1829, %v1828
  %v1925 = vpack.c.b16 %v1831, %v1830
  %v1926 = vpack.c.b16 %v1833, %v1832
  %v1927 = vpack.c.b16 %v1835, %v1834
  %v1928 = vpack.c.b16 %v1837, %v1836
  %v1929 = vpack.c.b16 %v1839, %v1838
  %v1930 = vpack.c.b16 %v1841, %v1840
  %v1931 = vpack.c.b16 %v1843, %v1842
  %v1932 = vpack.c.b16 %v1845, %v1844
  %v1933 = vpack.c.b16 %v1847, %v1846
  %v1934 = vpack.c.b16 %v1849, %v1848
  %v1935 = vpack.c.b16 %v1851, %v1850
  %v1936 = vpack.c.b16 %v1853, %v1852
  %v1937 = vpack.c.b16 %v1855, %v1854
  %v1938 = vpack.c.b16 %v1857, %v1856
  %v1939 = vpack.c.b16 %v1859, %v1858
  %v1940 = vpack.c.b16 %v1861, %v1860
  %v1941 = vpack.c.b16 %v1863, %v1862
  %v1942 = vpack.c.b16 %v1865, %v1864
  %v1943 = vpack.c.b16 %v1867, %v1866
  %v1944 = vpack.c.b16 %v1869, %v1868
  %v1945 = vpack.c.b16 %v1871, %v1870
  %v1946 = vpack.c.b16 %v1873, %v1872
  %v1947 = vpack.c.b16 %v1875, %v1874
  %v1948 = vpack.c.b16 %v1877, %v1876
  %v1949 = vpack.c.b16 %v1879, %v1878
  %v1950 = vpack.c.b16 %v1881, %v1880
  %v1951 = vpack.c.b16 %v1883, %v1882
  %v1952 = vpack.c.b16 %v1885, %v1884
  %v1953 = vpack.c.b16 %v1887, %v1886
  %v1954 = vpack.c.b16 %v1889, %v1888
  %v1955 = vpack.c.b16 %v1891, %v1890
  %v1956 = vpack.c.b16 %v1893, %v1892
  %v1957 = vpack.c.b16 %v1895, %v1894
  %v1958 = vpack.c.b16 %v1897, %v1896
  %v1959 = vpack.c.b16 %v1899, %v1898
  %v1960 = vpack.c.b16 %v1901, %v1900
  %v1961 = vpack.c.b16 %v1903, %v1902
  %v1962 = vpack.c.b16 %v1905, %v1904
  %v1963 = vpack.c.b16 %v1906, %v1906
  %vm2020 = vcmask 7168
  %v2022 = vsel %vm2020, %v1448, 0
  %v2025 = vsel %vm2020, %v1456, 0
  %v2028 = vsel %vm2020, %v1464, 0
  %v2031 = vsel %vm2020, %v1472, 0
  %v2034 = vsel %vm2020, %v1480, 0
  %v2037 = vsel %vm2020, %v1488, 0
  %v2040 = vsel %vm2020, %v1496, 0
  %v2043 = vsel %vm2020, %v1504, 0
  %v2046 = vsel %vm2020, %v1512, 0
  %v2049 = vsel %vm2020, %v1520, 0
  %v2052 = vsel %vm2020, %v1528, 0
  %v2055 = vsel %vm2020, %v1536, 0
  %v2058 = vsel %vm2020, %v1544, 0
  %v2061 = vsel %vm2020, %v1552, 0
  %v2064 = vsel %vm2020, %v1560, 0
  %v2067 = vsel %vm2020, %v1568, 0
  %vm2069 = vcmask 1040384
  %v2070 = vsel 0, 4294967295, 65535
  %v2071 = vsel %vm2069, %v2070, 0
  %v2073 = vand.u32 %v1963, %v2071
  %2075 = vmatpush.bf16.msra.mxu0 %v1914
  %2076 = vmatpush.bf16.msra.mxu0 %v1913
  %2077 = vmatpush.bf16.msra.mxu0 %v1912
  %2078 = vmatpush.bf16.msra.mxu0 %v1911
  %2079 = vmatpush.bf16.msra.mxu0 %v1910
  %2080 = vmatpush.bf16.msra.mxu0 %v1909
  %2081 = vmatpush.bf16.msra.mxu0 %v1908
  %2082 = vmatpush.bf16.msra.mxu0 %v1907
  %2083 = vmatmul.bf16.gmra.mxu0 %v1441
  %v2084 = vpop.f32.mrf.mxu0
  %v2085 = vadd.f32 0.0, %v2084
  %v2086 = vpop.f32.mrf.mxu0
  %v2087 = vadd.f32 0.0, %v2086
  %2088 = vmatmul.bf16.gmra.mxu0 %v1449
  %v2089 = vpop.f32.mrf.mxu0
  %v2090 = vadd.f32 0.0, %v2089
  %v2091 = vpop.f32.mrf.mxu0
  %v2092 = vadd.f32 0.0, %v2091
  %2093 = vmatmul.bf16.gmra.mxu0 %v1457
  %v2094 = vpop.f32.mrf.mxu0
  %v2095 = vadd.f32 0.0, %v2094
  %v2096 = vpop.f32.mrf.mxu0
  %v2097 = vadd.f32 0.0, %v2096
  %2098 = vmatmul.bf16.gmra.mxu0 %v1465
  %v2099 = vpop.f32.mrf.mxu0
  %v2100 = vadd.f32 0.0, %v2099
  %v2101 = vpop.f32.mrf.mxu0
  %v2102 = vadd.f32 0.0, %v2101
  %2103 = vmatmul.bf16.gmra.mxu0 %v1473
  %v2104 = vpop.f32.mrf.mxu0
  %v2105 = vadd.f32 0.0, %v2104
  %v2106 = vpop.f32.mrf.mxu0
  %v2107 = vadd.f32 0.0, %v2106
  %2108 = vmatmul.bf16.gmra.mxu0 %v1481
  %v2109 = vpop.f32.mrf.mxu0
  %v2110 = vadd.f32 0.0, %v2109
  %v2111 = vpop.f32.mrf.mxu0
  %v2112 = vadd.f32 0.0, %v2111
  %2113 = vmatmul.bf16.gmra.mxu0 %v1489
  %v2114 = vpop.f32.mrf.mxu0
  %v2115 = vadd.f32 0.0, %v2114
  %v2116 = vpop.f32.mrf.mxu0
  %v2117 = vadd.f32 0.0, %v2116
  %2118 = vmatmul.bf16.gmra.mxu0 %v1497
  %v2119 = vpop.f32.mrf.mxu0
  %v2120 = vadd.f32 0.0, %v2119
  %v2121 = vpop.f32.mrf.mxu0
  %v2122 = vadd.f32 0.0, %v2121
  %2123 = vmatmul.bf16.gmra.mxu0 %v1505
  %v2124 = vpop.f32.mrf.mxu0
  %v2125 = vadd.f32 0.0, %v2124
  %v2126 = vpop.f32.mrf.mxu0
  %v2127 = vadd.f32 0.0, %v2126
  %2128 = vmatmul.bf16.gmra.mxu0 %v1513
  %v2129 = vpop.f32.mrf.mxu0
  %v2130 = vadd.f32 0.0, %v2129
  %v2131 = vpop.f32.mrf.mxu0
  %v2132 = vadd.f32 0.0, %v2131
  %2133 = vmatmul.bf16.gmra.mxu0 %v1521
  %v2134 = vpop.f32.mrf.mxu0
  %v2135 = vadd.f32 0.0, %v2134
  %v2136 = vpop.f32.mrf.mxu0
  %v2137 = vadd.f32 0.0, %v2136
  %2138 = vmatmul.bf16.gmra.mxu0 %v1529
  %v2139 = vpop.f32.mrf.mxu0
  %v2140 = vadd.f32 0.0, %v2139
  %v2141 = vpop.f32.mrf.mxu0
  %v2142 = vadd.f32 0.0, %v2141
  %2143 = vmatmul.bf16.gmra.mxu0 %v1537
  %v2144 = vpop.f32.mrf.mxu0
  %v2145 = vadd.f32 0.0, %v2144
  %v2146 = vpop.f32.mrf.mxu0
  %v2147 = vadd.f32 0.0, %v2146
  %2148 = vmatmul.bf16.gmra.mxu0 %v1545
  %v2149 = vpop.f32.mrf.mxu0
  %v2150 = vadd.f32 0.0, %v2149
  %v2151 = vpop.f32.mrf.mxu0
  %v2152 = vadd.f32 0.0, %v2151
  %2153 = vmatmul.bf16.gmra.mxu0 %v1553
  %v2154 = vpop.f32.mrf.mxu0
  %v2155 = vadd.f32 0.0, %v2154
  %v2156 = vpop.f32.mrf.mxu0
  %v2157 = vadd.f32 0.0, %v2156
  %2158 = vmatmul.bf16.gmra.mxu0 %v1561
  %v2159 = vpop.f32.mrf.mxu0
  %v2160 = vadd.f32 0.0, %v2159
  %v2161 = vpop.f32.mrf.mxu0
  %v2162 = vadd.f32 0.0, %v2161
  %2163 = vdwg.mxu0
  %2164 = vmatpush.bf16.msra.mxu0 %v1922
  %2165 = vmatpush.bf16.msra.mxu0 %v1921
  %2166 = vmatpush.bf16.msra.mxu0 %v1920
  %2167 = vmatpush.bf16.msra.mxu0 %v1919
  %2168 = vmatpush.bf16.msra.mxu0 %v1918
  %2169 = vmatpush.bf16.msra.mxu0 %v1917
  %2170 = vmatpush.bf16.msra.mxu0 %v1916
  %2171 = vmatpush.bf16.msra.mxu0 %v1915
  %2172 = vmatmul.bf16.gmra.mxu0 %v1442
  %v2173 = vpop.f32.mrf.mxu0
  %v2174 = vadd.f32 %v2085, %v2173
  %v2175 = vpop.f32.mrf.mxu0
  %v2176 = vadd.f32 %v2087, %v2175
  %2177 = vmatmul.bf16.gmra.mxu0 %v1450
  %v2178 = vpop.f32.mrf.mxu0
  %v2179 = vadd.f32 %v2090, %v2178
  %v2180 = vpop.f32.mrf.mxu0
  %v2181 = vadd.f32 %v2092, %v2180
  %2182 = vmatmul.bf16.gmra.mxu0 %v1458
  %v2183 = vpop.f32.mrf.mxu0
  %v2184 = vadd.f32 %v2095, %v2183
  %v2185 = vpop.f32.mrf.mxu0
  %v2186 = vadd.f32 %v2097, %v2185
  %2187 = vmatmul.bf16.gmra.mxu0 %v1466
  %v2188 = vpop.f32.mrf.mxu0
  %v2189 = vadd.f32 %v2100, %v2188
  %v2190 = vpop.f32.mrf.mxu0
  %v2191 = vadd.f32 %v2102, %v2190
  %2192 = vmatmul.bf16.gmra.mxu0 %v1474
  %v2193 = vpop.f32.mrf.mxu0
  %v2194 = vadd.f32 %v2105, %v2193
  %v2195 = vpop.f32.mrf.mxu0
  %v2196 = vadd.f32 %v2107, %v2195
  %2197 = vmatmul.bf16.gmra.mxu0 %v1482
  %v2198 = vpop.f32.mrf.mxu0
  %v2199 = vadd.f32 %v2110, %v2198
  %v2200 = vpop.f32.mrf.mxu0
  %v2201 = vadd.f32 %v2112, %v2200
  %2202 = vmatmul.bf16.gmra.mxu0 %v1490
  %v2203 = vpop.f32.mrf.mxu0
  %v2204 = vadd.f32 %v2115, %v2203
  %v2205 = vpop.f32.mrf.mxu0
  %v2206 = vadd.f32 %v2117, %v2205
  %2207 = vmatmul.bf16.gmra.mxu0 %v1498
  %v2208 = vpop.f32.mrf.mxu0
  %v2209 = vadd.f32 %v2120, %v2208
  %v2210 = vpop.f32.mrf.mxu0
  %v2211 = vadd.f32 %v2122, %v2210
  %2212 = vmatmul.bf16.gmra.mxu0 %v1506
  %v2213 = vpop.f32.mrf.mxu0
  %v2214 = vadd.f32 %v2125, %v2213
  %v2215 = vpop.f32.mrf.mxu0
  %v2216 = vadd.f32 %v2127, %v2215
  %2217 = vmatmul.bf16.gmra.mxu0 %v1514
  %v2218 = vpop.f32.mrf.mxu0
  %v2219 = vadd.f32 %v2130, %v2218
  %v2220 = vpop.f32.mrf.mxu0
  %v2221 = vadd.f32 %v2132, %v2220
  %2222 = vmatmul.bf16.gmra.mxu0 %v1522
  %v2223 = vpop.f32.mrf.mxu0
  %v2224 = vadd.f32 %v2135, %v2223
  %v2225 = vpop.f32.mrf.mxu0
  %v2226 = vadd.f32 %v2137, %v2225
  %2227 = vmatmul.bf16.gmra.mxu0 %v1530
  %v2228 = vpop.f32.mrf.mxu0
  %v2229 = vadd.f32 %v2140, %v2228
  %v2230 = vpop.f32.mrf.mxu0
  %v2231 = vadd.f32 %v2142, %v2230
  %2232 = vmatmul.bf16.gmra.mxu0 %v1538
  %v2233 = vpop.f32.mrf.mxu0
  %v2234 = vadd.f32 %v2145, %v2233
  %v2235 = vpop.f32.mrf.mxu0
  %v2236 = vadd.f32 %v2147, %v2235
  %2237 = vmatmul.bf16.gmra.mxu0 %v1546
  %v2238 = vpop.f32.mrf.mxu0
  %v2239 = vadd.f32 %v2150, %v2238
  %v2240 = vpop.f32.mrf.mxu0
  %v2241 = vadd.f32 %v2152, %v2240
  %2242 = vmatmul.bf16.gmra.mxu0 %v1554
  %v2243 = vpop.f32.mrf.mxu0
  %v2244 = vadd.f32 %v2155, %v2243
  %v2245 = vpop.f32.mrf.mxu0
  %v2246 = vadd.f32 %v2157, %v2245
  %2247 = vmatmul.bf16.gmra.mxu0 %v1562
  %v2248 = vpop.f32.mrf.mxu0
  %v2249 = vadd.f32 %v2160, %v2248
  %v2250 = vpop.f32.mrf.mxu0
  %v2251 = vadd.f32 %v2162, %v2250
  %2252 = vdwg.mxu0
  %2253 = vmatpush.bf16.msra.mxu0 %v1930
  %2254 = vmatpush.bf16.msra.mxu0 %v1929
  %2255 = vmatpush.bf16.msra.mxu0 %v1928
  %2256 = vmatpush.bf16.msra.mxu0 %v1927
  %2257 = vmatpush.bf16.msra.mxu0 %v1926
  %2258 = vmatpush.bf16.msra.mxu0 %v1925
  %2259 = vmatpush.bf16.msra.mxu0 %v1924
  %2260 = vmatpush.bf16.msra.mxu0 %v1923
  %2261 = vmatmul.bf16.gmra.mxu0 %v1443
  %v2262 = vpop.f32.mrf.mxu0
  %v2263 = vadd.f32 %v2174, %v2262
  %v2264 = vpop.f32.mrf.mxu0
  %v2265 = vadd.f32 %v2176, %v2264
  %2266 = vmatmul.bf16.gmra.mxu0 %v1451
  %v2267 = vpop.f32.mrf.mxu0
  %v2268 = vadd.f32 %v2179, %v2267
  %v2269 = vpop.f32.mrf.mxu0
  %v2270 = vadd.f32 %v2181, %v2269
  %2271 = vmatmul.bf16.gmra.mxu0 %v1459
  %v2272 = vpop.f32.mrf.mxu0
  %v2273 = vadd.f32 %v2184, %v2272
  %v2274 = vpop.f32.mrf.mxu0
  %v2275 = vadd.f32 %v2186, %v2274
  %2276 = vmatmul.bf16.gmra.mxu0 %v1467
  %v2277 = vpop.f32.mrf.mxu0
  %v2278 = vadd.f32 %v2189, %v2277
  %v2279 = vpop.f32.mrf.mxu0
  %v2280 = vadd.f32 %v2191, %v2279
  %2281 = vmatmul.bf16.gmra.mxu0 %v1475
  %v2282 = vpop.f32.mrf.mxu0
  %v2283 = vadd.f32 %v2194, %v2282
  %v2284 = vpop.f32.mrf.mxu0
  %v2285 = vadd.f32 %v2196, %v2284
  %2286 = vmatmul.bf16.gmra.mxu0 %v1483
  %v2287 = vpop.f32.mrf.mxu0
  %v2288 = vadd.f32 %v2199, %v2287
  %v2289 = vpop.f32.mrf.mxu0
  %v2290 = vadd.f32 %v2201, %v2289
  %2291 = vmatmul.bf16.gmra.mxu0 %v1491
  %v2292 = vpop.f32.mrf.mxu0
  %v2293 = vadd.f32 %v2204, %v2292
  %v2294 = vpop.f32.mrf.mxu0
  %v2295 = vadd.f32 %v2206, %v2294
  %2296 = vmatmul.bf16.gmra.mxu0 %v1499
  %v2297 = vpop.f32.mrf.mxu0
  %v2298 = vadd.f32 %v2209, %v2297
  %v2299 = vpop.f32.mrf.mxu0
  %v2300 = vadd.f32 %v2211, %v2299
  %2301 = vmatmul.bf16.gmra.mxu0 %v1507
  %v2302 = vpop.f32.mrf.mxu0
  %v2303 = vadd.f32 %v2214, %v2302
  %v2304 = vpop.f32.mrf.mxu0
  %v2305 = vadd.f32 %v2216, %v2304
  %2306 = vmatmul.bf16.gmra.mxu0 %v1515
  %v2307 = vpop.f32.mrf.mxu0
  %v2308 = vadd.f32 %v2219, %v2307
  %v2309 = vpop.f32.mrf.mxu0
  %v2310 = vadd.f32 %v2221, %v2309
  %2311 = vmatmul.bf16.gmra.mxu0 %v1523
  %v2312 = vpop.f32.mrf.mxu0
  %v2313 = vadd.f32 %v2224, %v2312
  %v2314 = vpop.f32.mrf.mxu0
  %v2315 = vadd.f32 %v2226, %v2314
  %2316 = vmatmul.bf16.gmra.mxu0 %v1531
  %v2317 = vpop.f32.mrf.mxu0
  %v2318 = vadd.f32 %v2229, %v2317
  %v2319 = vpop.f32.mrf.mxu0
  %v2320 = vadd.f32 %v2231, %v2319
  %2321 = vmatmul.bf16.gmra.mxu0 %v1539
  %v2322 = vpop.f32.mrf.mxu0
  %v2323 = vadd.f32 %v2234, %v2322
  %v2324 = vpop.f32.mrf.mxu0
  %v2325 = vadd.f32 %v2236, %v2324
  %2326 = vmatmul.bf16.gmra.mxu0 %v1547
  %v2327 = vpop.f32.mrf.mxu0
  %v2328 = vadd.f32 %v2239, %v2327
  %v2329 = vpop.f32.mrf.mxu0
  %v2330 = vadd.f32 %v2241, %v2329
  %2331 = vmatmul.bf16.gmra.mxu0 %v1555
  %v2332 = vpop.f32.mrf.mxu0
  %v2333 = vadd.f32 %v2244, %v2332
  %v2334 = vpop.f32.mrf.mxu0
  %v2335 = vadd.f32 %v2246, %v2334
  %2336 = vmatmul.bf16.gmra.mxu0 %v1563
  %v2337 = vpop.f32.mrf.mxu0
  %v2338 = vadd.f32 %v2249, %v2337
  %v2339 = vpop.f32.mrf.mxu0
  %v2340 = vadd.f32 %v2251, %v2339
  %2341 = vdwg.mxu0
  %2342 = vmatpush.bf16.msra.mxu0 %v1938
  %2343 = vmatpush.bf16.msra.mxu0 %v1937
  %2344 = vmatpush.bf16.msra.mxu0 %v1936
  %2345 = vmatpush.bf16.msra.mxu0 %v1935
  %2346 = vmatpush.bf16.msra.mxu0 %v1934
  %2347 = vmatpush.bf16.msra.mxu0 %v1933
  %2348 = vmatpush.bf16.msra.mxu0 %v1932
  %2349 = vmatpush.bf16.msra.mxu0 %v1931
  %2350 = vmatmul.bf16.gmra.mxu0 %v1444
  %v2351 = vpop.f32.mrf.mxu0
  %v2352 = vadd.f32 %v2263, %v2351
  %v2353 = vpop.f32.mrf.mxu0
  %v2354 = vadd.f32 %v2265, %v2353
  %2355 = vmatmul.bf16.gmra.mxu0 %v1452
  %v2356 = vpop.f32.mrf.mxu0
  %v2357 = vadd.f32 %v2268, %v2356
  %v2358 = vpop.f32.mrf.mxu0
  %v2359 = vadd.f32 %v2270, %v2358
  %2360 = vmatmul.bf16.gmra.mxu0 %v1460
  %v2361 = vpop.f32.mrf.mxu0
  %v2362 = vadd.f32 %v2273, %v2361
  %v2363 = vpop.f32.mrf.mxu0
  %v2364 = vadd.f32 %v2275, %v2363
  %2365 = vmatmul.bf16.gmra.mxu0 %v1468
  %v2366 = vpop.f32.mrf.mxu0
  %v2367 = vadd.f32 %v2278, %v2366
  %v2368 = vpop.f32.mrf.mxu0
  %v2369 = vadd.f32 %v2280, %v2368
  %2370 = vmatmul.bf16.gmra.mxu0 %v1476
  %v2371 = vpop.f32.mrf.mxu0
  %v2372 = vadd.f32 %v2283, %v2371
  %v2373 = vpop.f32.mrf.mxu0
  %v2374 = vadd.f32 %v2285, %v2373
  %2375 = vmatmul.bf16.gmra.mxu0 %v1484
  %v2376 = vpop.f32.mrf.mxu0
  %v2377 = vadd.f32 %v2288, %v2376
  %v2378 = vpop.f32.mrf.mxu0
  %v2379 = vadd.f32 %v2290, %v2378
  %2380 = vmatmul.bf16.gmra.mxu0 %v1492
  %v2381 = vpop.f32.mrf.mxu0
  %v2382 = vadd.f32 %v2293, %v2381
  %v2383 = vpop.f32.mrf.mxu0
  %v2384 = vadd.f32 %v2295, %v2383
  %2385 = vmatmul.bf16.gmra.mxu0 %v1500
  %v2386 = vpop.f32.mrf.mxu0
  %v2387 = vadd.f32 %v2298, %v2386
  %v2388 = vpop.f32.mrf.mxu0
  %v2389 = vadd.f32 %v2300, %v2388
  %2390 = vmatmul.bf16.gmra.mxu0 %v1508
  %v2391 = vpop.f32.mrf.mxu0
  %v2392 = vadd.f32 %v2303, %v2391
  %v2393 = vpop.f32.mrf.mxu0
  %v2394 = vadd.f32 %v2305, %v2393
  %2395 = vmatmul.bf16.gmra.mxu0 %v1516
  %v2396 = vpop.f32.mrf.mxu0
  %v2397 = vadd.f32 %v2308, %v2396
  %v2398 = vpop.f32.mrf.mxu0
  %v2399 = vadd.f32 %v2310, %v2398
  %2400 = vmatmul.bf16.gmra.mxu0 %v1524
  %v2401 = vpop.f32.mrf.mxu0
  %v2402 = vadd.f32 %v2313, %v2401
  %v2403 = vpop.f32.mrf.mxu0
  %v2404 = vadd.f32 %v2315, %v2403
  %2405 = vmatmul.bf16.gmra.mxu0 %v1532
  %v2406 = vpop.f32.mrf.mxu0
  %v2407 = vadd.f32 %v2318, %v2406
  %v2408 = vpop.f32.mrf.mxu0
  %v2409 = vadd.f32 %v2320, %v2408
  %2410 = vmatmul.bf16.gmra.mxu0 %v1540
  %v2411 = vpop.f32.mrf.mxu0
  %v2412 = vadd.f32 %v2323, %v2411
  %v2413 = vpop.f32.mrf.mxu0
  %v2414 = vadd.f32 %v2325, %v2413
  %2415 = vmatmul.bf16.gmra.mxu0 %v1548
  %v2416 = vpop.f32.mrf.mxu0
  %v2417 = vadd.f32 %v2328, %v2416
  %v2418 = vpop.f32.mrf.mxu0
  %v2419 = vadd.f32 %v2330, %v2418
  %2420 = vmatmul.bf16.gmra.mxu0 %v1556
  %v2421 = vpop.f32.mrf.mxu0
  %v2422 = vadd.f32 %v2333, %v2421
  %v2423 = vpop.f32.mrf.mxu0
  %v2424 = vadd.f32 %v2335, %v2423
  %2425 = vmatmul.bf16.gmra.mxu0 %v1564
  %v2426 = vpop.f32.mrf.mxu0
  %v2427 = vadd.f32 %v2338, %v2426
  %v2428 = vpop.f32.mrf.mxu0
  %v2429 = vadd.f32 %v2340, %v2428
  %2430 = vdwg.mxu0
  %2431 = vmatpush.bf16.msra.mxu0 %v1946
  %2432 = vmatpush.bf16.msra.mxu0 %v1945
  %2433 = vmatpush.bf16.msra.mxu0 %v1944
  %2434 = vmatpush.bf16.msra.mxu0 %v1943
  %2435 = vmatpush.bf16.msra.mxu0 %v1942
  %2436 = vmatpush.bf16.msra.mxu0 %v1941
  %2437 = vmatpush.bf16.msra.mxu0 %v1940
  %2438 = vmatpush.bf16.msra.mxu0 %v1939
  %2439 = vmatmul.bf16.gmra.mxu0 %v1445
  %v2440 = vpop.f32.mrf.mxu0
  %v2441 = vadd.f32 %v2352, %v2440
  %v2442 = vpop.f32.mrf.mxu0
  %v2443 = vadd.f32 %v2354, %v2442
  %2444 = vmatmul.bf16.gmra.mxu0 %v1453
  %v2445 = vpop.f32.mrf.mxu0
  %v2446 = vadd.f32 %v2357, %v2445
  %v2447 = vpop.f32.mrf.mxu0
  %v2448 = vadd.f32 %v2359, %v2447
  %2449 = vmatmul.bf16.gmra.mxu0 %v1461
  %v2450 = vpop.f32.mrf.mxu0
  %v2451 = vadd.f32 %v2362, %v2450
  %v2452 = vpop.f32.mrf.mxu0
  %v2453 = vadd.f32 %v2364, %v2452
  %2454 = vmatmul.bf16.gmra.mxu0 %v1469
  %v2455 = vpop.f32.mrf.mxu0
  %v2456 = vadd.f32 %v2367, %v2455
  %v2457 = vpop.f32.mrf.mxu0
  %v2458 = vadd.f32 %v2369, %v2457
  %2459 = vmatmul.bf16.gmra.mxu0 %v1477
  %v2460 = vpop.f32.mrf.mxu0
  %v2461 = vadd.f32 %v2372, %v2460
  %v2462 = vpop.f32.mrf.mxu0
  %v2463 = vadd.f32 %v2374, %v2462
  %2464 = vmatmul.bf16.gmra.mxu0 %v1485
  %v2465 = vpop.f32.mrf.mxu0
  %v2466 = vadd.f32 %v2377, %v2465
  %v2467 = vpop.f32.mrf.mxu0
  %v2468 = vadd.f32 %v2379, %v2467
  %2469 = vmatmul.bf16.gmra.mxu0 %v1493
  %v2470 = vpop.f32.mrf.mxu0
  %v2471 = vadd.f32 %v2382, %v2470
  %v2472 = vpop.f32.mrf.mxu0
  %v2473 = vadd.f32 %v2384, %v2472
  %2474 = vmatmul.bf16.gmra.mxu0 %v1501
  %v2475 = vpop.f32.mrf.mxu0
  %v2476 = vadd.f32 %v2387, %v2475
  %v2477 = vpop.f32.mrf.mxu0
  %v2478 = vadd.f32 %v2389, %v2477
  %2479 = vmatmul.bf16.gmra.mxu0 %v1509
  %v2480 = vpop.f32.mrf.mxu0
  %v2481 = vadd.f32 %v2392, %v2480
  %v2482 = vpop.f32.mrf.mxu0
  %v2483 = vadd.f32 %v2394, %v2482
  %2484 = vmatmul.bf16.gmra.mxu0 %v1517
  %v2485 = vpop.f32.mrf.mxu0
  %v2486 = vadd.f32 %v2397, %v2485
  %v2487 = vpop.f32.mrf.mxu0
  %v2488 = vadd.f32 %v2399, %v2487
  %2489 = vmatmul.bf16.gmra.mxu0 %v1525
  %v2490 = vpop.f32.mrf.mxu0
  %v2491 = vadd.f32 %v2402, %v2490
  %v2492 = vpop.f32.mrf.mxu0
  %v2493 = vadd.f32 %v2404, %v2492
  %2494 = vmatmul.bf16.gmra.mxu0 %v1533
  %v2495 = vpop.f32.mrf.mxu0
  %v2496 = vadd.f32 %v2407, %v2495
  %v2497 = vpop.f32.mrf.mxu0
  %v2498 = vadd.f32 %v2409, %v2497
  %2499 = vmatmul.bf16.gmra.mxu0 %v1541
  %v2500 = vpop.f32.mrf.mxu0
  %v2501 = vadd.f32 %v2412, %v2500
  %v2502 = vpop.f32.mrf.mxu0
  %v2503 = vadd.f32 %v2414, %v2502
  %2504 = vmatmul.bf16.gmra.mxu0 %v1549
  %v2505 = vpop.f32.mrf.mxu0
  %v2506 = vadd.f32 %v2417, %v2505
  %v2507 = vpop.f32.mrf.mxu0
  %v2508 = vadd.f32 %v2419, %v2507
  %2509 = vmatmul.bf16.gmra.mxu0 %v1557
  %v2510 = vpop.f32.mrf.mxu0
  %v2511 = vadd.f32 %v2422, %v2510
  %v2512 = vpop.f32.mrf.mxu0
  %v2513 = vadd.f32 %v2424, %v2512
  %2514 = vmatmul.bf16.gmra.mxu0 %v1565
  %v2515 = vpop.f32.mrf.mxu0
  %v2516 = vadd.f32 %v2427, %v2515
  %v2517 = vpop.f32.mrf.mxu0
  %v2518 = vadd.f32 %v2429, %v2517
  %2519 = vdwg.mxu0
  %2520 = vmatpush.bf16.msra.mxu0 %v1954
  %2521 = vmatpush.bf16.msra.mxu0 %v1953
  %2522 = vmatpush.bf16.msra.mxu0 %v1952
  %2523 = vmatpush.bf16.msra.mxu0 %v1951
  %2524 = vmatpush.bf16.msra.mxu0 %v1950
  %2525 = vmatpush.bf16.msra.mxu0 %v1949
  %2526 = vmatpush.bf16.msra.mxu0 %v1948
  %2527 = vmatpush.bf16.msra.mxu0 %v1947
  %2528 = vmatmul.bf16.gmra.mxu0 %v1446
  %v2529 = vpop.f32.mrf.mxu0
  %v2530 = vadd.f32 %v2441, %v2529
  %v2531 = vpop.f32.mrf.mxu0
  %v2532 = vadd.f32 %v2443, %v2531
  %2533 = vmatmul.bf16.gmra.mxu0 %v1454
  %v2534 = vpop.f32.mrf.mxu0
  %v2535 = vadd.f32 %v2446, %v2534
  %v2536 = vpop.f32.mrf.mxu0
  %v2537 = vadd.f32 %v2448, %v2536
  %2538 = vmatmul.bf16.gmra.mxu0 %v1462
  %v2539 = vpop.f32.mrf.mxu0
  %v2540 = vadd.f32 %v2451, %v2539
  %v2541 = vpop.f32.mrf.mxu0
  %v2542 = vadd.f32 %v2453, %v2541
  %2543 = vmatmul.bf16.gmra.mxu0 %v1470
  %v2544 = vpop.f32.mrf.mxu0
  %v2545 = vadd.f32 %v2456, %v2544
  %v2546 = vpop.f32.mrf.mxu0
  %v2547 = vadd.f32 %v2458, %v2546
  %2548 = vmatmul.bf16.gmra.mxu0 %v1478
  %v2549 = vpop.f32.mrf.mxu0
  %v2550 = vadd.f32 %v2461, %v2549
  %v2551 = vpop.f32.mrf.mxu0
  %v2552 = vadd.f32 %v2463, %v2551
  %2553 = vmatmul.bf16.gmra.mxu0 %v1486
  %v2554 = vpop.f32.mrf.mxu0
  %v2555 = vadd.f32 %v2466, %v2554
  %v2556 = vpop.f32.mrf.mxu0
  %v2557 = vadd.f32 %v2468, %v2556
  %2558 = vmatmul.bf16.gmra.mxu0 %v1494
  %v2559 = vpop.f32.mrf.mxu0
  %v2560 = vadd.f32 %v2471, %v2559
  %v2561 = vpop.f32.mrf.mxu0
  %v2562 = vadd.f32 %v2473, %v2561
  %2563 = vmatmul.bf16.gmra.mxu0 %v1502
  %v2564 = vpop.f32.mrf.mxu0
  %v2565 = vadd.f32 %v2476, %v2564
  %v2566 = vpop.f32.mrf.mxu0
  %v2567 = vadd.f32 %v2478, %v2566
  %2568 = vmatmul.bf16.gmra.mxu0 %v1510
  %v2569 = vpop.f32.mrf.mxu0
  %v2570 = vadd.f32 %v2481, %v2569
  %v2571 = vpop.f32.mrf.mxu0
  %v2572 = vadd.f32 %v2483, %v2571
  %2573 = vmatmul.bf16.gmra.mxu0 %v1518
  %v2574 = vpop.f32.mrf.mxu0
  %v2575 = vadd.f32 %v2486, %v2574
  %v2576 = vpop.f32.mrf.mxu0
  %v2577 = vadd.f32 %v2488, %v2576
  %2578 = vmatmul.bf16.gmra.mxu0 %v1526
  %v2579 = vpop.f32.mrf.mxu0
  %v2580 = vadd.f32 %v2491, %v2579
  %v2581 = vpop.f32.mrf.mxu0
  %v2582 = vadd.f32 %v2493, %v2581
  %2583 = vmatmul.bf16.gmra.mxu0 %v1534
  %v2584 = vpop.f32.mrf.mxu0
  %v2585 = vadd.f32 %v2496, %v2584
  %v2586 = vpop.f32.mrf.mxu0
  %v2587 = vadd.f32 %v2498, %v2586
  %2588 = vmatmul.bf16.gmra.mxu0 %v1542
  %v2589 = vpop.f32.mrf.mxu0
  %v2590 = vadd.f32 %v2501, %v2589
  %v2591 = vpop.f32.mrf.mxu0
  %v2592 = vadd.f32 %v2503, %v2591
  %2593 = vmatmul.bf16.gmra.mxu0 %v1550
  %v2594 = vpop.f32.mrf.mxu0
  %v2595 = vadd.f32 %v2506, %v2594
  %v2596 = vpop.f32.mrf.mxu0
  %v2597 = vadd.f32 %v2508, %v2596
  %2598 = vmatmul.bf16.gmra.mxu0 %v1558
  %v2599 = vpop.f32.mrf.mxu0
  %v2600 = vadd.f32 %v2511, %v2599
  %v2601 = vpop.f32.mrf.mxu0
  %v2602 = vadd.f32 %v2513, %v2601
  %2603 = vmatmul.bf16.gmra.mxu0 %v1566
  %v2604 = vpop.f32.mrf.mxu0
  %v2605 = vadd.f32 %v2516, %v2604
  %v2606 = vpop.f32.mrf.mxu0
  %v2607 = vadd.f32 %v2518, %v2606
  %2608 = vdwg.mxu0
  %2609 = vmatpush.bf16.msra.mxu0 %v1962
  %2610 = vmatpush.bf16.msra.mxu0 %v1961
  %2611 = vmatpush.bf16.msra.mxu0 %v1960
  %2612 = vmatpush.bf16.msra.mxu0 %v1959
  %2613 = vmatpush.bf16.msra.mxu0 %v1958
  %2614 = vmatpush.bf16.msra.mxu0 %v1957
  %2615 = vmatpush.bf16.msra.mxu0 %v1956
  %2616 = vmatpush.bf16.msra.mxu0 %v1955
  %2617 = vmatmul.bf16.gmra.mxu0 %v1447
  %v2618 = vpop.f32.mrf.mxu0
  %v2619 = vadd.f32 %v2530, %v2618
  %v2620 = vpop.f32.mrf.mxu0
  %v2621 = vadd.f32 %v2532, %v2620
  %2622 = vmatmul.bf16.gmra.mxu0 %v1455
  %v2623 = vpop.f32.mrf.mxu0
  %v2624 = vadd.f32 %v2535, %v2623
  %v2625 = vpop.f32.mrf.mxu0
  %v2626 = vadd.f32 %v2537, %v2625
  %2627 = vmatmul.bf16.gmra.mxu0 %v1463
  %v2628 = vpop.f32.mrf.mxu0
  %v2629 = vadd.f32 %v2540, %v2628
  %v2630 = vpop.f32.mrf.mxu0
  %v2631 = vadd.f32 %v2542, %v2630
  %2632 = vmatmul.bf16.gmra.mxu0 %v1471
  %v2633 = vpop.f32.mrf.mxu0
  %v2634 = vadd.f32 %v2545, %v2633
  %v2635 = vpop.f32.mrf.mxu0
  %v2636 = vadd.f32 %v2547, %v2635
  %2637 = vmatmul.bf16.gmra.mxu0 %v1479
  %v2638 = vpop.f32.mrf.mxu0
  %v2639 = vadd.f32 %v2550, %v2638
  %v2640 = vpop.f32.mrf.mxu0
  %v2641 = vadd.f32 %v2552, %v2640
  %2642 = vmatmul.bf16.gmra.mxu0 %v1487
  %v2643 = vpop.f32.mrf.mxu0
  %v2644 = vadd.f32 %v2555, %v2643
  %v2645 = vpop.f32.mrf.mxu0
  %v2646 = vadd.f32 %v2557, %v2645
  %2647 = vmatmul.bf16.gmra.mxu0 %v1495
  %v2648 = vpop.f32.mrf.mxu0
  %v2649 = vadd.f32 %v2560, %v2648
  %v2650 = vpop.f32.mrf.mxu0
  %v2651 = vadd.f32 %v2562, %v2650
  %2652 = vmatmul.bf16.gmra.mxu0 %v1503
  %v2653 = vpop.f32.mrf.mxu0
  %v2654 = vadd.f32 %v2565, %v2653
  %v2655 = vpop.f32.mrf.mxu0
  %v2656 = vadd.f32 %v2567, %v2655
  %2657 = vmatmul.bf16.gmra.mxu0 %v1511
  %v2658 = vpop.f32.mrf.mxu0
  %v2659 = vadd.f32 %v2570, %v2658
  %v2660 = vpop.f32.mrf.mxu0
  %v2661 = vadd.f32 %v2572, %v2660
  %2662 = vmatmul.bf16.gmra.mxu0 %v1519
  %v2663 = vpop.f32.mrf.mxu0
  %v2664 = vadd.f32 %v2575, %v2663
  %v2665 = vpop.f32.mrf.mxu0
  %v2666 = vadd.f32 %v2577, %v2665
  %2667 = vmatmul.bf16.gmra.mxu0 %v1527
  %v2668 = vpop.f32.mrf.mxu0
  %v2669 = vadd.f32 %v2580, %v2668
  %v2670 = vpop.f32.mrf.mxu0
  %v2671 = vadd.f32 %v2582, %v2670
  %2672 = vmatmul.bf16.gmra.mxu0 %v1535
  %v2673 = vpop.f32.mrf.mxu0
  %v2674 = vadd.f32 %v2585, %v2673
  %v2675 = vpop.f32.mrf.mxu0
  %v2676 = vadd.f32 %v2587, %v2675
  %2677 = vmatmul.bf16.gmra.mxu0 %v1543
  %v2678 = vpop.f32.mrf.mxu0
  %v2679 = vadd.f32 %v2590, %v2678
  %v2680 = vpop.f32.mrf.mxu0
  %v2681 = vadd.f32 %v2592, %v2680
  %2682 = vmatmul.bf16.gmra.mxu0 %v1551
  %v2683 = vpop.f32.mrf.mxu0
  %v2684 = vadd.f32 %v2595, %v2683
  %v2685 = vpop.f32.mrf.mxu0
  %v2686 = vadd.f32 %v2597, %v2685
  %2687 = vmatmul.bf16.gmra.mxu0 %v1559
  %v2688 = vpop.f32.mrf.mxu0
  %v2689 = vadd.f32 %v2600, %v2688
  %v2690 = vpop.f32.mrf.mxu0
  %v2691 = vadd.f32 %v2602, %v2690
  %2692 = vmatmul.bf16.gmra.mxu0 %v1567
  %v2693 = vpop.f32.mrf.mxu0
  %v2694 = vadd.f32 %v2605, %v2693
  %v2695 = vpop.f32.mrf.mxu0
  %v2696 = vadd.f32 %v2607, %v2695
  %2697 = vdwg.mxu0
  %2698 = vmatpush.bf16.msra.mxu0 0
  %2699 = vmatpush.bf16.msra.mxu0 0
  %2700 = vmatpush.bf16.msra.mxu0 0
  %2701 = vmatpush.bf16.msra.mxu0 0
  %2702 = vmatpush.bf16.msra.mxu0 0
  %2703 = vmatpush.bf16.msra.mxu0 0
  %2704 = vmatpush.bf16.msra.mxu0 0
  %2705 = vmatpush.bf16.msra.mxu0 %v2073
  %2706 = vmatmul.bf16.gmra.mxu0 %v2022
  %v2707 = vpop.f32.mrf.mxu0
  %v2708 = vadd.f32 %v2619, %v2707
  %v2709 = vpop.f32.mrf.mxu0
  %v2710 = vadd.f32 %v2621, %v2709
  %2711 = vmatmul.bf16.gmra.mxu0 %v2025
  %v2712 = vpop.f32.mrf.mxu0
  %v2713 = vadd.f32 %v2624, %v2712
  %v2714 = vpop.f32.mrf.mxu0
  %v2715 = vadd.f32 %v2626, %v2714
  %2716 = vmatmul.bf16.gmra.mxu0 %v2028
  %v2717 = vpop.f32.mrf.mxu0
  %v2718 = vadd.f32 %v2629, %v2717
  %v2719 = vpop.f32.mrf.mxu0
  %v2720 = vadd.f32 %v2631, %v2719
  %2721 = vmatmul.bf16.gmra.mxu0 %v2031
  %v2722 = vpop.f32.mrf.mxu0
  %v2723 = vadd.f32 %v2634, %v2722
  %v2724 = vpop.f32.mrf.mxu0
  %v2725 = vadd.f32 %v2636, %v2724
  %2726 = vmatmul.bf16.gmra.mxu0 %v2034
  %v2727 = vpop.f32.mrf.mxu0
  %v2728 = vadd.f32 %v2639, %v2727
  %v2729 = vpop.f32.mrf.mxu0
  %v2730 = vadd.f32 %v2641, %v2729
  %2731 = vmatmul.bf16.gmra.mxu0 %v2037
  %v2732 = vpop.f32.mrf.mxu0
  %v2733 = vadd.f32 %v2644, %v2732
  %v2734 = vpop.f32.mrf.mxu0
  %v2735 = vadd.f32 %v2646, %v2734
  %2736 = vmatmul.bf16.gmra.mxu0 %v2040
  %v2737 = vpop.f32.mrf.mxu0
  %v2738 = vadd.f32 %v2649, %v2737
  %v2739 = vpop.f32.mrf.mxu0
  %v2740 = vadd.f32 %v2651, %v2739
  %2741 = vmatmul.bf16.gmra.mxu0 %v2043
  %v2742 = vpop.f32.mrf.mxu0
  %v2743 = vadd.f32 %v2654, %v2742
  %v2744 = vpop.f32.mrf.mxu0
  %v2745 = vadd.f32 %v2656, %v2744
  %2746 = vmatmul.bf16.gmra.mxu0 %v2046
  %v2747 = vpop.f32.mrf.mxu0
  %v2748 = vadd.f32 %v2659, %v2747
  %v2749 = vpop.f32.mrf.mxu0
  %v2750 = vadd.f32 %v2661, %v2749
  %2751 = vmatmul.bf16.gmra.mxu0 %v2049
  %v2752 = vpop.f32.mrf.mxu0
  %v2753 = vadd.f32 %v2664, %v2752
  %v2754 = vpop.f32.mrf.mxu0
  %v2755 = vadd.f32 %v2666, %v2754
  %2756 = vmatmul.bf16.gmra.mxu0 %v2052
  %v2757 = vpop.f32.mrf.mxu0
  %v2758 = vadd.f32 %v2669, %v2757
  %v2759 = vpop.f32.mrf.mxu0
  %v2760 = vadd.f32 %v2671, %v2759
  %2761 = vmatmul.bf16.gmra.mxu0 %v2055
  %v2762 = vpop.f32.mrf.mxu0
  %v2763 = vadd.f32 %v2674, %v2762
  %v2764 = vpop.f32.mrf.mxu0
  %v2765 = vadd.f32 %v2676, %v2764
  %2766 = vmatmul.bf16.gmra.mxu0 %v2058
  %v2767 = vpop.f32.mrf.mxu0
  %v2768 = vadd.f32 %v2679, %v2767
  %v2769 = vpop.f32.mrf.mxu0
  %v2770 = vadd.f32 %v2681, %v2769
  %2771 = vmatmul.bf16.gmra.mxu0 %v2061
  %v2772 = vpop.f32.mrf.mxu0
  %v2773 = vadd.f32 %v2684, %v2772
  %v2774 = vpop.f32.mrf.mxu0
  %v2775 = vadd.f32 %v2686, %v2774
  %2776 = vmatmul.bf16.gmra.mxu0 %v2064
  %v2777 = vpop.f32.mrf.mxu0
  %v2778 = vadd.f32 %v2689, %v2777
  %v2779 = vpop.f32.mrf.mxu0
  %v2780 = vadd.f32 %v2691, %v2779
  %2781 = vmatmul.bf16.gmra.mxu0 %v2067
  %v2782 = vpop.f32.mrf.mxu0
  %v2783 = vadd.f32 %v2694, %v2782
  %v2784 = vpop.f32.mrf.mxu0
  %v2785 = vadd.f32 %v2696, %v2784
  %2786 = vdwg.mxu0
  %2787 = vadd.xlane.f32.xlu0 %v2708
  %v2788 = vpop.xlane.xlu0 %2787
  %2789 = vadd.xlane.f32.xlu0 %v2710
  %v2790 = vpop.xlane.xlu0 %2789
  %2791 = vadd.xlane.f32.xlu0 %v2713
  %v2792 = vpop.xlane.xlu0 %2791
  %2793 = vadd.xlane.f32.xlu0 %v2715
  %v2794 = vpop.xlane.xlu0 %2793
  %2795 = vadd.xlane.f32.xlu0 %v2718
  %v2796 = vpop.xlane.xlu0 %2795
  %2797 = vadd.xlane.f32.xlu0 %v2720
  %v2798 = vpop.xlane.xlu0 %2797
  %2799 = vadd.xlane.f32.xlu0 %v2723
  %v2800 = vpop.xlane.xlu0 %2799
  %2801 = vadd.xlane.f32.xlu0 %v2725
  %v2802 = vpop.xlane.xlu0 %2801
  %2803 = vadd.xlane.f32.xlu0 %v2728
  %v2804 = vpop.xlane.xlu0 %2803
  %2805 = vadd.xlane.f32.xlu0 %v2730
  %v2806 = vpop.xlane.xlu0 %2805
  %2807 = vadd.xlane.f32.xlu0 %v2733
  %v2808 = vpop.xlane.xlu0 %2807
  %2809 = vadd.xlane.f32.xlu0 %v2735
  %v2810 = vpop.xlane.xlu0 %2809
  %2811 = vadd.xlane.f32.xlu0 %v2738
  %v2812 = vpop.xlane.xlu0 %2811
  %2813 = vadd.xlane.f32.xlu0 %v2740
  %v2814 = vpop.xlane.xlu0 %2813
  %2815 = vadd.xlane.f32.xlu0 %v2743
  %v2816 = vpop.xlane.xlu0 %2815
  %2817 = vadd.xlane.f32.xlu0 %v2745
  %v2818 = vpop.xlane.xlu0 %2817
  %2819 = vadd.xlane.f32.xlu0 %v2748
  %v2820 = vpop.xlane.xlu0 %2819
  %2821 = vadd.xlane.f32.xlu0 %v2750
  %v2822 = vpop.xlane.xlu0 %2821
  %2823 = vadd.xlane.f32.xlu0 %v2753
  %v2824 = vpop.xlane.xlu0 %2823
  %2825 = vadd.xlane.f32.xlu0 %v2755
  %v2826 = vpop.xlane.xlu0 %2825
  %2827 = vadd.xlane.f32.xlu0 %v2758
  %v2828 = vpop.xlane.xlu0 %2827
  %2829 = vadd.xlane.f32.xlu0 %v2760
  %v2830 = vpop.xlane.xlu0 %2829
  %2831 = vadd.xlane.f32.xlu0 %v2763
  %v2832 = vpop.xlane.xlu0 %2831
  %2833 = vadd.xlane.f32.xlu0 %v2765
  %v2834 = vpop.xlane.xlu0 %2833
  %2835 = vadd.xlane.f32.xlu0 %v2768
  %v2836 = vpop.xlane.xlu0 %2835
  %2837 = vadd.xlane.f32.xlu0 %v2770
  %v2838 = vpop.xlane.xlu0 %2837
  %2839 = vadd.xlane.f32.xlu0 %v2773
  %v2840 = vpop.xlane.xlu0 %2839
  %2841 = vadd.xlane.f32.xlu0 %v2775
  %v2842 = vpop.xlane.xlu0 %2841
  %2843 = vadd.xlane.f32.xlu0 %v2778
  %v2844 = vpop.xlane.xlu0 %2843
  %2845 = vadd.xlane.f32.xlu0 %v2780
  %v2846 = vpop.xlane.xlu0 %2845
  %2847 = vadd.xlane.f32.xlu0 %v2783
  %v2848 = vpop.xlane.xlu0 %2847
  %2849 = vadd.xlane.f32.xlu0 %v2785
  %v2850 = vpop.xlane.xlu0 %2849
  %v2851 = vmul.f32 %v2708, %v2708
  %v2852 = vmul.f32 %v2710, %v2710
  %v2853 = vmul.f32 %v2713, %v2713
  %v2854 = vmul.f32 %v2715, %v2715
  %v2855 = vmul.f32 %v2718, %v2718
  %v2856 = vmul.f32 %v2720, %v2720
  %v2857 = vmul.f32 %v2723, %v2723
  %v2858 = vmul.f32 %v2725, %v2725
  %v2859 = vmul.f32 %v2728, %v2728
  %v2860 = vmul.f32 %v2730, %v2730
  %v2861 = vmul.f32 %v2733, %v2733
  %v2862 = vmul.f32 %v2735, %v2735
  %v2863 = vmul.f32 %v2738, %v2738
  %v2864 = vmul.f32 %v2740, %v2740
  %v2865 = vmul.f32 %v2743, %v2743
  %v2866 = vmul.f32 %v2745, %v2745
  %v2867 = vmul.f32 %v2748, %v2748
  %v2868 = vmul.f32 %v2750, %v2750
  %v2869 = vmul.f32 %v2753, %v2753
  %v2870 = vmul.f32 %v2755, %v2755
  %v2871 = vmul.f32 %v2758, %v2758
  %v2872 = vmul.f32 %v2760, %v2760
  %v2873 = vmul.f32 %v2763, %v2763
  %v2874 = vmul.f32 %v2765, %v2765
  %v2875 = vmul.f32 %v2768, %v2768
  %v2876 = vmul.f32 %v2770, %v2770
  %v2877 = vmul.f32 %v2773, %v2773
  %v2878 = vmul.f32 %v2775, %v2775
  %v2879 = vmul.f32 %v2778, %v2778
  %v2880 = vmul.f32 %v2780, %v2780
  %v2881 = vmul.f32 %v2783, %v2783
  %v2882 = vmul.f32 %v2785, %v2785
  %2883 = vadd.xlane.f32.xlu0 %v2851
  %v2884 = vpop.xlane.xlu0 %2883
  %2885 = vadd.xlane.f32.xlu0 %v2852
  %v2886 = vpop.xlane.xlu0 %2885
  %2887 = vadd.xlane.f32.xlu0 %v2853
  %v2888 = vpop.xlane.xlu0 %2887
  %2889 = vadd.xlane.f32.xlu0 %v2854
  %v2890 = vpop.xlane.xlu0 %2889
  %2891 = vadd.xlane.f32.xlu0 %v2855
  %v2892 = vpop.xlane.xlu0 %2891
  %2893 = vadd.xlane.f32.xlu0 %v2856
  %v2894 = vpop.xlane.xlu0 %2893
  %2895 = vadd.xlane.f32.xlu0 %v2857
  %v2896 = vpop.xlane.xlu0 %2895
  %2897 = vadd.xlane.f32.xlu0 %v2858
  %v2898 = vpop.xlane.xlu0 %2897
  %2899 = vadd.xlane.f32.xlu0 %v2859
  %v2900 = vpop.xlane.xlu0 %2899
  %2901 = vadd.xlane.f32.xlu0 %v2860
  %v2902 = vpop.xlane.xlu0 %2901
  %2903 = vadd.xlane.f32.xlu0 %v2861
  %v2904 = vpop.xlane.xlu0 %2903
  %2905 = vadd.xlane.f32.xlu0 %v2862
  %v2906 = vpop.xlane.xlu0 %2905
  %2907 = vadd.xlane.f32.xlu0 %v2863
  %v2908 = vpop.xlane.xlu0 %2907
  %2909 = vadd.xlane.f32.xlu0 %v2864
  %v2910 = vpop.xlane.xlu0 %2909
  %2911 = vadd.xlane.f32.xlu0 %v2865
  %v2912 = vpop.xlane.xlu0 %2911
  %2913 = vadd.xlane.f32.xlu0 %v2866
  %v2914 = vpop.xlane.xlu0 %2913
  %2915 = vadd.xlane.f32.xlu0 %v2867
  %v2916 = vpop.xlane.xlu0 %2915
  %2917 = vadd.xlane.f32.xlu0 %v2868
  %v2918 = vpop.xlane.xlu0 %2917
  %2919 = vadd.xlane.f32.xlu0 %v2869
  %v2920 = vpop.xlane.xlu0 %2919
  %2921 = vadd.xlane.f32.xlu0 %v2870
  %v2922 = vpop.xlane.xlu0 %2921
  %2923 = vadd.xlane.f32.xlu0 %v2871
  %v2924 = vpop.xlane.xlu0 %2923
  %2925 = vadd.xlane.f32.xlu0 %v2872
  %v2926 = vpop.xlane.xlu0 %2925
  %2927 = vadd.xlane.f32.xlu0 %v2873
  %v2928 = vpop.xlane.xlu0 %2927
  %2929 = vadd.xlane.f32.xlu0 %v2874
  %v2930 = vpop.xlane.xlu0 %2929
  %2931 = vadd.xlane.f32.xlu0 %v2875
  %v2932 = vpop.xlane.xlu0 %2931
  %2933 = vadd.xlane.f32.xlu0 %v2876
  %v2934 = vpop.xlane.xlu0 %2933
  %2935 = vadd.xlane.f32.xlu0 %v2877
  %v2936 = vpop.xlane.xlu0 %2935
  %2937 = vadd.xlane.f32.xlu0 %v2878
  %v2938 = vpop.xlane.xlu0 %2937
  %2939 = vadd.xlane.f32.xlu0 %v2879
  %v2940 = vpop.xlane.xlu0 %2939
  %2941 = vadd.xlane.f32.xlu0 %v2880
  %v2942 = vpop.xlane.xlu0 %2941
  %2943 = vadd.xlane.f32.xlu0 %v2881
  %v2944 = vpop.xlane.xlu0 %2943
  %2945 = vadd.xlane.f32.xlu0 %v2882
  %v2946 = vpop.xlane.xlu0 %2945
  %v2947 = vmul.f32 %v2788, 0.0078125
  %v2948 = vmul.f32 %v2790, 0.0078125
  %v2949 = vmul.f32 %v2792, 0.0078125
  %v2950 = vmul.f32 %v2794, 0.0078125
  %v2951 = vmul.f32 %v2796, 0.0078125
  %v2952 = vmul.f32 %v2798, 0.0078125
  %v2953 = vmul.f32 %v2800, 0.0078125
  %v2954 = vmul.f32 %v2802, 0.0078125
  %v2955 = vmul.f32 %v2804, 0.0078125
  %v2956 = vmul.f32 %v2806, 0.0078125
  %v2957 = vmul.f32 %v2808, 0.0078125
  %v2958 = vmul.f32 %v2810, 0.0078125
  %v2959 = vmul.f32 %v2812, 0.0078125
  %v2960 = vmul.f32 %v2814, 0.0078125
  %v2961 = vmul.f32 %v2816, 0.0078125
  %v2962 = vmul.f32 %v2818, 0.0078125
  %v2963 = vmul.f32 %v2820, 0.0078125
  %v2964 = vmul.f32 %v2822, 0.0078125
  %v2965 = vmul.f32 %v2824, 0.0078125
  %v2966 = vmul.f32 %v2826, 0.0078125
  %v2967 = vmul.f32 %v2828, 0.0078125
  %v2968 = vmul.f32 %v2830, 0.0078125
  %v2969 = vmul.f32 %v2832, 0.0078125
  %v2970 = vmul.f32 %v2834, 0.0078125
  %v2971 = vmul.f32 %v2836, 0.0078125
  %v2972 = vmul.f32 %v2838, 0.0078125
  %v2973 = vmul.f32 %v2840, 0.0078125
  %v2974 = vmul.f32 %v2842, 0.0078125
  %v2975 = vmul.f32 %v2844, 0.0078125
  %v2976 = vmul.f32 %v2846, 0.0078125
  %v2977 = vmul.f32 %v2848, 0.0078125
  %v2978 = vmul.f32 %v2850, 0.0078125
  %v2979 = vmul.f32 %v2884, 0.0078125
  %v2980 = vmul.f32 %v2886, 0.0078125
  %v2981 = vmul.f32 %v2888, 0.0078125
  %v2982 = vmul.f32 %v2890, 0.0078125
  %v2983 = vmul.f32 %v2892, 0.0078125
  %v2984 = vmul.f32 %v2894, 0.0078125
  %v2985 = vmul.f32 %v2896, 0.0078125
  %v2986 = vmul.f32 %v2898, 0.0078125
  %v2987 = vmul.f32 %v2900, 0.0078125
  %v2988 = vmul.f32 %v2902, 0.0078125
  %v2989 = vmul.f32 %v2904, 0.0078125
  %v2990 = vmul.f32 %v2906, 0.0078125
  %v2991 = vmul.f32 %v2908, 0.0078125
  %v2992 = vmul.f32 %v2910, 0.0078125
  %v2993 = vmul.f32 %v2912, 0.0078125
  %v2994 = vmul.f32 %v2914, 0.0078125
  %v2995 = vmul.f32 %v2916, 0.0078125
  %v2996 = vmul.f32 %v2918, 0.0078125
  %v2997 = vmul.f32 %v2920, 0.0078125
  %v2998 = vmul.f32 %v2922, 0.0078125
  %v2999 = vmul.f32 %v2924, 0.0078125
  %v3000 = vmul.f32 %v2926, 0.0078125
  %v3001 = vmul.f32 %v2928, 0.0078125
  %v3002 = vmul.f32 %v2930, 0.0078125
  %v3003 = vmul.f32 %v2932, 0.0078125
  %v3004 = vmul.f32 %v2934, 0.0078125
  %v3005 = vmul.f32 %v2936, 0.0078125
  %v3006 = vmul.f32 %v2938, 0.0078125
  %v3007 = vmul.f32 %v2940, 0.0078125
  %v3008 = vmul.f32 %v2942, 0.0078125
  %v3009 = vmul.f32 %v2944, 0.0078125
  %v3010 = vmul.f32 %v2946, 0.0078125
  %v3011 = vmul.f32 %v2947, %v2947
  %v3012 = vmul.f32 %v2948, %v2948
  %v3013 = vmul.f32 %v2949, %v2949
  %v3014 = vmul.f32 %v2950, %v2950
  %v3015 = vmul.f32 %v2951, %v2951
  %v3016 = vmul.f32 %v2952, %v2952
  %v3017 = vmul.f32 %v2953, %v2953
  %v3018 = vmul.f32 %v2954, %v2954
  %v3019 = vmul.f32 %v2955, %v2955
  %v3020 = vmul.f32 %v2956, %v2956
  %v3021 = vmul.f32 %v2957, %v2957
  %v3022 = vmul.f32 %v2958, %v2958
  %v3023 = vmul.f32 %v2959, %v2959
  %v3024 = vmul.f32 %v2960, %v2960
  %v3025 = vmul.f32 %v2961, %v2961
  %v3026 = vmul.f32 %v2962, %v2962
  %v3027 = vmul.f32 %v2963, %v2963
  %v3028 = vmul.f32 %v2964, %v2964
  %v3029 = vmul.f32 %v2965, %v2965
  %v3030 = vmul.f32 %v2966, %v2966
  %v3031 = vmul.f32 %v2967, %v2967
  %v3032 = vmul.f32 %v2968, %v2968
  %v3033 = vmul.f32 %v2969, %v2969
  %v3034 = vmul.f32 %v2970, %v2970
  %v3035 = vmul.f32 %v2971, %v2971
  %v3036 = vmul.f32 %v2972, %v2972
  %v3037 = vmul.f32 %v2973, %v2973
  %v3038 = vmul.f32 %v2974, %v2974
  %v3039 = vmul.f32 %v2975, %v2975
  %v3040 = vmul.f32 %v2976, %v2976
  %v3041 = vmul.f32 %v2977, %v2977
  %v3042 = vmul.f32 %v2978, %v2978
  %v3043 = vsub.f32 %v2979, %v3011
  %v3044 = vsub.f32 %v2980, %v3012
  %v3045 = vsub.f32 %v2981, %v3013
  %v3046 = vsub.f32 %v2982, %v3014
  %v3047 = vsub.f32 %v2983, %v3015
  %v3048 = vsub.f32 %v2984, %v3016
  %v3049 = vsub.f32 %v2985, %v3017
  %v3050 = vsub.f32 %v2986, %v3018
  %v3051 = vsub.f32 %v2987, %v3019
  %v3052 = vsub.f32 %v2988, %v3020
  %v3053 = vsub.f32 %v2989, %v3021
  %v3054 = vsub.f32 %v2990, %v3022
  %v3055 = vsub.f32 %v2991, %v3023
  %v3056 = vsub.f32 %v2992, %v3024
  %v3057 = vsub.f32 %v2993, %v3025
  %v3058 = vsub.f32 %v2994, %v3026
  %v3059 = vsub.f32 %v2995, %v3027
  %v3060 = vsub.f32 %v2996, %v3028
  %v3061 = vsub.f32 %v2997, %v3029
  %v3062 = vsub.f32 %v2998, %v3030
  %v3063 = vsub.f32 %v2999, %v3031
  %v3064 = vsub.f32 %v3000, %v3032
  %v3065 = vsub.f32 %v3001, %v3033
  %v3066 = vsub.f32 %v3002, %v3034
  %v3067 = vsub.f32 %v3003, %v3035
  %v3068 = vsub.f32 %v3004, %v3036
  %v3069 = vsub.f32 %v3005, %v3037
  %v3070 = vsub.f32 %v3006, %v3038
  %v3071 = vsub.f32 %v3007, %v3039
  %v3072 = vsub.f32 %v3008, %v3040
  %v3073 = vsub.f32 %v3009, %v3041
  %v3074 = vsub.f32 %v3010, %v3042
  %v3075 = vsub.f32 %v2708, %v2947
  %v3076 = vsub.f32 %v2710, %v2948
  %v3077 = vsub.f32 %v2713, %v2949
  %v3078 = vsub.f32 %v2715, %v2950
  %v3079 = vsub.f32 %v2718, %v2951
  %v3080 = vsub.f32 %v2720, %v2952
  %v3081 = vsub.f32 %v2723, %v2953
  %v3082 = vsub.f32 %v2725, %v2954
  %v3083 = vsub.f32 %v2728, %v2955
  %v3084 = vsub.f32 %v2730, %v2956
  %v3085 = vsub.f32 %v2733, %v2957
  %v3086 = vsub.f32 %v2735, %v2958
  %v3087 = vsub.f32 %v2738, %v2959
  %v3088 = vsub.f32 %v2740, %v2960
  %v3089 = vsub.f32 %v2743, %v2961
  %v3090 = vsub.f32 %v2745, %v2962
  %v3091 = vsub.f32 %v2748, %v2963
  %v3092 = vsub.f32 %v2750, %v2964
  %v3093 = vsub.f32 %v2753, %v2965
  %v3094 = vsub.f32 %v2755, %v2966
  %v3095 = vsub.f32 %v2758, %v2967
  %v3096 = vsub.f32 %v2760, %v2968
  %v3097 = vsub.f32 %v2763, %v2969
  %v3098 = vsub.f32 %v2765, %v2970
  %v3099 = vsub.f32 %v2768, %v2971
  %v3100 = vsub.f32 %v2770, %v2972
  %v3101 = vsub.f32 %v2773, %v2973
  %v3102 = vsub.f32 %v2775, %v2974
  %v3103 = vsub.f32 %v2778, %v2975
  %v3104 = vsub.f32 %v2780, %v2976
  %v3105 = vsub.f32 %v2783, %v2977
  %v3106 = vsub.f32 %v2785, %v2978
  %v3107 = vadd.f32 %v3043, 1e-05
  %v3108 = vadd.f32 %v3044, 1e-05
  %v3109 = vadd.f32 %v3045, 1e-05
  %v3110 = vadd.f32 %v3046, 1e-05
  %v3111 = vadd.f32 %v3047, 1e-05
  %v3112 = vadd.f32 %v3048, 1e-05
  %v3113 = vadd.f32 %v3049, 1e-05
  %v3114 = vadd.f32 %v3050, 1e-05
  %v3115 = vadd.f32 %v3051, 1e-05
  %v3116 = vadd.f32 %v3052, 1e-05
  %v3117 = vadd.f32 %v3053, 1e-05
  %v3118 = vadd.f32 %v3054, 1e-05
  %v3119 = vadd.f32 %v3055, 1e-05
  %v3120 = vadd.f32 %v3056, 1e-05
  %v3121 = vadd.f32 %v3057, 1e-05
  %v3122 = vadd.f32 %v3058, 1e-05
  %v3123 = vadd.f32 %v3059, 1e-05
  %v3124 = vadd.f32 %v3060, 1e-05
  %v3125 = vadd.f32 %v3061, 1e-05
  %v3126 = vadd.f32 %v3062, 1e-05
  %v3127 = vadd.f32 %v3063, 1e-05
  %v3128 = vadd.f32 %v3064, 1e-05
  %v3129 = vadd.f32 %v3065, 1e-05
  %v3130 = vadd.f32 %v3066, 1e-05
  %v3131 = vadd.f32 %v3067, 1e-05
  %v3132 = vadd.f32 %v3068, 1e-05
  %v3133 = vadd.f32 %v3069, 1e-05
  %v3134 = vadd.f32 %v3070, 1e-05
  %v3135 = vadd.f32 %v3071, 1e-05
  %v3136 = vadd.f32 %v3072, 1e-05
  %v3137 = vadd.f32 %v3073, 1e-05
  %v3138 = vadd.f32 %v3074, 1e-05
  %v3139 = vrsqrt.pop %v3107
  %v3140 = vmul.f32 %v3139, %v3107
  %v3141 = vmul.f32 %v3140, %v3139
  %v3142 = vmul.f32 0.5, %v3141
  %v3143 = vsub.f32 1.5, %v3142
  %v3144 = vmul.f32 %v3139, %v3143
  %vm3145 = vweird.f32 %v3107
  %vm3146 = vweird.f32 %v3139
  %vm3147 = vmor %vm3145, %vm3146
  %v3148 = vsel %vm3147, %v3139, %v3144
  %v3149 = vrsqrt.pop %v3108
  %v3150 = vmul.f32 %v3149, %v3108
  %v3151 = vmul.f32 %v3150, %v3149
  %v3152 = vmul.f32 0.5, %v3151
  %v3153 = vsub.f32 1.5, %v3152
  %v3154 = vmul.f32 %v3149, %v3153
  %vm3155 = vweird.f32 %v3108
  %vm3156 = vweird.f32 %v3149
  %vm3157 = vmor %vm3155, %vm3156
  %v3158 = vsel %vm3157, %v3149, %v3154
  %v3159 = vrsqrt.pop %v3109
  %v3160 = vmul.f32 %v3159, %v3109
  %v3161 = vmul.f32 %v3160, %v3159
  %v3162 = vmul.f32 0.5, %v3161
  %v3163 = vsub.f32 1.5, %v3162
  %v3164 = vmul.f32 %v3159, %v3163
  %vm3165 = vweird.f32 %v3109
  %vm3166 = vweird.f32 %v3159
  %vm3167 = vmor %vm3165, %vm3166
  %v3168 = vsel %vm3167, %v3159, %v3164
  %v3169 = vrsqrt.pop %v3110
  %v3170 = vmul.f32 %v3169, %v3110
  %v3171 = vmul.f32 %v3170, %v3169
  %v3172 = vmul.f32 0.5, %v3171
  %v3173 = vsub.f32 1.5, %v3172
  %v3174 = vmul.f32 %v3169, %v3173
  %vm3175 = vweird.f32 %v3110
  %vm3176 = vweird.f32 %v3169
  %vm3177 = vmor %vm3175, %vm3176
  %v3178 = vsel %vm3177, %v3169, %v3174
  %v3179 = vrsqrt.pop %v3111
  %v3180 = vmul.f32 %v3179, %v3111
  %v3181 = vmul.f32 %v3180, %v3179
  %v3182 = vmul.f32 0.5, %v3181
  %v3183 = vsub.f32 1.5, %v3182
  %v3184 = vmul.f32 %v3179, %v3183
  %vm3185 = vweird.f32 %v3111
  %vm3186 = vweird.f32 %v3179
  %vm3187 = vmor %vm3185, %vm3186
  %v3188 = vsel %vm3187, %v3179, %v3184
  %v3189 = vrsqrt.pop %v3112
  %v3190 = vmul.f32 %v3189, %v3112
  %v3191 = vmul.f32 %v3190, %v3189
  %v3192 = vmul.f32 0.5, %v3191
  %v3193 = vsub.f32 1.5, %v3192
  %v3194 = vmul.f32 %v3189, %v3193
  %vm3195 = vweird.f32 %v3112
  %vm3196 = vweird.f32 %v3189
  %vm3197 = vmor %vm3195, %vm3196
  %v3198 = vsel %vm3197, %v3189, %v3194
  %v3199 = vrsqrt.pop %v3113
  %v3200 = vmul.f32 %v3199, %v3113
  %v3201 = vmul.f32 %v3200, %v3199
  %v3202 = vmul.f32 0.5, %v3201
  %v3203 = vsub.f32 1.5, %v3202
  %v3204 = vmul.f32 %v3199, %v3203
  %vm3205 = vweird.f32 %v3113
  %vm3206 = vweird.f32 %v3199
  %vm3207 = vmor %vm3205, %vm3206
  %v3208 = vsel %vm3207, %v3199, %v3204
  %v3209 = vrsqrt.pop %v3114
  %v3210 = vmul.f32 %v3209, %v3114
  %v3211 = vmul.f32 %v3210, %v3209
  %v3212 = vmul.f32 0.5, %v3211
  %v3213 = vsub.f32 1.5, %v3212
  %v3214 = vmul.f32 %v3209, %v3213
  %vm3215 = vweird.f32 %v3114
  %vm3216 = vweird.f32 %v3209
  %vm3217 = vmor %vm3215, %vm3216
  %v3218 = vsel %vm3217, %v3209, %v3214
  %v3219 = vrsqrt.pop %v3115
  %v3220 = vmul.f32 %v3219, %v3115
  %v3221 = vmul.f32 %v3220, %v3219
  %v3222 = vmul.f32 0.5, %v3221
  %v3223 = vsub.f32 1.5, %v3222
  %v3224 = vmul.f32 %v3219, %v3223
  %vm3225 = vweird.f32 %v3115
  %vm3226 = vweird.f32 %v3219
  %vm3227 = vmor %vm3225, %vm3226
  %v3228 = vsel %vm3227, %v3219, %v3224
  %v3229 = vrsqrt.pop %v3116
  %v3230 = vmul.f32 %v3229, %v3116
  %v3231 = vmul.f32 %v3230, %v3229
  %v3232 = vmul.f32 0.5, %v3231
  %v3233 = vsub.f32 1.5, %v3232
  %v3234 = vmul.f32 %v3229, %v3233
  %vm3235 = vweird.f32 %v3116
  %vm3236 = vweird.f32 %v3229
  %vm3237 = vmor %vm3235, %vm3236
  %v3238 = vsel %vm3237, %v3229, %v3234
  %v3239 = vrsqrt.pop %v3117
  %v3240 = vmul.f32 %v3239, %v3117
  %v3241 = vmul.f32 %v3240, %v3239
  %v3242 = vmul.f32 0.5, %v3241
  %v3243 = vsub.f32 1.5, %v3242
  %v3244 = vmul.f32 %v3239, %v3243
  %vm3245 = vweird.f32 %v3117
  %vm3246 = vweird.f32 %v3239
  %vm3247 = vmor %vm3245, %vm3246
  %v3248 = vsel %vm3247, %v3239, %v3244
  %v3249 = vrsqrt.pop %v3118
  %v3250 = vmul.f32 %v3249, %v3118
  %v3251 = vmul.f32 %v3250, %v3249
  %v3252 = vmul.f32 0.5, %v3251
  %v3253 = vsub.f32 1.5, %v3252
  %v3254 = vmul.f32 %v3249, %v3253
  %vm3255 = vweird.f32 %v3118
  %vm3256 = vweird.f32 %v3249
  %vm3257 = vmor %vm3255, %vm3256
  %v3258 = vsel %vm3257, %v3249, %v3254
  %v3259 = vrsqrt.pop %v3119
  %v3260 = vmul.f32 %v3259, %v3119
  %v3261 = vmul.f32 %v3260, %v3259
  %v3262 = vmul.f32 0.5, %v3261
  %v3263 = vsub.f32 1.5, %v3262
  %v3264 = vmul.f32 %v3259, %v3263
  %vm3265 = vweird.f32 %v3119
  %vm3266 = vweird.f32 %v3259
  %vm3267 = vmor %vm3265, %vm3266
  %v3268 = vsel %vm3267, %v3259, %v3264
  %v3269 = vrsqrt.pop %v3120
  %v3270 = vmul.f32 %v3269, %v3120
  %v3271 = vmul.f32 %v3270, %v3269
  %v3272 = vmul.f32 0.5, %v3271
  %v3273 = vsub.f32 1.5, %v3272
  %v3274 = vmul.f32 %v3269, %v3273
  %vm3275 = vweird.f32 %v3120
  %vm3276 = vweird.f32 %v3269
  %vm3277 = vmor %vm3275, %vm3276
  %v3278 = vsel %vm3277, %v3269, %v3274
  %v3279 = vrsqrt.pop %v3121
  %v3280 = vmul.f32 %v3279, %v3121
  %v3281 = vmul.f32 %v3280, %v3279
  %v3282 = vmul.f32 0.5, %v3281
  %v3283 = vsub.f32 1.5, %v3282
  %v3284 = vmul.f32 %v3279, %v3283
  %vm3285 = vweird.f32 %v3121
  %vm3286 = vweird.f32 %v3279
  %vm3287 = vmor %vm3285, %vm3286
  %v3288 = vsel %vm3287, %v3279, %v3284
  %v3289 = vrsqrt.pop %v3122
  %v3290 = vmul.f32 %v3289, %v3122
  %v3291 = vmul.f32 %v3290, %v3289
  %v3292 = vmul.f32 0.5, %v3291
  %v3293 = vsub.f32 1.5, %v3292
  %v3294 = vmul.f32 %v3289, %v3293
  %vm3295 = vweird.f32 %v3122
  %vm3296 = vweird.f32 %v3289
  %vm3297 = vmor %vm3295, %vm3296
  %v3298 = vsel %vm3297, %v3289, %v3294
  %v3299 = vrsqrt.pop %v3123
  %v3300 = vmul.f32 %v3299, %v3123
  %v3301 = vmul.f32 %v3300, %v3299
  %v3302 = vmul.f32 0.5, %v3301
  %v3303 = vsub.f32 1.5, %v3302
  %v3304 = vmul.f32 %v3299, %v3303
  %vm3305 = vweird.f32 %v3123
  %vm3306 = vweird.f32 %v3299
  %vm3307 = vmor %vm3305, %vm3306
  %v3308 = vsel %vm3307, %v3299, %v3304
  %v3309 = vrsqrt.pop %v3124
  %v3310 = vmul.f32 %v3309, %v3124
  %v3311 = vmul.f32 %v3310, %v3309
  %v3312 = vmul.f32 0.5, %v3311
  %v3313 = vsub.f32 1.5, %v3312
  %v3314 = vmul.f32 %v3309, %v3313
  %vm3315 = vweird.f32 %v3124
  %vm3316 = vweird.f32 %v3309
  %vm3317 = vmor %vm3315, %vm3316
  %v3318 = vsel %vm3317, %v3309, %v3314
  %v3319 = vrsqrt.pop %v3125
  %v3320 = vmul.f32 %v3319, %v3125
  %v3321 = vmul.f32 %v3320, %v3319
  %v3322 = vmul.f32 0.5, %v3321
  %v3323 = vsub.f32 1.5, %v3322
  %v3324 = vmul.f32 %v3319, %v3323
  %vm3325 = vweird.f32 %v3125
  %vm3326 = vweird.f32 %v3319
  %vm3327 = vmor %vm3325, %vm3326
  %v3328 = vsel %vm3327, %v3319, %v3324
  %v3329 = vrsqrt.pop %v3126
  %v3330 = vmul.f32 %v3329, %v3126
  %v3331 = vmul.f32 %v3330, %v3329
  %v3332 = vmul.f32 0.5, %v3331
  %v3333 = vsub.f32 1.5, %v3332
  %v3334 = vmul.f32 %v3329, %v3333
  %vm3335 = vweird.f32 %v3126
  %vm3336 = vweird.f32 %v3329
  %vm3337 = vmor %vm3335, %vm3336
  %v3338 = vsel %vm3337, %v3329, %v3334
  %v3339 = vrsqrt.pop %v3127
  %v3340 = vmul.f32 %v3339, %v3127
  %v3341 = vmul.f32 %v3340, %v3339
  %v3342 = vmul.f32 0.5, %v3341
  %v3343 = vsub.f32 1.5, %v3342
  %v3344 = vmul.f32 %v3339, %v3343
  %vm3345 = vweird.f32 %v3127
  %vm3346 = vweird.f32 %v3339
  %vm3347 = vmor %vm3345, %vm3346
  %v3348 = vsel %vm3347, %v3339, %v3344
  %v3349 = vrsqrt.pop %v3128
  %v3350 = vmul.f32 %v3349, %v3128
  %v3351 = vmul.f32 %v3350, %v3349
  %v3352 = vmul.f32 0.5, %v3351
  %v3353 = vsub.f32 1.5, %v3352
  %v3354 = vmul.f32 %v3349, %v3353
  %vm3355 = vweird.f32 %v3128
  %vm3356 = vweird.f32 %v3349
  %vm3357 = vmor %vm3355, %vm3356
  %v3358 = vsel %vm3357, %v3349, %v3354
  %v3359 = vrsqrt.pop %v3129
  %v3360 = vmul.f32 %v3359, %v3129
  %v3361 = vmul.f32 %v3360, %v3359
  %v3362 = vmul.f32 0.5, %v3361
  %v3363 = vsub.f32 1.5, %v3362
  %v3364 = vmul.f32 %v3359, %v3363
  %vm3365 = vweird.f32 %v3129
  %vm3366 = vweird.f32 %v3359
  %vm3367 = vmor %vm3365, %vm3366
  %v3368 = vsel %vm3367, %v3359, %v3364
  %v3369 = vrsqrt.pop %v3130
  %v3370 = vmul.f32 %v3369, %v3130
  %v3371 = vmul.f32 %v3370, %v3369
  %v3372 = vmul.f32 0.5, %v3371
  %v3373 = vsub.f32 1.5, %v3372
  %v3374 = vmul.f32 %v3369, %v3373
  %vm3375 = vweird.f32 %v3130
  %vm3376 = vweird.f32 %v3369
  %vm3377 = vmor %vm3375, %vm3376
  %v3378 = vsel %vm3377, %v3369, %v3374
  %v3379 = vrsqrt.pop %v3131
  %v3380 = vmul.f32 %v3379, %v3131
  %v3381 = vmul.f32 %v3380, %v3379
  %v3382 = vmul.f32 0.5, %v3381
  %v3383 = vsub.f32 1.5, %v3382
  %v3384 = vmul.f32 %v3379, %v3383
  %vm3385 = vweird.f32 %v3131
  %vm3386 = vweird.f32 %v3379
  %vm3387 = vmor %vm3385, %vm3386
  %v3388 = vsel %vm3387, %v3379, %v3384
  %v3389 = vrsqrt.pop %v3132
  %v3390 = vmul.f32 %v3389, %v3132
  %v3391 = vmul.f32 %v3390, %v3389
  %v3392 = vmul.f32 0.5, %v3391
  %v3393 = vsub.f32 1.5, %v3392
  %v3394 = vmul.f32 %v3389, %v3393
  %vm3395 = vweird.f32 %v3132
  %vm3396 = vweird.f32 %v3389
  %vm3397 = vmor %vm3395, %vm3396
  %v3398 = vsel %vm3397, %v3389, %v3394
  %v3399 = vrsqrt.pop %v3133
  %v3400 = vmul.f32 %v3399, %v3133
  %v3401 = vmul.f32 %v3400, %v3399
  %v3402 = vmul.f32 0.5, %v3401
  %v3403 = vsub.f32 1.5, %v3402
  %v3404 = vmul.f32 %v3399, %v3403
  %vm3405 = vweird.f32 %v3133
  %vm3406 = vweird.f32 %v3399
  %vm3407 = vmor %vm3405, %vm3406
  %v3408 = vsel %vm3407, %v3399, %v3404
  %v3409 = vrsqrt.pop %v3134
  %v3410 = vmul.f32 %v3409, %v3134
  %v3411 = vmul.f32 %v3410, %v3409
  %v3412 = vmul.f32 0.5, %v3411
  %v3413 = vsub.f32 1.5, %v3412
  %v3414 = vmul.f32 %v3409, %v3413
  %vm3415 = vweird.f32 %v3134
  %vm3416 = vweird.f32 %v3409
  %vm3417 = vmor %vm3415, %vm3416
  %v3418 = vsel %vm3417, %v3409, %v3414
  %v3419 = vrsqrt.pop %v3135
  %v3420 = vmul.f32 %v3419, %v3135
  %v3421 = vmul.f32 %v3420, %v3419
  %v3422 = vmul.f32 0.5, %v3421
  %v3423 = vsub.f32 1.5, %v3422
  %v3424 = vmul.f32 %v3419, %v3423
  %vm3425 = vweird.f32 %v3135
  %vm3426 = vweird.f32 %v3419
  %vm3427 = vmor %vm3425, %vm3426
  %v3428 = vsel %vm3427, %v3419, %v3424
  %v3429 = vrsqrt.pop %v3136
  %v3430 = vmul.f32 %v3429, %v3136
  %v3431 = vmul.f32 %v3430, %v3429
  %v3432 = vmul.f32 0.5, %v3431
  %v3433 = vsub.f32 1.5, %v3432
  %v3434 = vmul.f32 %v3429, %v3433
  %vm3435 = vweird.f32 %v3136
  %vm3436 = vweird.f32 %v3429
  %vm3437 = vmor %vm3435, %vm3436
  %v3438 = vsel %vm3437, %v3429, %v3434
  %v3439 = vrsqrt.pop %v3137
  %v3440 = vmul.f32 %v3439, %v3137
  %v3441 = vmul.f32 %v3440, %v3439
  %v3442 = vmul.f32 0.5, %v3441
  %v3443 = vsub.f32 1.5, %v3442
  %v3444 = vmul.f32 %v3439, %v3443
  %vm3445 = vweird.f32 %v3137
  %vm3446 = vweird.f32 %v3439
  %vm3447 = vmor %vm3445, %vm3446
  %v3448 = vsel %vm3447, %v3439, %v3444
  %v3449 = vrsqrt.pop %v3138
  %v3450 = vmul.f32 %v3449, %v3138
  %v3451 = vmul.f32 %v3450, %v3449
  %v3452 = vmul.f32 0.5, %v3451
  %v3453 = vsub.f32 1.5, %v3452
  %v3454 = vmul.f32 %v3449, %v3453
  %vm3455 = vweird.f32 %v3138
  %vm3456 = vweird.f32 %v3449
  %vm3457 = vmor %vm3455, %vm3456
  %v3458 = vsel %vm3457, %v3449, %v3454
  %v3459 = vmul.f32 %v3075, %v3148
  %v3460 = vmul.f32 %v3076, %v3158
  %v3461 = vmul.f32 %v3077, %v3168
  %v3462 = vmul.f32 %v3078, %v3178
  %v3463 = vmul.f32 %v3079, %v3188
  %v3464 = vmul.f32 %v3080, %v3198
  %v3465 = vmul.f32 %v3081, %v3208
  %v3466 = vmul.f32 %v3082, %v3218
  %v3467 = vmul.f32 %v3083, %v3228
  %v3468 = vmul.f32 %v3084, %v3238
  %v3469 = vmul.f32 %v3085, %v3248
  %v3470 = vmul.f32 %v3086, %v3258
  %v3471 = vmul.f32 %v3087, %v3268
  %v3472 = vmul.f32 %v3088, %v3278
  %v3473 = vmul.f32 %v3089, %v3288
  %v3474 = vmul.f32 %v3090, %v3298
  %v3475 = vmul.f32 %v3091, %v3308
  %v3476 = vmul.f32 %v3092, %v3318
  %v3477 = vmul.f32 %v3093, %v3328
  %v3478 = vmul.f32 %v3094, %v3338
  %v3479 = vmul.f32 %v3095, %v3348
  %v3480 = vmul.f32 %v3096, %v3358
  %v3481 = vmul.f32 %v3097, %v3368
  %v3482 = vmul.f32 %v3098, %v3378
  %v3483 = vmul.f32 %v3099, %v3388
  %v3484 = vmul.f32 %v3100, %v3398
  %v3485 = vmul.f32 %v3101, %v3408
  %v3486 = vmul.f32 %v3102, %v3418
  %v3487 = vmul.f32 %v3103, %v3428
  %v3488 = vmul.f32 %v3104, %v3438
  %v3489 = vmul.f32 %v3105, %v3448
  %v3490 = vmul.f32 %v3106, %v3458
  %v3491 = vmax.f32 %v3459, 0.0
  %v3492 = vmax.f32 %v3460, 0.0
  %v3493 = vmax.f32 %v3461, 0.0
  %v3494 = vmax.f32 %v3462, 0.0
  %v3495 = vmax.f32 %v3463, 0.0
  %v3496 = vmax.f32 %v3464, 0.0
  %v3497 = vmax.f32 %v3465, 0.0
  %v3498 = vmax.f32 %v3466, 0.0
  %v3499 = vmax.f32 %v3467, 0.0
  %v3500 = vmax.f32 %v3468, 0.0
  %v3501 = vmax.f32 %v3469, 0.0
  %v3502 = vmax.f32 %v3470, 0.0
  %v3503 = vmax.f32 %v3471, 0.0
  %v3504 = vmax.f32 %v3472, 0.0
  %v3505 = vmax.f32 %v3473, 0.0
  %v3506 = vmax.f32 %v3474, 0.0
  %v3507 = vmax.f32 %v3475, 0.0
  %v3508 = vmax.f32 %v3476, 0.0
  %v3509 = vmax.f32 %v3477, 0.0
  %v3510 = vmax.f32 %v3478, 0.0
  %v3511 = vmax.f32 %v3479, 0.0
  %v3512 = vmax.f32 %v3480, 0.0
  %v3513 = vmax.f32 %v3481, 0.0
  %v3514 = vmax.f32 %v3482, 0.0
  %v3515 = vmax.f32 %v3483, 0.0
  %v3516 = vmax.f32 %v3484, 0.0
  %v3517 = vmax.f32 %v3485, 0.0
  %v3518 = vmax.f32 %v3486, 0.0
  %v3519 = vmax.f32 %v3487, 0.0
  %v3520 = vmax.f32 %v3488, 0.0
  %v3521 = vmax.f32 %v3489, 0.0
  %v3522 = vmax.f32 %v3490, 0.0
  %3523 = vrot.lane.b32.xlu0 %v3491, 1
  %v3524 = vpop.permute.xlu0 %3523
  %3525 = vrot.lane.b32.xlu0 %v3492, 1
  %v3526 = vpop.permute.xlu0 %3525
  %3527 = vrot.lane.b32.xlu0 %v3493, 1
  %v3528 = vpop.permute.xlu0 %3527
  %3529 = vrot.lane.b32.xlu0 %v3494, 1
  %v3530 = vpop.permute.xlu0 %3529
  %3531 = vrot.lane.b32.xlu0 %v3495, 1
  %v3532 = vpop.permute.xlu0 %3531
  %3533 = vrot.lane.b32.xlu0 %v3496, 1
  %v3534 = vpop.permute.xlu0 %3533
  %3535 = vrot.lane.b32.xlu0 %v3497, 1
  %v3536 = vpop.permute.xlu0 %3535
  %3537 = vrot.lane.b32.xlu0 %v3498, 1
  %v3538 = vpop.permute.xlu0 %3537
  %3539 = vrot.lane.b32.xlu0 %v3499, 1
  %v3540 = vpop.permute.xlu0 %3539
  %3541 = vrot.lane.b32.xlu0 %v3500, 1
  %v3542 = vpop.permute.xlu0 %3541
  %3543 = vrot.lane.b32.xlu0 %v3501, 1
  %v3544 = vpop.permute.xlu0 %3543
  %3545 = vrot.lane.b32.xlu0 %v3502, 1
  %v3546 = vpop.permute.xlu0 %3545
  %3547 = vrot.lane.b32.xlu0 %v3503, 1
  %v3548 = vpop.permute.xlu0 %3547
  %3549 = vrot.lane.b32.xlu0 %v3504, 1
  %v3550 = vpop.permute.xlu0 %3549
  %3551 = vrot.lane.b32.xlu0 %v3505, 1
  %v3552 = vpop.permute.xlu0 %3551
  %3553 = vrot.lane.b32.xlu0 %v3506, 1
  %v3554 = vpop.permute.xlu0 %3553
  %3555 = vrot.lane.b32.xlu0 %v3507, 1
  %v3556 = vpop.permute.xlu0 %3555
  %3557 = vrot.lane.b32.xlu0 %v3508, 1
  %v3558 = vpop.permute.xlu0 %3557
  %3559 = vrot.lane.b32.xlu0 %v3509, 1
  %v3560 = vpop.permute.xlu0 %3559
  %3561 = vrot.lane.b32.xlu0 %v3510, 1
  %v3562 = vpop.permute.xlu0 %3561
  %3563 = vrot.lane.b32.xlu0 %v3511, 1
  %v3564 = vpop.permute.xlu0 %3563
  %3565 = vrot.lane.b32.xlu0 %v3512, 1
  %v3566 = vpop.permute.xlu0 %3565
  %3567 = vrot.lane.b32.xlu0 %v3513, 1
  %v3568 = vpop.permute.xlu0 %3567
  %3569 = vrot.lane.b32.xlu0 %v3514, 1
  %v3570 = vpop.permute.xlu0 %3569
  %3571 = vrot.lane.b32.xlu0 %v3515, 1
  %v3572 = vpop.permute.xlu0 %3571
  %3573 = vrot.lane.b32.xlu0 %v3516, 1
  %v3574 = vpop.permute.xlu0 %3573
  %3575 = vrot.lane.b32.xlu0 %v3517, 1
  %v3576 = vpop.permute.xlu0 %3575
  %3577 = vrot.lane.b32.xlu0 %v3518, 1
  %v3578 = vpop.permute.xlu0 %3577
  %3579 = vrot.lane.b32.xlu0 %v3519, 1
  %v3580 = vpop.permute.xlu0 %3579
  %3581 = vrot.lane.b32.xlu0 %v3520, 1
  %v3582 = vpop.permute.xlu0 %3581
  %3583 = vrot.lane.b32.xlu0 %v3521, 1
  %v3584 = vpop.permute.xlu0 %3583
  %3585 = vrot.lane.b32.xlu0 %v3522, 1
  %v3586 = vpop.permute.xlu0 %3585
  %v3587 = vsel %vm95, %v3524, 0.0
  %v3588 = vsel %vm95, %v3526, 0.0
  %v3589 = vsel %vm95, %v3528, 0.0
  %v3590 = vsel %vm95, %v3530, 0.0
  %v3591 = vsel %vm95, %v3532, 0.0
  %v3592 = vsel %vm95, %v3534, 0.0
  %v3593 = vsel %vm95, %v3536, 0.0
  %v3594 = vsel %vm95, %v3538, 0.0
  %v3595 = vsel %vm95, %v3540, 0.0
  %v3596 = vsel %vm95, %v3542, 0.0
  %v3597 = vsel %vm95, %v3544, 0.0
  %v3598 = vsel %vm95, %v3546, 0.0
  %v3599 = vsel %vm95, %v3548, 0.0
  %v3600 = vsel %vm95, %v3550, 0.0
  %v3601 = vsel %vm95, %v3552, 0.0
  %v3602 = vsel %vm95, %v3554, 0.0
  %v3603 = vsel %vm95, %v3556, 0.0
  %v3604 = vsel %vm95, %v3558, 0.0
  %v3605 = vsel %vm95, %v3560, 0.0
  %v3606 = vsel %vm95, %v3562, 0.0
  %v3607 = vsel %vm95, %v3564, 0.0
  %v3608 = vsel %vm95, %v3566, 0.0
  %v3609 = vsel %vm95, %v3568, 0.0
  %v3610 = vsel %vm95, %v3570, 0.0
  %v3611 = vsel %vm95, %v3572, 0.0
  %v3612 = vsel %vm95, %v3574, 0.0
  %v3613 = vsel %vm95, %v3576, 0.0
  %v3614 = vsel %vm95, %v3578, 0.0
  %v3615 = vsel %vm95, %v3580, 0.0
  %v3616 = vsel %vm95, %v3582, 0.0
  %v3617 = vsel %vm95, %v3584, 0.0
  %v3618 = vsel %vm95, %v3586, 0.0
  %v3619 = vpack.c.bf16 %v3587, %v3587
  %v3620 = vpack.c.bf16 %v3588, %v3588
  %v3621 = vpack.c.bf16 %v3589, %v3589
  %v3622 = vpack.c.bf16 %v3590, %v3590
  %v3623 = vpack.c.bf16 %v3591, %v3591
  %v3624 = vpack.c.bf16 %v3592, %v3592
  %v3625 = vpack.c.bf16 %v3593, %v3593
  %v3626 = vpack.c.bf16 %v3594, %v3594
  %v3627 = vpack.c.bf16 %v3595, %v3595
  %v3628 = vpack.c.bf16 %v3596, %v3596
  %v3629 = vpack.c.bf16 %v3597, %v3597
  %v3630 = vpack.c.bf16 %v3598, %v3598
  %v3631 = vpack.c.bf16 %v3599, %v3599
  %v3632 = vpack.c.bf16 %v3600, %v3600
  %v3633 = vpack.c.bf16 %v3601, %v3601
  %v3634 = vpack.c.bf16 %v3602, %v3602
  %v3635 = vpack.c.bf16 %v3603, %v3603
  %v3636 = vpack.c.bf16 %v3604, %v3604
  %v3637 = vpack.c.bf16 %v3605, %v3605
  %v3638 = vpack.c.bf16 %v3606, %v3606
  %v3639 = vpack.c.bf16 %v3607, %v3607
  %v3640 = vpack.c.bf16 %v3608, %v3608
  %v3641 = vpack.c.bf16 %v3609, %v3609
  %v3642 = vpack.c.bf16 %v3610, %v3610
  %v3643 = vpack.c.bf16 %v3611, %v3611
  %v3644 = vpack.c.bf16 %v3612, %v3612
  %v3645 = vpack.c.bf16 %v3613, %v3613
  %v3646 = vpack.c.bf16 %v3614, %v3614
  %v3647 = vpack.c.bf16 %v3615, %v3615
  %v3648 = vpack.c.bf16 %v3616, %v3616
  %v3649 = vpack.c.bf16 %v3617, %v3617
  %v3650 = vpack.c.bf16 %v3618, %v3618
  %3651 = vst [vmem:[#allocation2] sm:$0xf] %v3619
  %3652 = vst [vmem:[#allocation2 + $0x4] sm:$0xf] %v3620
  %3653 = vst [vmem:[#allocation2 + $0x8] sm:$0xf] %v3621
  %3654 = vst [vmem:[#allocation2 + $0xc] sm:$0xf] %v3622
  %3655 = vst [vmem:[#allocation2 + $0x10] sm:$0xf] %v3623
  %3656 = vst [vmem:[#allocation2 + $0x14] sm:$0xf] %v3624
  %3657 = vst [vmem:[#allocation2 + $0x18] sm:$0xf] %v3625
  %3658 = vst [vmem:[#allocation2 + $0x1c] sm:$0xf] %v3626
  %3659 = vst [vmem:[#allocation2 + $0x20] sm:$0xf] %v3627
  %3660 = vst [vmem:[#allocation2 + $0x24] sm:$0xf] %v3628
  %3661 = vst [vmem:[#allocation2 + $0x28] sm:$0xf] %v3629
  %3662 = vst [vmem:[#allocation2 + $0x2c] sm:$0xf] %v3630
  %3663 = vst [vmem:[#allocation2 + $0x30] sm:$0xf] %v3631
  %3664 = vst [vmem:[#allocation2 + $0x34] sm:$0xf] %v3632
  %3665 = vst [vmem:[#allocation2 + $0x38] sm:$0xf] %v3633
  %3666 = vst [vmem:[#allocation2 + $0x3c] sm:$0xf] %v3634
  %3667 = vst [vmem:[#allocation2 + $0x40] sm:$0xf] %v3635
  %3668 = vst [vmem:[#allocation2 + $0x44] sm:$0xf] %v3636
  %3669 = vst [vmem:[#allocation2 + $0x48] sm:$0xf] %v3637
  %3670 = vst [vmem:[#allocation2 + $0x4c] sm:$0xf] %v3638
  %3671 = vst [vmem:[#allocation2 + $0x50] sm:$0xf] %v3639
  %3672 = vst [vmem:[#allocation2 + $0x54] sm:$0xf] %v3640
  %3673 = vst [vmem:[#allocation2 + $0x58] sm:$0xf] %v3641
  %3674 = vst [vmem:[#allocation2 + $0x5c] sm:$0xf] %v3642
  %3675 = vst [vmem:[#allocation2 + $0x60] sm:$0xf] %v3643
  %3676 = vst [vmem:[#allocation2 + $0x64] sm:$0xf] %v3644
  %3677 = vst [vmem:[#allocation2 + $0x68] sm:$0xf] %v3645
  %3678 = vst [vmem:[#allocation2 + $0x6c] sm:$0xf] %v3646
  %3679 = vst [vmem:[#allocation2 + $0x70] sm:$0xf] %v3647
  %3680 = vst [vmem:[#allocation2 + $0x74] sm:$0xf] %v3648
  %3681 = vst [vmem:[#allocation2 + $0x78] sm:$0xf] %v3649
  %3682 = vst [vmem:[#allocation2 + $0x7c] sm:$0xf] %v3650
  %v3683 = vpack.c.bf16 %v3491, %v3491
  %v3684 = vpack.c.bf16 %v3492, %v3492
  %v3685 = vpack.c.bf16 %v3493, %v3493
  %v3686 = vpack.c.bf16 %v3494, %v3494
  %v3687 = vpack.c.bf16 %v3495, %v3495
  %v3688 = vpack.c.bf16 %v3496, %v3496
  %v3689 = vpack.c.bf16 %v3497, %v3497
  %v3690 = vpack.c.bf16 %v3498, %v3498
  %v3691 = vpack.c.bf16 %v3499, %v3499
  %v3692 = vpack.c.bf16 %v3500, %v3500
  %v3693 = vpack.c.bf16 %v3501, %v3501
  %v3694 = vpack.c.bf16 %v3502, %v3502
  %v3695 = vpack.c.bf16 %v3503, %v3503
  %v3696 = vpack.c.bf16 %v3504, %v3504
  %v3697 = vpack.c.bf16 %v3505, %v3505
  %v3698 = vpack.c.bf16 %v3506, %v3506
  %v3699 = vpack.c.bf16 %v3507, %v3507
  %v3700 = vpack.c.bf16 %v3508, %v3508
  %v3701 = vpack.c.bf16 %v3509, %v3509
  %v3702 = vpack.c.bf16 %v3510, %v3510
  %v3703 = vpack.c.bf16 %v3511, %v3511
  %v3704 = vpack.c.bf16 %v3512, %v3512
  %v3705 = vpack.c.bf16 %v3513, %v3513
  %v3706 = vpack.c.bf16 %v3514, %v3514
  %v3707 = vpack.c.bf16 %v3515, %v3515
  %v3708 = vpack.c.bf16 %v3516, %v3516
  %v3709 = vpack.c.bf16 %v3517, %v3517
  %v3710 = vpack.c.bf16 %v3518, %v3518
  %v3711 = vpack.c.bf16 %v3519, %v3519
  %v3712 = vpack.c.bf16 %v3520, %v3520
  %v3713 = vpack.c.bf16 %v3521, %v3521
  %v3714 = vpack.c.bf16 %v3522, %v3522
  %3715 = vst [vmem:[#allocation2 + $0x80] sm:$0xf] %v3683
  %3716 = vst [vmem:[#allocation2 + $0x84] sm:$0xf] %v3684
  %3717 = vst [vmem:[#allocation2 + $0x88] sm:$0xf] %v3685
  %3718 = vst [vmem:[#allocation2 + $0x8c] sm:$0xf] %v3686
  %3719 = vst [vmem:[#allocation2 + $0x90] sm:$0xf] %v3687
  %3720 = vst [vmem:[#allocation2 + $0x94] sm:$0xf] %v3688
  %3721 = vst [vmem:[#allocation2 + $0x98] sm:$0xf] %v3689
  %3722 = vst [vmem:[#allocation2 + $0x9c] sm:$0xf] %v3690
  %3723 = vst [vmem:[#allocation2 + $0xa0] sm:$0xf] %v3691
  %3724 = vst [vmem:[#allocation2 + $0xa4] sm:$0xf] %v3692
  %3725 = vst [vmem:[#allocation2 + $0xa8] sm:$0xf] %v3693
  %3726 = vst [vmem:[#allocation2 + $0xac] sm:$0xf] %v3694
  %3727 = vst [vmem:[#allocation2 + $0xb0] sm:$0xf] %v3695
  %3728 = vst [vmem:[#allocation2 + $0xb4] sm:$0xf] %v3696
  %3729 = vst [vmem:[#allocation2 + $0xb8] sm:$0xf] %v3697
  %3730 = vst [vmem:[#allocation2 + $0xbc] sm:$0xf] %v3698
  %3731 = vst [vmem:[#allocation2 + $0xc0] sm:$0xf] %v3699
  %3732 = vst [vmem:[#allocation2 + $0xc4] sm:$0xf] %v3700
  %3733 = vst [vmem:[#allocation2 + $0xc8] sm:$0xf] %v3701
  %3734 = vst [vmem:[#allocation2 + $0xcc] sm:$0xf] %v3702
  %3735 = vst [vmem:[#allocation2 + $0xd0] sm:$0xf] %v3703
  %3736 = vst [vmem:[#allocation2 + $0xd4] sm:$0xf] %v3704
  %3737 = vst [vmem:[#allocation2 + $0xd8] sm:$0xf] %v3705
  %3738 = vst [vmem:[#allocation2 + $0xdc] sm:$0xf] %v3706
  %3739 = vst [vmem:[#allocation2 + $0xe0] sm:$0xf] %v3707
  %3740 = vst [vmem:[#allocation2 + $0xe4] sm:$0xf] %v3708
  %3741 = vst [vmem:[#allocation2 + $0xe8] sm:$0xf] %v3709
  %3742 = vst [vmem:[#allocation2 + $0xec] sm:$0xf] %v3710
  %3743 = vst [vmem:[#allocation2 + $0xf0] sm:$0xf] %v3711
  %3744 = vst [vmem:[#allocation2 + $0xf4] sm:$0xf] %v3712
  %3745 = vst [vmem:[#allocation2 + $0xf8] sm:$0xf] %v3713
  %3746 = vst [vmem:[#allocation2 + $0xfc] sm:$0xf] %v3714
  %3747 = vrot.lane.b32.xlu0 %v3491, 127
  %v3748 = vpop.permute.xlu0 %3747
  %3749 = vrot.lane.b32.xlu0 %v3492, 127
  %v3750 = vpop.permute.xlu0 %3749
  %3751 = vrot.lane.b32.xlu0 %v3493, 127
  %v3752 = vpop.permute.xlu0 %3751
  %3753 = vrot.lane.b32.xlu0 %v3494, 127
  %v3754 = vpop.permute.xlu0 %3753
  %3755 = vrot.lane.b32.xlu0 %v3495, 127
  %v3756 = vpop.permute.xlu0 %3755
  %3757 = vrot.lane.b32.xlu0 %v3496, 127
  %v3758 = vpop.permute.xlu0 %3757
  %3759 = vrot.lane.b32.xlu0 %v3497, 127
  %v3760 = vpop.permute.xlu0 %3759
  %3761 = vrot.lane.b32.xlu0 %v3498, 127
  %v3762 = vpop.permute.xlu0 %3761
  %3763 = vrot.lane.b32.xlu0 %v3499, 127
  %v3764 = vpop.permute.xlu0 %3763
  %3765 = vrot.lane.b32.xlu0 %v3500, 127
  %v3766 = vpop.permute.xlu0 %3765
  %3767 = vrot.lane.b32.xlu0 %v3501, 127
  %v3768 = vpop.permute.xlu0 %3767
  %3769 = vrot.lane.b32.xlu0 %v3502, 127
  %v3770 = vpop.permute.xlu0 %3769
  %3771 = vrot.lane.b32.xlu0 %v3503, 127
  %v3772 = vpop.permute.xlu0 %3771
  %3773 = vrot.lane.b32.xlu0 %v3504, 127
  %v3774 = vpop.permute.xlu0 %3773
  %3775 = vrot.lane.b32.xlu0 %v3505, 127
  %v3776 = vpop.permute.xlu0 %3775
  %3777 = vrot.lane.b32.xlu0 %v3506, 127
  %v3778 = vpop.permute.xlu0 %3777
  %3779 = vrot.lane.b32.xlu0 %v3507, 127
  %v3780 = vpop.permute.xlu0 %3779
  %3781 = vrot.lane.b32.xlu0 %v3508, 127
  %v3782 = vpop.permute.xlu0 %3781
  %3783 = vrot.lane.b32.xlu0 %v3509, 127
  %v3784 = vpop.permute.xlu0 %3783
  %3785 = vrot.lane.b32.xlu0 %v3510, 127
  %v3786 = vpop.permute.xlu0 %3785
  %3787 = vrot.lane.b32.xlu0 %v3511, 127
  %v3788 = vpop.permute.xlu0 %3787
  %3789 = vrot.lane.b32.xlu0 %v3512, 127
  %v3790 = vpop.permute.xlu0 %3789
  %3791 = vrot.lane.b32.xlu0 %v3513, 127
  %v3792 = vpop.permute.xlu0 %3791
  %3793 = vrot.lane.b32.xlu0 %v3514, 127
  %v3794 = vpop.permute.xlu0 %3793
  %3795 = vrot.lane.b32.xlu0 %v3515, 127
  %v3796 = vpop.permute.xlu0 %3795
  %3797 = vrot.lane.b32.xlu0 %v3516, 127
  %v3798 = vpop.permute.xlu0 %3797
  %3799 = vrot.lane.b32.xlu0 %v3517, 127
  %v3800 = vpop.permute.xlu0 %3799
  %3801 = vrot.lane.b32.xlu0 %v3518, 127
  %v3802 = vpop.permute.xlu0 %3801
  %3803 = vrot.lane.b32.xlu0 %v3519, 127
  %v3804 = vpop.permute.xlu0 %3803
  %3805 = vrot.lane.b32.xlu0 %v3520, 127
  %v3806 = vpop.permute.xlu0 %3805
  %3807 = vrot.lane.b32.xlu0 %v3521, 127
  %v3808 = vpop.permute.xlu0 %3807
  %3809 = vrot.lane.b32.xlu0 %v3522, 127
  %v3810 = vpop.permute.xlu0 %3809
  %v3811 = vsel %vm108, %v3748, 0.0
  %v3812 = vsel %vm108, %v3750, 0.0
  %v3813 = vsel %vm108, %v3752, 0.0
  %v3814 = vsel %vm108, %v3754, 0.0
  %v3815 = vsel %vm108, %v3756, 0.0
  %v3816 = vsel %vm108, %v3758, 0.0
  %v3817 = vsel %vm108, %v3760, 0.0
  %v3818 = vsel %vm108, %v3762, 0.0
  %v3819 = vsel %vm108, %v3764, 0.0
  %v3820 = vsel %vm108, %v3766, 0.0
  %v3821 = vsel %vm108, %v3768, 0.0
  %v3822 = vsel %vm108, %v3770, 0.0
  %v3823 = vsel %vm108, %v3772, 0.0
  %v3824 = vsel %vm108, %v3774, 0.0
  %v3825 = vsel %vm108, %v3776, 0.0
  %v3826 = vsel %vm108, %v3778, 0.0
  %v3827 = vsel %vm108, %v3780, 0.0
  %v3828 = vsel %vm108, %v3782, 0.0
  %v3829 = vsel %vm108, %v3784, 0.0
  %v3830 = vsel %vm108, %v3786, 0.0
  %v3831 = vsel %vm108, %v3788, 0.0
  %v3832 = vsel %vm108, %v3790, 0.0
  %v3833 = vsel %vm108, %v3792, 0.0
  %v3834 = vsel %vm108, %v3794, 0.0
  %v3835 = vsel %vm108, %v3796, 0.0
  %v3836 = vsel %vm108, %v3798, 0.0
  %v3837 = vsel %vm108, %v3800, 0.0
  %v3838 = vsel %vm108, %v3802, 0.0
  %v3839 = vsel %vm108, %v3804, 0.0
  %v3840 = vsel %vm108, %v3806, 0.0
  %v3841 = vsel %vm108, %v3808, 0.0
  %v3842 = vsel %vm108, %v3810, 0.0
  %v3843 = vpack.c.bf16 %v3811, %v3811
  %v3844 = vpack.c.bf16 %v3812, %v3812
  %v3845 = vpack.c.bf16 %v3813, %v3813
  %v3846 = vpack.c.bf16 %v3814, %v3814
  %v3847 = vpack.c.bf16 %v3815, %v3815
  %v3848 = vpack.c.bf16 %v3816, %v3816
  %v3849 = vpack.c.bf16 %v3817, %v3817
  %v3850 = vpack.c.bf16 %v3818, %v3818
  %v3851 = vpack.c.bf16 %v3819, %v3819
  %v3852 = vpack.c.bf16 %v3820, %v3820
  %v3853 = vpack.c.bf16 %v3821, %v3821
  %v3854 = vpack.c.bf16 %v3822, %v3822
  %v3855 = vpack.c.bf16 %v3823, %v3823
  %v3856 = vpack.c.bf16 %v3824, %v3824
  %v3857 = vpack.c.bf16 %v3825, %v3825
  %v3858 = vpack.c.bf16 %v3826, %v3826
  %v3859 = vpack.c.bf16 %v3827, %v3827
  %v3860 = vpack.c.bf16 %v3828, %v3828
  %v3861 = vpack.c.bf16 %v3829, %v3829
  %v3862 = vpack.c.bf16 %v3830, %v3830
  %v3863 = vpack.c.bf16 %v3831, %v3831
  %v3864 = vpack.c.bf16 %v3832, %v3832
  %v3865 = vpack.c.bf16 %v3833, %v3833
  %v3866 = vpack.c.bf16 %v3834, %v3834
  %v3867 = vpack.c.bf16 %v3835, %v3835
  %v3868 = vpack.c.bf16 %v3836, %v3836
  %v3869 = vpack.c.bf16 %v3837, %v3837
  %v3870 = vpack.c.bf16 %v3838, %v3838
  %v3871 = vpack.c.bf16 %v3839, %v3839
  %v3872 = vpack.c.bf16 %v3840, %v3840
  %v3873 = vpack.c.bf16 %v3841, %v3841
  %v3874 = vpack.c.bf16 %v3842, %v3842
  %3875 = vst [vmem:[#allocation2 + $0x100] sm:$0xf] %v3843
  %3876 = vst [vmem:[#allocation2 + $0x104] sm:$0xf] %v3844
  %3877 = vst [vmem:[#allocation2 + $0x108] sm:$0xf] %v3845
  %3878 = vst [vmem:[#allocation2 + $0x10c] sm:$0xf] %v3846
  %3879 = vst [vmem:[#allocation2 + $0x110] sm:$0xf] %v3847
  %3880 = vst [vmem:[#allocation2 + $0x114] sm:$0xf] %v3848
  %3881 = vst [vmem:[#allocation2 + $0x118] sm:$0xf] %v3849
  %3882 = vst [vmem:[#allocation2 + $0x11c] sm:$0xf] %v3850
  %3883 = vst [vmem:[#allocation2 + $0x120] sm:$0xf] %v3851
  %3884 = vst [vmem:[#allocation2 + $0x124] sm:$0xf] %v3852
  %3885 = vst [vmem:[#allocation2 + $0x128] sm:$0xf] %v3853
  %3886 = vst [vmem:[#allocation2 + $0x12c] sm:$0xf] %v3854
  %3887 = vst [vmem:[#allocation2 + $0x130] sm:$0xf] %v3855
  %3888 = vst [vmem:[#allocation2 + $0x134] sm:$0xf] %v3856
  %3889 = vst [vmem:[#allocation2 + $0x138] sm:$0xf] %v3857
  %3890 = vst [vmem:[#allocation2 + $0x13c] sm:$0xf] %v3858
  %3891 = vst [vmem:[#allocation2 + $0x140] sm:$0xf] %v3859
  %3892 = vst [vmem:[#allocation2 + $0x144] sm:$0xf] %v3860
  %3893 = vst [vmem:[#allocation2 + $0x148] sm:$0xf] %v3861
  %3894 = vst [vmem:[#allocation2 + $0x14c] sm:$0xf] %v3862
  %3895 = vst [vmem:[#allocation2 + $0x150] sm:$0xf] %v3863
  %3896 = vst [vmem:[#allocation2 + $0x154] sm:$0xf] %v3864
  %3897 = vst [vmem:[#allocation2 + $0x158] sm:$0xf] %v3865
  %3898 = vst [vmem:[#allocation2 + $0x15c] sm:$0xf] %v3866
  %3899 = vst [vmem:[#allocation2 + $0x160] sm:$0xf] %v3867
  %3900 = vst [vmem:[#allocation2 + $0x164] sm:$0xf] %v3868
  %3901 = vst [vmem:[#allocation2 + $0x168] sm:$0xf] %v3869
  %3902 = vst [vmem:[#allocation2 + $0x16c] sm:$0xf] %v3870
  %3903 = vst [vmem:[#allocation2 + $0x170] sm:$0xf] %v3871
  %3904 = vst [vmem:[#allocation2 + $0x174] sm:$0xf] %v3872
  %3905 = vst [vmem:[#allocation2 + $0x178] sm:$0xf] %v3873
  %3906 = vst [vmem:[#allocation2 + $0x17c] sm:$0xf] %v3874
  %v3907 = vld [vmem:[#allocation2 + $0x180] sm:$0x1]
  %v3908 = vsel %vm125, 1065369472, %v3907
  %3909 = vst [vmem:[#allocation2 + $0x180] sm:$0x1] %v3908
  %v3910 = vld [vmem:[%s4] sm:$0xff]
  %v3911 = vld [vmem:[%s4 + $0x8] sm:$0xff]
  %v3912 = vld [vmem:[%s4 + $0x10] sm:$0xff]
  %v3913 = vld [vmem:[%s4 + $0x18] sm:$0xf]
  %v3914 = vld [vmem:[%s4 + $0x1c] sm:$0xff]
  %v3915 = vld [vmem:[%s4 + $0x24] sm:$0xff]
  %v3916 = vld [vmem:[%s4 + $0x2c] sm:$0xff]
  %v3917 = vld [vmem:[%s4 + $0x34] sm:$0xf]
  %v3918 = vld [vmem:[%s4 + $0x38] sm:$0xff]
  %v3919 = vld [vmem:[%s4 + $0x40] sm:$0xff]
  %v3920 = vld [vmem:[%s4 + $0x48] sm:$0xff]
  %v3921 = vld [vmem:[%s4 + $0x50] sm:$0xf]
  %v3922 = vld [vmem:[%s4 + $0x54] sm:$0xff]
  %v3923 = vld [vmem:[%s4 + $0x5c] sm:$0xff]
  %v3924 = vld [vmem:[%s4 + $0x64] sm:$0xff]
  %v3925 = vld [vmem:[%s4 + $0x6c] sm:$0xf]
  %v3926 = vld [vmem:[%s4 + $0x70] sm:$0xff]
  %v3927 = vld [vmem:[%s4 + $0x78] sm:$0xff]
  %v3928 = vld [vmem:[%s4 + $0x80] sm:$0xff]
  %v3929 = vld [vmem:[%s4 + $0x88] sm:$0xf]
  %v3930 = vld [vmem:[%s4 + $0x8c] sm:$0xff]
  %v3931 = vld [vmem:[%s4 + $0x94] sm:$0xff]
  %v3932 = vld [vmem:[%s4 + $0x9c] sm:$0xff]
  %v3933 = vld [vmem:[%s4 + $0xa4] sm:$0xf]
  %v3934 = vld [vmem:[%s4 + $0xa8] sm:$0xff]
  %v3935 = vld [vmem:[%s4 + $0xb0] sm:$0xff]
  %v3936 = vld [vmem:[%s4 + $0xb8] sm:$0xff]
  %v3937 = vld [vmem:[%s4 + $0xc0] sm:$0xf]
  %v3938 = vld [vmem:[%s4 + $0xc4] sm:$0xff]
  %v3939 = vld [vmem:[%s4 + $0xcc] sm:$0xff]
  %v3940 = vld [vmem:[%s4 + $0xd4] sm:$0xff]
  %v3941 = vld [vmem:[%s4 + $0xdc] sm:$0xf]
  %v3942 = vld [vmem:[#allocation2] sm:$0xf]
  %v3943 = vld [vmem:[#allocation2 + $0x4] sm:$0xf]
  %v3944 = vld [vmem:[#allocation2 + $0x8] sm:$0xf]
  %v3945 = vld [vmem:[#allocation2 + $0xc] sm:$0xf]
  %v3946 = vld [vmem:[#allocation2 + $0x10] sm:$0xf]
  %v3947 = vld [vmem:[#allocation2 + $0x14] sm:$0xf]
  %v3948 = vld [vmem:[#allocation2 + $0x18] sm:$0xf]
  %v3949 = vld [vmem:[#allocation2 + $0x1c] sm:$0xf]
  %v3950 = vld [vmem:[#allocation2 + $0x20] sm:$0xf]
  %v3951 = vld [vmem:[#allocation2 + $0x24] sm:$0xf]
  %v3952 = vld [vmem:[#allocation2 + $0x28] sm:$0xf]
  %v3953 = vld [vmem:[#allocation2 + $0x2c] sm:$0xf]
  %v3954 = vld [vmem:[#allocation2 + $0x30] sm:$0xf]
  %v3955 = vld [vmem:[#allocation2 + $0x34] sm:$0xf]
  %v3956 = vld [vmem:[#allocation2 + $0x38] sm:$0xf]
  %v3957 = vld [vmem:[#allocation2 + $0x3c] sm:$0xf]
  %v3958 = vld [vmem:[#allocation2 + $0x40] sm:$0xf]
  %v3959 = vld [vmem:[#allocation2 + $0x44] sm:$0xf]
  %v3960 = vld [vmem:[#allocation2 + $0x48] sm:$0xf]
  %v3961 = vld [vmem:[#allocation2 + $0x4c] sm:$0xf]
  %v3962 = vld [vmem:[#allocation2 + $0x50] sm:$0xf]
  %v3963 = vld [vmem:[#allocation2 + $0x54] sm:$0xf]
  %v3964 = vld [vmem:[#allocation2 + $0x58] sm:$0xf]
  %v3965 = vld [vmem:[#allocation2 + $0x5c] sm:$0xf]
  %v3966 = vld [vmem:[#allocation2 + $0x60] sm:$0xf]
  %v3967 = vld [vmem:[#allocation2 + $0x64] sm:$0xf]
  %v3968 = vld [vmem:[#allocation2 + $0x68] sm:$0xf]
  %v3969 = vld [vmem:[#allocation2 + $0x6c] sm:$0xf]
  %v3970 = vld [vmem:[#allocation2 + $0x70] sm:$0xf]
  %v3971 = vld [vmem:[#allocation2 + $0x74] sm:$0xf]
  %v3972 = vld [vmem:[#allocation2 + $0x78] sm:$0xf]
  %v3973 = vld [vmem:[#allocation2 + $0x7c] sm:$0xf]
  %v3974 = vld [vmem:[#allocation2 + $0x80] sm:$0xf]
  %v3975 = vld [vmem:[#allocation2 + $0x84] sm:$0xf]
  %v3976 = vld [vmem:[#allocation2 + $0x88] sm:$0xf]
  %v3977 = vld [vmem:[#allocation2 + $0x8c] sm:$0xf]
  %v3978 = vld [vmem:[#allocation2 + $0x90] sm:$0xf]
  %v3979 = vld [vmem:[#allocation2 + $0x94] sm:$0xf]
  %v3980 = vld [vmem:[#allocation2 + $0x98] sm:$0xf]
  %v3981 = vld [vmem:[#allocation2 + $0x9c] sm:$0xf]
  %v3982 = vld [vmem:[#allocation2 + $0xa0] sm:$0xf]
  %v3983 = vld [vmem:[#allocation2 + $0xa4] sm:$0xf]
  %v3984 = vld [vmem:[#allocation2 + $0xa8] sm:$0xf]
  %v3985 = vld [vmem:[#allocation2 + $0xac] sm:$0xf]
  %v3986 = vld [vmem:[#allocation2 + $0xb0] sm:$0xf]
  %v3987 = vld [vmem:[#allocation2 + $0xb4] sm:$0xf]
  %v3988 = vld [vmem:[#allocation2 + $0xb8] sm:$0xf]
  %v3989 = vld [vmem:[#allocation2 + $0xbc] sm:$0xf]
  %v3990 = vld [vmem:[#allocation2 + $0xc0] sm:$0xf]
  %v3991 = vld [vmem:[#allocation2 + $0xc4] sm:$0xf]
  %v3992 = vld [vmem:[#allocation2 + $0xc8] sm:$0xf]
  %v3993 = vld [vmem:[#allocation2 + $0xcc] sm:$0xf]
  %v3994 = vld [vmem:[#allocation2 + $0xd0] sm:$0xf]
  %v3995 = vld [vmem:[#allocation2 + $0xd4] sm:$0xf]
  %v3996 = vld [vmem:[#allocation2 + $0xd8] sm:$0xf]
  %v3997 = vld [vmem:[#allocation2 + $0xdc] sm:$0xf]
  %v3998 = vld [vmem:[#allocation2 + $0xe0] sm:$0xf]
  %v3999 = vld [vmem:[#allocation2 + $0xe4] sm:$0xf]
  %v4000 = vld [vmem:[#allocation2 + $0xe8] sm:$0xf]
  %v4001 = vld [vmem:[#allocation2 + $0xec] sm:$0xf]
  %v4002 = vld [vmem:[#allocation2 + $0xf0] sm:$0xf]
  %v4003 = vld [vmem:[#allocation2 + $0xf4] sm:$0xf]
  %v4004 = vld [vmem:[#allocation2 + $0xf8] sm:$0xf]
  %v4005 = vld [vmem:[#allocation2 + $0xfc] sm:$0xf]
  %v4006 = vld [vmem:[#allocation2 + $0x100] sm:$0xf]
  %v4007 = vld [vmem:[#allocation2 + $0x104] sm:$0xf]
  %v4008 = vld [vmem:[#allocation2 + $0x108] sm:$0xf]
  %v4009 = vld [vmem:[#allocation2 + $0x10c] sm:$0xf]
  %v4010 = vld [vmem:[#allocation2 + $0x110] sm:$0xf]
  %v4011 = vld [vmem:[#allocation2 + $0x114] sm:$0xf]
  %v4012 = vld [vmem:[#allocation2 + $0x118] sm:$0xf]
  %v4013 = vld [vmem:[#allocation2 + $0x11c] sm:$0xf]
  %v4014 = vld [vmem:[#allocation2 + $0x120] sm:$0xf]
  %v4015 = vld [vmem:[#allocation2 + $0x124] sm:$0xf]
  %v4016 = vld [vmem:[#allocation2 + $0x128] sm:$0xf]
  %v4017 = vld [vmem:[#allocation2 + $0x12c] sm:$0xf]
  %v4018 = vld [vmem:[#allocation2 + $0x130] sm:$0xf]
  %v4019 = vld [vmem:[#allocation2 + $0x134] sm:$0xf]
  %v4020 = vld [vmem:[#allocation2 + $0x138] sm:$0xf]
  %v4021 = vld [vmem:[#allocation2 + $0x13c] sm:$0xf]
  %v4022 = vld [vmem:[#allocation2 + $0x140] sm:$0xf]
  %v4023 = vld [vmem:[#allocation2 + $0x144] sm:$0xf]
  %v4024 = vld [vmem:[#allocation2 + $0x148] sm:$0xf]
  %v4025 = vld [vmem:[#allocation2 + $0x14c] sm:$0xf]
  %v4026 = vld [vmem:[#allocation2 + $0x150] sm:$0xf]
  %v4027 = vld [vmem:[#allocation2 + $0x154] sm:$0xf]
  %v4028 = vld [vmem:[#allocation2 + $0x158] sm:$0xf]
  %v4029 = vld [vmem:[#allocation2 + $0x15c] sm:$0xf]
  %v4030 = vld [vmem:[#allocation2 + $0x160] sm:$0xf]
  %v4031 = vld [vmem:[#allocation2 + $0x164] sm:$0xf]
  %v4032 = vld [vmem:[#allocation2 + $0x168] sm:$0xf]
  %v4033 = vld [vmem:[#allocation2 + $0x16c] sm:$0xf]
  %v4034 = vld [vmem:[#allocation2 + $0x170] sm:$0xf]
  %v4035 = vld [vmem:[#allocation2 + $0x174] sm:$0xf]
  %v4036 = vld [vmem:[#allocation2 + $0x178] sm:$0xf]
  %v4037 = vld [vmem:[#allocation2 + $0x17c] sm:$0xf]
  %v4038 = vld [vmem:[#allocation2 + $0x180] sm:$0x1]
  %v4071 = vunpack.c.l.b16 %v3910
  %v4072 = vunpack.c.h.b16 %v3910
  %v4073 = vunpack.c.l.b16 %v3911
  %v4074 = vunpack.c.h.b16 %v3911
  %v4075 = vunpack.c.l.b16 %v3912
  %v4076 = vunpack.c.h.b16 %v3912
  %v4077 = vunpack.c.l.b16 %v3913
  %v4078 = vunpack.c.l.b16 %v3914
  %v4079 = vunpack.c.h.b16 %v3914
  %v4080 = vunpack.c.l.b16 %v3915
  %v4081 = vunpack.c.h.b16 %v3915
  %v4082 = vunpack.c.l.b16 %v3916
  %v4083 = vunpack.c.h.b16 %v3916
  %v4084 = vunpack.c.l.b16 %v3917
  %v4085 = vunpack.c.l.b16 %v3918
  %v4086 = vunpack.c.h.b16 %v3918
  %v4087 = vunpack.c.l.b16 %v3919
  %v4088 = vunpack.c.h.b16 %v3919
  %v4089 = vunpack.c.l.b16 %v3920
  %v4090 = vunpack.c.h.b16 %v3920
  %v4091 = vunpack.c.l.b16 %v3921
  %v4092 = vunpack.c.l.b16 %v3922
  %v4093 = vunpack.c.h.b16 %v3922
  %v4094 = vunpack.c.l.b16 %v3923
  %v4095 = vunpack.c.h.b16 %v3923
  %v4096 = vunpack.c.l.b16 %v3924
  %v4097 = vunpack.c.h.b16 %v3924
  %v4098 = vunpack.c.l.b16 %v3925
  %v4099 = vunpack.c.l.b16 %v3926
  %v4100 = vunpack.c.h.b16 %v3926
  %v4101 = vunpack.c.l.b16 %v3927
  %v4102 = vunpack.c.h.b16 %v3927
  %v4103 = vunpack.c.l.b16 %v3928
  %v4104 = vunpack.c.h.b16 %v3928
  %v4105 = vunpack.c.l.b16 %v3929
  %v4106 = vunpack.c.l.b16 %v3930
  %v4107 = vunpack.c.h.b16 %v3930
  %v4108 = vunpack.c.l.b16 %v3931
  %v4109 = vunpack.c.h.b16 %v3931
  %v4110 = vunpack.c.l.b16 %v3932
  %v4111 = vunpack.c.h.b16 %v3932
  %v4112 = vunpack.c.l.b16 %v3933
  %v4113 = vunpack.c.l.b16 %v3934
  %v4114 = vunpack.c.h.b16 %v3934
  %v4115 = vunpack.c.l.b16 %v3935
  %v4116 = vunpack.c.h.b16 %v3935
  %v4117 = vunpack.c.l.b16 %v3936
  %v4118 = vunpack.c.h.b16 %v3936
  %v4119 = vunpack.c.l.b16 %v3937
  %v4120 = vunpack.c.l.b16 %v3938
  %v4121 = vunpack.c.h.b16 %v3938
  %v4122 = vunpack.c.l.b16 %v3939
  %v4123 = vunpack.c.h.b16 %v3939
  %v4124 = vunpack.c.l.b16 %v3940
  %v4125 = vunpack.c.h.b16 %v3940
  %v4126 = vunpack.c.l.b16 %v3941
  %v4127 = vpack.c.b16 %v4078, %v4071
  %v4128 = vpack.c.b16 %v4079, %v4072
  %v4129 = vpack.c.b16 %v4080, %v4073
  %v4130 = vpack.c.b16 %v4081, %v4074
  %v4131 = vpack.c.b16 %v4082, %v4075
  %v4132 = vpack.c.b16 %v4083, %v4076
  %v4133 = vpack.c.b16 %v4084, %v4077
  %v4134 = vpack.c.b16 %v4092, %v4085
  %v4135 = vpack.c.b16 %v4093, %v4086
  %v4136 = vpack.c.b16 %v4094, %v4087
  %v4137 = vpack.c.b16 %v4095, %v4088
  %v4138 = vpack.c.b16 %v4096, %v4089
  %v4139 = vpack.c.b16 %v4097, %v4090
  %v4140 = vpack.c.b16 %v4098, %v4091
  %v4141 = vpack.c.b16 %v4106, %v4099
  %v4142 = vpack.c.b16 %v4107, %v4100
  %v4143 = vpack.c.b16 %v4108, %v4101
  %v4144 = vpack.c.b16 %v4109, %v4102
  %v4145 = vpack.c.b16 %v4110, %v4103
  %v4146 = vpack.c.b16 %v4111, %v4104
  %v4147 = vpack.c.b16 %v4112, %v4105
  %v4148 = vpack.c.b16 %v4120, %v4113
  %v4149 = vpack.c.b16 %v4121, %v4114
  %v4150 = vpack.c.b16 %v4122, %v4115
  %v4151 = vpack.c.b16 %v4123, %v4116
  %v4152 = vpack.c.b16 %v4124, %v4117
  %v4153 = vpack.c.b16 %v4125, %v4118
  %v4154 = vpack.c.b16 %v4126, %v4119
  %v4276 = vunpack.c.l.b16 %v3942
  %v4277 = vunpack.c.l.b16 %v3943
  %v4278 = vunpack.c.l.b16 %v3944
  %v4279 = vunpack.c.l.b16 %v3945
  %v4280 = vunpack.c.l.b16 %v3946
  %v4281 = vunpack.c.l.b16 %v3947
  %v4282 = vunpack.c.l.b16 %v3948
  %v4283 = vunpack.c.l.b16 %v3949
  %v4284 = vunpack.c.l.b16 %v3950
  %v4285 = vunpack.c.l.b16 %v3951
  %v4286 = vunpack.c.l.b16 %v3952
  %v4287 = vunpack.c.l.b16 %v3953
  %v4288 = vunpack.c.l.b16 %v3954
  %v4289 = vunpack.c.l.b16 %v3955
  %v4290 = vunpack.c.l.b16 %v3956
  %v4291 = vunpack.c.l.b16 %v3957
  %v4292 = vunpack.c.l.b16 %v3958
  %v4293 = vunpack.c.l.b16 %v3959
  %v4294 = vunpack.c.l.b16 %v3960
  %v4295 = vunpack.c.l.b16 %v3961
  %v4296 = vunpack.c.l.b16 %v3962
  %v4297 = vunpack.c.l.b16 %v3963
  %v4298 = vunpack.c.l.b16 %v3964
  %v4299 = vunpack.c.l.b16 %v3965
  %v4300 = vunpack.c.l.b16 %v3966
  %v4301 = vunpack.c.l.b16 %v3967
  %v4302 = vunpack.c.l.b16 %v3968
  %v4303 = vunpack.c.l.b16 %v3969
  %v4304 = vunpack.c.l.b16 %v3970
  %v4305 = vunpack.c.l.b16 %v3971
  %v4306 = vunpack.c.l.b16 %v3972
  %v4307 = vunpack.c.l.b16 %v3973
  %v4308 = vunpack.c.l.b16 %v3974
  %v4309 = vunpack.c.l.b16 %v3975
  %v4310 = vunpack.c.l.b16 %v3976
  %v4311 = vunpack.c.l.b16 %v3977
  %v4312 = vunpack.c.l.b16 %v3978
  %v4313 = vunpack.c.l.b16 %v3979
  %v4314 = vunpack.c.l.b16 %v3980
  %v4315 = vunpack.c.l.b16 %v3981
  %v4316 = vunpack.c.l.b16 %v3982
  %v4317 = vunpack.c.l.b16 %v3983
  %v4318 = vunpack.c.l.b16 %v3984
  %v4319 = vunpack.c.l.b16 %v3985
  %v4320 = vunpack.c.l.b16 %v3986
  %v4321 = vunpack.c.l.b16 %v3987
  %v4322 = vunpack.c.l.b16 %v3988
  %v4323 = vunpack.c.l.b16 %v3989
  %v4324 = vunpack.c.l.b16 %v3990
  %v4325 = vunpack.c.l.b16 %v3991
  %v4326 = vunpack.c.l.b16 %v3992
  %v4327 = vunpack.c.l.b16 %v3993
  %v4328 = vunpack.c.l.b16 %v3994
  %v4329 = vunpack.c.l.b16 %v3995
  %v4330 = vunpack.c.l.b16 %v3996
  %v4331 = vunpack.c.l.b16 %v3997
  %v4332 = vunpack.c.l.b16 %v3998
  %v4333 = vunpack.c.l.b16 %v3999
  %v4334 = vunpack.c.l.b16 %v4000
  %v4335 = vunpack.c.l.b16 %v4001
  %v4336 = vunpack.c.l.b16 %v4002
  %v4337 = vunpack.c.l.b16 %v4003
  %v4338 = vunpack.c.l.b16 %v4004
  %v4339 = vunpack.c.l.b16 %v4005
  %v4340 = vunpack.c.l.b16 %v4006
  %v4341 = vunpack.c.l.b16 %v4007
  %v4342 = vunpack.c.l.b16 %v4008
  %v4343 = vunpack.c.l.b16 %v4009
  %v4344 = vunpack.c.l.b16 %v4010
  %v4345 = vunpack.c.l.b16 %v4011
  %v4346 = vunpack.c.l.b16 %v4012
  %v4347 = vunpack.c.l.b16 %v4013
  %v4348 = vunpack.c.l.b16 %v4014
  %v4349 = vunpack.c.l.b16 %v4015
  %v4350 = vunpack.c.l.b16 %v4016
  %v4351 = vunpack.c.l.b16 %v4017
  %v4352 = vunpack.c.l.b16 %v4018
  %v4353 = vunpack.c.l.b16 %v4019
  %v4354 = vunpack.c.l.b16 %v4020
  %v4355 = vunpack.c.l.b16 %v4021
  %v4356 = vunpack.c.l.b16 %v4022
  %v4357 = vunpack.c.l.b16 %v4023
  %v4358 = vunpack.c.l.b16 %v4024
  %v4359 = vunpack.c.l.b16 %v4025
  %v4360 = vunpack.c.l.b16 %v4026
  %v4361 = vunpack.c.l.b16 %v4027
  %v4362 = vunpack.c.l.b16 %v4028
  %v4363 = vunpack.c.l.b16 %v4029
  %v4364 = vunpack.c.l.b16 %v4030
  %v4365 = vunpack.c.l.b16 %v4031
  %v4366 = vunpack.c.l.b16 %v4032
  %v4367 = vunpack.c.l.b16 %v4033
  %v4368 = vunpack.c.l.b16 %v4034
  %v4369 = vunpack.c.l.b16 %v4035
  %v4370 = vunpack.c.l.b16 %v4036
  %v4371 = vunpack.c.l.b16 %v4037
  %v4372 = vunpack.c.l.b16 %v4038
  %v4373 = vpack.c.b16 %v4277, %v4276
  %v4374 = vpack.c.b16 %v4279, %v4278
  %v4375 = vpack.c.b16 %v4281, %v4280
  %v4376 = vpack.c.b16 %v4283, %v4282
  %v4377 = vpack.c.b16 %v4285, %v4284
  %v4378 = vpack.c.b16 %v4287, %v4286
  %v4379 = vpack.c.b16 %v4289, %v4288
  %v4380 = vpack.c.b16 %v4291, %v4290
  %v4381 = vpack.c.b16 %v4293, %v4292
  %v4382 = vpack.c.b16 %v4295, %v4294
  %v4383 = vpack.c.b16 %v4297, %v4296
  %v4384 = vpack.c.b16 %v4299, %v4298
  %v4385 = vpack.c.b16 %v4301, %v4300
  %v4386 = vpack.c.b16 %v4303, %v4302
  %v4387 = vpack.c.b16 %v4305, %v4304
  %v4388 = vpack.c.b16 %v4307, %v4306
  %v4389 = vpack.c.b16 %v4309, %v4308
  %v4390 = vpack.c.b16 %v4311, %v4310
  %v4391 = vpack.c.b16 %v4313, %v4312
  %v4392 = vpack.c.b16 %v4315, %v4314
  %v4393 = vpack.c.b16 %v4317, %v4316
  %v4394 = vpack.c.b16 %v4319, %v4318
  %v4395 = vpack.c.b16 %v4321, %v4320
  %v4396 = vpack.c.b16 %v4323, %v4322
  %v4397 = vpack.c.b16 %v4325, %v4324
  %v4398 = vpack.c.b16 %v4327, %v4326
  %v4399 = vpack.c.b16 %v4329, %v4328
  %v4400 = vpack.c.b16 %v4331, %v4330
  %v4401 = vpack.c.b16 %v4333, %v4332
  %v4402 = vpack.c.b16 %v4335, %v4334
  %v4403 = vpack.c.b16 %v4337, %v4336
  %v4404 = vpack.c.b16 %v4339, %v4338
  %v4405 = vpack.c.b16 %v4341, %v4340
  %v4406 = vpack.c.b16 %v4343, %v4342
  %v4407 = vpack.c.b16 %v4345, %v4344
  %v4408 = vpack.c.b16 %v4347, %v4346
  %v4409 = vpack.c.b16 %v4349, %v4348
  %v4410 = vpack.c.b16 %v4351, %v4350
  %v4411 = vpack.c.b16 %v4353, %v4352
  %v4412 = vpack.c.b16 %v4355, %v4354
  %v4413 = vpack.c.b16 %v4357, %v4356
  %v4414 = vpack.c.b16 %v4359, %v4358
  %v4415 = vpack.c.b16 %v4361, %v4360
  %v4416 = vpack.c.b16 %v4363, %v4362
  %v4417 = vpack.c.b16 %v4365, %v4364
  %v4418 = vpack.c.b16 %v4367, %v4366
  %v4419 = vpack.c.b16 %v4369, %v4368
  %v4420 = vpack.c.b16 %v4371, %v4370
  %v4421 = vpack.c.b16 %v4372, %v4372
  %v4471 = vsel %vm2020, %v4133, 0
  %v4474 = vsel %vm2020, %v4140, 0
  %v4477 = vsel %vm2020, %v4147, 0
  %v4480 = vsel %vm2020, %v4154, 0
  %v4483 = vand.u32 %v4421, %v2071
  %4485 = vmatpush.bf16.msra.mxu0 %v4380
  %4486 = vmatpush.bf16.msra.mxu0 %v4379
  %4487 = vmatpush.bf16.msra.mxu0 %v4378
  %4488 = vmatpush.bf16.msra.mxu0 %v4377
  %4489 = vmatpush.bf16.msra.mxu0 %v4376
  %4490 = vmatpush.bf16.msra.mxu0 %v4375
  %4491 = vmatpush.bf16.msra.mxu0 %v4374
  %4492 = vmatpush.bf16.msra.mxu0 %v4373
  %4493 = vmatmul.bf16.gmra.mxu0 %v4127
  %v4494 = vpop.f32.mrf.mxu0
  %v4495 = vadd.f32 0.0, %v4494
  %v4496 = vpop.f32.mrf.mxu0
  %v4497 = vadd.f32 0.0, %v4496
  %4498 = vmatmul.bf16.gmra.mxu0 %v4134
  %v4499 = vpop.f32.mrf.mxu0
  %v4500 = vadd.f32 0.0, %v4499
  %v4501 = vpop.f32.mrf.mxu0
  %v4502 = vadd.f32 0.0, %v4501
  %4503 = vmatmul.bf16.gmra.mxu0 %v4141
  %v4504 = vpop.f32.mrf.mxu0
  %v4505 = vadd.f32 0.0, %v4504
  %v4506 = vpop.f32.mrf.mxu0
  %v4507 = vadd.f32 0.0, %v4506
  %4508 = vmatmul.bf16.gmra.mxu0 %v4148
  %v4509 = vpop.f32.mrf.mxu0
  %v4510 = vadd.f32 0.0, %v4509
  %v4511 = vpop.f32.mrf.mxu0
  %v4512 = vadd.f32 0.0, %v4511
  %4513 = vdwg.mxu0
  %4514 = vmatpush.bf16.msra.mxu0 %v4388
  %4515 = vmatpush.bf16.msra.mxu0 %v4387
  %4516 = vmatpush.bf16.msra.mxu0 %v4386
  %4517 = vmatpush.bf16.msra.mxu0 %v4385
  %4518 = vmatpush.bf16.msra.mxu0 %v4384
  %4519 = vmatpush.bf16.msra.mxu0 %v4383
  %4520 = vmatpush.bf16.msra.mxu0 %v4382
  %4521 = vmatpush.bf16.msra.mxu0 %v4381
  %4522 = vmatmul.bf16.gmra.mxu0 %v4128
  %v4523 = vpop.f32.mrf.mxu0
  %v4524 = vadd.f32 %v4495, %v4523
  %v4525 = vpop.f32.mrf.mxu0
  %v4526 = vadd.f32 %v4497, %v4525
  %4527 = vmatmul.bf16.gmra.mxu0 %v4135
  %v4528 = vpop.f32.mrf.mxu0
  %v4529 = vadd.f32 %v4500, %v4528
  %v4530 = vpop.f32.mrf.mxu0
  %v4531 = vadd.f32 %v4502, %v4530
  %4532 = vmatmul.bf16.gmra.mxu0 %v4142
  %v4533 = vpop.f32.mrf.mxu0
  %v4534 = vadd.f32 %v4505, %v4533
  %v4535 = vpop.f32.mrf.mxu0
  %v4536 = vadd.f32 %v4507, %v4535
  %4537 = vmatmul.bf16.gmra.mxu0 %v4149
  %v4538 = vpop.f32.mrf.mxu0
  %v4539 = vadd.f32 %v4510, %v4538
  %v4540 = vpop.f32.mrf.mxu0
  %v4541 = vadd.f32 %v4512, %v4540
  %4542 = vdwg.mxu0
  %4543 = vmatpush.bf16.msra.mxu0 %v4396
  %4544 = vmatpush.bf16.msra.mxu0 %v4395
  %4545 = vmatpush.bf16.msra.mxu0 %v4394
  %4546 = vmatpush.bf16.msra.mxu0 %v4393
  %4547 = vmatpush.bf16.msra.mxu0 %v4392
  %4548 = vmatpush.bf16.msra.mxu0 %v4391
  %4549 = vmatpush.bf16.msra.mxu0 %v4390
  %4550 = vmatpush.bf16.msra.mxu0 %v4389
  %4551 = vmatmul.bf16.gmra.mxu0 %v4129
  %v4552 = vpop.f32.mrf.mxu0
  %v4553 = vadd.f32 %v4524, %v4552
  %v4554 = vpop.f32.mrf.mxu0
  %v4555 = vadd.f32 %v4526, %v4554
  %4556 = vmatmul.bf16.gmra.mxu0 %v4136
  %v4557 = vpop.f32.mrf.mxu0
  %v4558 = vadd.f32 %v4529, %v4557
  %v4559 = vpop.f32.mrf.mxu0
  %v4560 = vadd.f32 %v4531, %v4559
  %4561 = vmatmul.bf16.gmra.mxu0 %v4143
  %v4562 = vpop.f32.mrf.mxu0
  %v4563 = vadd.f32 %v4534, %v4562
  %v4564 = vpop.f32.mrf.mxu0
  %v4565 = vadd.f32 %v4536, %v4564
  %4566 = vmatmul.bf16.gmra.mxu0 %v4150
  %v4567 = vpop.f32.mrf.mxu0
  %v4568 = vadd.f32 %v4539, %v4567
  %v4569 = vpop.f32.mrf.mxu0
  %v4570 = vadd.f32 %v4541, %v4569
  %4571 = vdwg.mxu0
  %4572 = vmatpush.bf16.msra.mxu0 %v4404
  %4573 = vmatpush.bf16.msra.mxu0 %v4403
  %4574 = vmatpush.bf16.msra.mxu0 %v4402
  %4575 = vmatpush.bf16.msra.mxu0 %v4401
  %4576 = vmatpush.bf16.msra.mxu0 %v4400
  %4577 = vmatpush.bf16.msra.mxu0 %v4399
  %4578 = vmatpush.bf16.msra.mxu0 %v4398
  %4579 = vmatpush.bf16.msra.mxu0 %v4397
  %4580 = vmatmul.bf16.gmra.mxu0 %v4130
  %v4581 = vpop.f32.mrf.mxu0
  %v4582 = vadd.f32 %v4553, %v4581
  %v4583 = vpop.f32.mrf.mxu0
  %v4584 = vadd.f32 %v4555, %v4583
  %4585 = vmatmul.bf16.gmra.mxu0 %v4137
  %v4586 = vpop.f32.mrf.mxu0
  %v4587 = vadd.f32 %v4558, %v4586
  %v4588 = vpop.f32.mrf.mxu0
  %v4589 = vadd.f32 %v4560, %v4588
  %4590 = vmatmul.bf16.gmra.mxu0 %v4144
  %v4591 = vpop.f32.mrf.mxu0
  %v4592 = vadd.f32 %v4563, %v4591
  %v4593 = vpop.f32.mrf.mxu0
  %v4594 = vadd.f32 %v4565, %v4593
  %4595 = vmatmul.bf16.gmra.mxu0 %v4151
  %v4596 = vpop.f32.mrf.mxu0
  %v4597 = vadd.f32 %v4568, %v4596
  %v4598 = vpop.f32.mrf.mxu0
  %v4599 = vadd.f32 %v4570, %v4598
  %4600 = vdwg.mxu0
  %4601 = vmatpush.bf16.msra.mxu0 %v4412
  %4602 = vmatpush.bf16.msra.mxu0 %v4411
  %4603 = vmatpush.bf16.msra.mxu0 %v4410
  %4604 = vmatpush.bf16.msra.mxu0 %v4409
  %4605 = vmatpush.bf16.msra.mxu0 %v4408
  %4606 = vmatpush.bf16.msra.mxu0 %v4407
  %4607 = vmatpush.bf16.msra.mxu0 %v4406
  %4608 = vmatpush.bf16.msra.mxu0 %v4405
  %4609 = vmatmul.bf16.gmra.mxu0 %v4131
  %v4610 = vpop.f32.mrf.mxu0
  %v4611 = vadd.f32 %v4582, %v4610
  %v4612 = vpop.f32.mrf.mxu0
  %v4613 = vadd.f32 %v4584, %v4612
  %4614 = vmatmul.bf16.gmra.mxu0 %v4138
  %v4615 = vpop.f32.mrf.mxu0
  %v4616 = vadd.f32 %v4587, %v4615
  %v4617 = vpop.f32.mrf.mxu0
  %v4618 = vadd.f32 %v4589, %v4617
  %4619 = vmatmul.bf16.gmra.mxu0 %v4145
  %v4620 = vpop.f32.mrf.mxu0
  %v4621 = vadd.f32 %v4592, %v4620
  %v4622 = vpop.f32.mrf.mxu0
  %v4623 = vadd.f32 %v4594, %v4622
  %4624 = vmatmul.bf16.gmra.mxu0 %v4152
  %v4625 = vpop.f32.mrf.mxu0
  %v4626 = vadd.f32 %v4597, %v4625
  %v4627 = vpop.f32.mrf.mxu0
  %v4628 = vadd.f32 %v4599, %v4627
  %4629 = vdwg.mxu0
  %4630 = vmatpush.bf16.msra.mxu0 %v4420
  %4631 = vmatpush.bf16.msra.mxu0 %v4419
  %4632 = vmatpush.bf16.msra.mxu0 %v4418
  %4633 = vmatpush.bf16.msra.mxu0 %v4417
  %4634 = vmatpush.bf16.msra.mxu0 %v4416
  %4635 = vmatpush.bf16.msra.mxu0 %v4415
  %4636 = vmatpush.bf16.msra.mxu0 %v4414
  %4637 = vmatpush.bf16.msra.mxu0 %v4413
  %4638 = vmatmul.bf16.gmra.mxu0 %v4132
  %v4639 = vpop.f32.mrf.mxu0
  %v4640 = vadd.f32 %v4611, %v4639
  %v4641 = vpop.f32.mrf.mxu0
  %v4642 = vadd.f32 %v4613, %v4641
  %4643 = vmatmul.bf16.gmra.mxu0 %v4139
  %v4644 = vpop.f32.mrf.mxu0
  %v4645 = vadd.f32 %v4616, %v4644
  %v4646 = vpop.f32.mrf.mxu0
  %v4647 = vadd.f32 %v4618, %v4646
  %4648 = vmatmul.bf16.gmra.mxu0 %v4146
  %v4649 = vpop.f32.mrf.mxu0
  %v4650 = vadd.f32 %v4621, %v4649
  %v4651 = vpop.f32.mrf.mxu0
  %v4652 = vadd.f32 %v4623, %v4651
  %4653 = vmatmul.bf16.gmra.mxu0 %v4153
  %v4654 = vpop.f32.mrf.mxu0
  %v4655 = vadd.f32 %v4626, %v4654
  %v4656 = vpop.f32.mrf.mxu0
  %v4657 = vadd.f32 %v4628, %v4656
  %4658 = vdwg.mxu0
  %4659 = vmatpush.bf16.msra.mxu0 0
  %4660 = vmatpush.bf16.msra.mxu0 0
  %4661 = vmatpush.bf16.msra.mxu0 0
  %4662 = vmatpush.bf16.msra.mxu0 0
  %4663 = vmatpush.bf16.msra.mxu0 0
  %4664 = vmatpush.bf16.msra.mxu0 0
  %4665 = vmatpush.bf16.msra.mxu0 0
  %4666 = vmatpush.bf16.msra.mxu0 %v4483
  %4667 = vmatmul.bf16.gmra.mxu0 %v4471
  %v4668 = vpop.f32.mrf.mxu0
  %v4669 = vadd.f32 %v4640, %v4668
  %v4670 = vpop.f32.mrf.mxu0
  %v4671 = vadd.f32 %v4642, %v4670
  %4672 = vmatmul.bf16.gmra.mxu0 %v4474
  %v4673 = vpop.f32.mrf.mxu0
  %v4674 = vadd.f32 %v4645, %v4673
  %v4675 = vpop.f32.mrf.mxu0
  %v4676 = vadd.f32 %v4647, %v4675
  %4677 = vmatmul.bf16.gmra.mxu0 %v4477
  %v4678 = vpop.f32.mrf.mxu0
  %v4679 = vadd.f32 %v4650, %v4678
  %v4680 = vpop.f32.mrf.mxu0
  %v4681 = vadd.f32 %v4652, %v4680
  %4682 = vmatmul.bf16.gmra.mxu0 %v4480
  %v4683 = vpop.f32.mrf.mxu0
  %v4684 = vadd.f32 %v4655, %v4683
  %v4685 = vpop.f32.mrf.mxu0
  %v4686 = vadd.f32 %v4657, %v4685
  %4687 = vdwg.mxu0
  %4688 = vadd.xlane.f32.xlu0 %v4669
  %v4689 = vpop.xlane.xlu0 %4688
  %4690 = vadd.xlane.f32.xlu0 %v4671
  %v4691 = vpop.xlane.xlu0 %4690
  %4692 = vadd.xlane.f32.xlu0 %v4674
  %v4693 = vpop.xlane.xlu0 %4692
  %4694 = vadd.xlane.f32.xlu0 %v4676
  %v4695 = vpop.xlane.xlu0 %4694
  %4696 = vadd.xlane.f32.xlu0 %v4679
  %v4697 = vpop.xlane.xlu0 %4696
  %4698 = vadd.xlane.f32.xlu0 %v4681
  %v4699 = vpop.xlane.xlu0 %4698
  %4700 = vadd.xlane.f32.xlu0 %v4684
  %v4701 = vpop.xlane.xlu0 %4700
  %4702 = vadd.xlane.f32.xlu0 %v4686
  %v4703 = vpop.xlane.xlu0 %4702
  %v4704 = vmul.f32 %v4669, %v4669
  %v4705 = vmul.f32 %v4671, %v4671
  %v4706 = vmul.f32 %v4674, %v4674
  %v4707 = vmul.f32 %v4676, %v4676
  %v4708 = vmul.f32 %v4679, %v4679
  %v4709 = vmul.f32 %v4681, %v4681
  %v4710 = vmul.f32 %v4684, %v4684
  %v4711 = vmul.f32 %v4686, %v4686
  %4712 = vadd.xlane.f32.xlu0 %v4704
  %v4713 = vpop.xlane.xlu0 %4712
  %4714 = vadd.xlane.f32.xlu0 %v4705
  %v4715 = vpop.xlane.xlu0 %4714
  %4716 = vadd.xlane.f32.xlu0 %v4706
  %v4717 = vpop.xlane.xlu0 %4716
  %4718 = vadd.xlane.f32.xlu0 %v4707
  %v4719 = vpop.xlane.xlu0 %4718
  %4720 = vadd.xlane.f32.xlu0 %v4708
  %v4721 = vpop.xlane.xlu0 %4720
  %4722 = vadd.xlane.f32.xlu0 %v4709
  %v4723 = vpop.xlane.xlu0 %4722
  %4724 = vadd.xlane.f32.xlu0 %v4710
  %v4725 = vpop.xlane.xlu0 %4724
  %4726 = vadd.xlane.f32.xlu0 %v4711
  %v4727 = vpop.xlane.xlu0 %4726
  %v4728 = vmul.f32 %v4689, 0.0078125
  %v4729 = vmul.f32 %v4691, 0.0078125
  %v4730 = vmul.f32 %v4693, 0.0078125
  %v4731 = vmul.f32 %v4695, 0.0078125
  %v4732 = vmul.f32 %v4697, 0.0078125
  %v4733 = vmul.f32 %v4699, 0.0078125
  %v4734 = vmul.f32 %v4701, 0.0078125
  %v4735 = vmul.f32 %v4703, 0.0078125
  %v4736 = vmul.f32 %v4713, 0.0078125
  %v4737 = vmul.f32 %v4715, 0.0078125
  %v4738 = vmul.f32 %v4717, 0.0078125
  %v4739 = vmul.f32 %v4719, 0.0078125
  %v4740 = vmul.f32 %v4721, 0.0078125
  %v4741 = vmul.f32 %v4723, 0.0078125
  %v4742 = vmul.f32 %v4725, 0.0078125
  %v4743 = vmul.f32 %v4727, 0.0078125
  %v4744 = vmul.f32 %v4728, %v4728
  %v4745 = vmul.f32 %v4729, %v4729
  %v4746 = vmul.f32 %v4730, %v4730
  %v4747 = vmul.f32 %v4731, %v4731
  %v4748 = vmul.f32 %v4732, %v4732
  %v4749 = vmul.f32 %v4733, %v4733
  %v4750 = vmul.f32 %v4734, %v4734
  %v4751 = vmul.f32 %v4735, %v4735
  %v4752 = vsub.f32 %v4736, %v4744
  %v4753 = vsub.f32 %v4737, %v4745
  %v4754 = vsub.f32 %v4738, %v4746
  %v4755 = vsub.f32 %v4739, %v4747
  %v4756 = vsub.f32 %v4740, %v4748
  %v4757 = vsub.f32 %v4741, %v4749
  %v4758 = vsub.f32 %v4742, %v4750
  %v4759 = vsub.f32 %v4743, %v4751
  %v4760 = vsub.f32 %v4669, %v4728
  %v4761 = vsub.f32 %v4671, %v4729
  %v4762 = vsub.f32 %v4674, %v4730
  %v4763 = vsub.f32 %v4676, %v4731
  %v4764 = vsub.f32 %v4679, %v4732
  %v4765 = vsub.f32 %v4681, %v4733
  %v4766 = vsub.f32 %v4684, %v4734
  %v4767 = vsub.f32 %v4686, %v4735
  %v4768 = vadd.f32 %v4752, 1e-05
  %v4769 = vadd.f32 %v4753, 1e-05
  %v4770 = vadd.f32 %v4754, 1e-05
  %v4771 = vadd.f32 %v4755, 1e-05
  %v4772 = vadd.f32 %v4756, 1e-05
  %v4773 = vadd.f32 %v4757, 1e-05
  %v4774 = vadd.f32 %v4758, 1e-05
  %v4775 = vadd.f32 %v4759, 1e-05
  %v4776 = vrsqrt.pop %v4768
  %v4777 = vmul.f32 %v4776, %v4768
  %v4778 = vmul.f32 %v4777, %v4776
  %v4779 = vmul.f32 0.5, %v4778
  %v4780 = vsub.f32 1.5, %v4779
  %v4781 = vmul.f32 %v4776, %v4780
  %vm4782 = vweird.f32 %v4768
  %vm4783 = vweird.f32 %v4776
  %vm4784 = vmor %vm4782, %vm4783
  %v4785 = vsel %vm4784, %v4776, %v4781
  %v4786 = vrsqrt.pop %v4769
  %v4787 = vmul.f32 %v4786, %v4769
  %v4788 = vmul.f32 %v4787, %v4786
  %v4789 = vmul.f32 0.5, %v4788
  %v4790 = vsub.f32 1.5, %v4789
  %v4791 = vmul.f32 %v4786, %v4790
  %vm4792 = vweird.f32 %v4769
  %vm4793 = vweird.f32 %v4786
  %vm4794 = vmor %vm4792, %vm4793
  %v4795 = vsel %vm4794, %v4786, %v4791
  %v4796 = vrsqrt.pop %v4770
  %v4797 = vmul.f32 %v4796, %v4770
  %v4798 = vmul.f32 %v4797, %v4796
  %v4799 = vmul.f32 0.5, %v4798
  %v4800 = vsub.f32 1.5, %v4799
  %v4801 = vmul.f32 %v4796, %v4800
  %vm4802 = vweird.f32 %v4770
  %vm4803 = vweird.f32 %v4796
  %vm4804 = vmor %vm4802, %vm4803
  %v4805 = vsel %vm4804, %v4796, %v4801
  %v4806 = vrsqrt.pop %v4771
  %v4807 = vmul.f32 %v4806, %v4771
  %v4808 = vmul.f32 %v4807, %v4806
  %v4809 = vmul.f32 0.5, %v4808
  %v4810 = vsub.f32 1.5, %v4809
  %v4811 = vmul.f32 %v4806, %v4810
  %vm4812 = vweird.f32 %v4771
  %vm4813 = vweird.f32 %v4806
  %vm4814 = vmor %vm4812, %vm4813
  %v4815 = vsel %vm4814, %v4806, %v4811
  %v4816 = vrsqrt.pop %v4772
  %v4817 = vmul.f32 %v4816, %v4772
  %v4818 = vmul.f32 %v4817, %v4816
  %v4819 = vmul.f32 0.5, %v4818
  %v4820 = vsub.f32 1.5, %v4819
  %v4821 = vmul.f32 %v4816, %v4820
  %vm4822 = vweird.f32 %v4772
  %vm4823 = vweird.f32 %v4816
  %vm4824 = vmor %vm4822, %vm4823
  %v4825 = vsel %vm4824, %v4816, %v4821
  %v4826 = vrsqrt.pop %v4773
  %v4827 = vmul.f32 %v4826, %v4773
  %v4828 = vmul.f32 %v4827, %v4826
  %v4829 = vmul.f32 0.5, %v4828
  %v4830 = vsub.f32 1.5, %v4829
  %v4831 = vmul.f32 %v4826, %v4830
  %vm4832 = vweird.f32 %v4773
  %vm4833 = vweird.f32 %v4826
  %vm4834 = vmor %vm4832, %vm4833
  %v4835 = vsel %vm4834, %v4826, %v4831
  %v4836 = vrsqrt.pop %v4774
  %v4837 = vmul.f32 %v4836, %v4774
  %v4838 = vmul.f32 %v4837, %v4836
  %v4839 = vmul.f32 0.5, %v4838
  %v4840 = vsub.f32 1.5, %v4839
  %v4841 = vmul.f32 %v4836, %v4840
  %vm4842 = vweird.f32 %v4774
  %vm4843 = vweird.f32 %v4836
  %vm4844 = vmor %vm4842, %vm4843
  %v4845 = vsel %vm4844, %v4836, %v4841
  %v4846 = vrsqrt.pop %v4775
  %v4847 = vmul.f32 %v4846, %v4775
  %v4848 = vmul.f32 %v4847, %v4846
  %v4849 = vmul.f32 0.5, %v4848
  %v4850 = vsub.f32 1.5, %v4849
  %v4851 = vmul.f32 %v4846, %v4850
  %vm4852 = vweird.f32 %v4775
  %vm4853 = vweird.f32 %v4846
  %vm4854 = vmor %vm4852, %vm4853
  %v4855 = vsel %vm4854, %v4846, %v4851
  %v4856 = vmul.f32 %v4760, %v4785
  %v4857 = vmul.f32 %v4761, %v4795
  %v4858 = vmul.f32 %v4762, %v4805
  %v4859 = vmul.f32 %v4763, %v4815
  %v4860 = vmul.f32 %v4764, %v4825
  %v4861 = vmul.f32 %v4765, %v4835
  %v4862 = vmul.f32 %v4766, %v4845
  %v4863 = vmul.f32 %v4767, %v4855
  %v4864 = vmax.f32 %v4856, 0.0
  %v4865 = vmax.f32 %v4857, 0.0
  %v4866 = vmax.f32 %v4858, 0.0
  %v4867 = vmax.f32 %v4859, 0.0
  %v4868 = vmax.f32 %v4860, 0.0
  %v4869 = vmax.f32 %v4861, 0.0
  %v4870 = vmax.f32 %v4862, 0.0
  %v4871 = vmax.f32 %v4863, 0.0
  %v4872 = vpack.c.bf16 %v4865, %v4864
  %v4873 = vpack.c.bf16 %v4867, %v4866
  %v4874 = vpack.c.bf16 %v4869, %v4868
  %v4875 = vpack.c.bf16 %v4871, %v4870
  %v4876 = vld [vmem:[%s5] sm:$0xf]
  %v4877 = vld [vmem:[%s5 + $0x4] sm:$0xf]
  %v4878 = vld [vmem:[%s5 + $0x8] sm:$0xf]
  %v4879 = vld [vmem:[%s5 + $0xc] sm:$0xf]
  %v4880 = vld [vmem:[%s5 + $0x10] sm:$0xf]
  %v4881 = vld [vmem:[%s5 + $0x14] sm:$0xf]
  %v4882 = vld [vmem:[%s5 + $0x18] sm:$0xf]
  %v4883 = vld [vmem:[%s5 + $0x1c] sm:$0xf]
  %v4884 = vld [vmem:[%s5 + $0x20] sm:$0xf]
  %v4885 = vld [vmem:[%s5 + $0x24] sm:$0xf]
  %v4886 = vld [vmem:[%s5 + $0x28] sm:$0xf]
  %v4887 = vld [vmem:[%s5 + $0x2c] sm:$0xf]
  %v4888 = vld [vmem:[%s5 + $0x30] sm:$0xf]
  %v4889 = vld [vmem:[%s5 + $0x34] sm:$0xf]
  %v4890 = vld [vmem:[%s5 + $0x38] sm:$0xf]
  %v4891 = vld [vmem:[%s5 + $0x3c] sm:$0xf]
  %v4892 = vld [vmem:[%s6] sm:$0x1]
  %v4894 = vperm.slane %v4892, 0
  %v4912 = vunpack.c.l.b16 %v4876
  %v4913 = vunpack.c.l.b16 %v4877
  %v4914 = vunpack.c.l.b16 %v4878
  %v4915 = vunpack.c.l.b16 %v4879
  %v4916 = vunpack.c.l.b16 %v4880
  %v4917 = vunpack.c.l.b16 %v4881
  %v4918 = vunpack.c.l.b16 %v4882
  %v4919 = vunpack.c.l.b16 %v4883
  %v4920 = vunpack.c.l.b16 %v4884
  %v4921 = vunpack.c.l.b16 %v4885
  %v4922 = vunpack.c.l.b16 %v4886
  %v4923 = vunpack.c.l.b16 %v4887
  %v4924 = vunpack.c.l.b16 %v4888
  %v4925 = vunpack.c.l.b16 %v4889
  %v4926 = vunpack.c.l.b16 %v4890
  %v4927 = vunpack.c.l.b16 %v4891
  %v4928 = vpack.c.b16 %v4913, %v4912
  %v4929 = vpack.c.b16 %v4915, %v4914
  %v4930 = vpack.c.b16 %v4917, %v4916
  %v4931 = vpack.c.b16 %v4919, %v4918
  %v4932 = vpack.c.b16 %v4921, %v4920
  %v4933 = vpack.c.b16 %v4923, %v4922
  %v4934 = vpack.c.b16 %v4925, %v4924
  %v4935 = vpack.c.b16 %v4927, %v4926
  %4944 = vmatpush.bf16.msra.mxu0 %v4935
  %4945 = vmatpush.bf16.msra.mxu0 %v4934
  %4946 = vmatpush.bf16.msra.mxu0 %v4933
  %4947 = vmatpush.bf16.msra.mxu0 %v4932
  %4948 = vmatpush.bf16.msra.mxu0 %v4931
  %4949 = vmatpush.bf16.msra.mxu0 %v4930
  %4950 = vmatpush.bf16.msra.mxu0 %v4929
  %4951 = vmatpush.bf16.msra.mxu0 %v4928
  %4952 = vmatmul.bf16.gmra.mxu0 %v4872
  %v4953 = vpop.f32.mrf.mxu0
  %v4954 = vadd.f32 %v4894, %v4953
  %v4955 = vpop.f32.mrf.mxu0
  %v4956 = vadd.f32 %v4894, %v4955
  %4957 = vmatmul.bf16.gmra.mxu0 %v4873
  %v4958 = vpop.f32.mrf.mxu0
  %v4959 = vadd.f32 %v4894, %v4958
  %v4960 = vpop.f32.mrf.mxu0
  %v4961 = vadd.f32 %v4894, %v4960
  %4962 = vmatmul.bf16.gmra.mxu0 %v4874
  %v4963 = vpop.f32.mrf.mxu0
  %v4964 = vadd.f32 %v4894, %v4963
  %v4965 = vpop.f32.mrf.mxu0
  %v4966 = vadd.f32 %v4894, %v4965
  %4967 = vmatmul.bf16.gmra.mxu0 %v4875
  %v4968 = vpop.f32.mrf.mxu0
  %v4969 = vadd.f32 %v4894, %v4968
  %v4970 = vpop.f32.mrf.mxu0
  %v4971 = vadd.f32 %v4894, %v4970
  %4972 = vdwg.mxu0
  %4973 = vst [vmem:[%s7] sm:$0xff] %v4954
  %4974 = vst [vmem:[%s7 + $0x8] sm:$0xff] %v4956
  %4975 = vst [vmem:[%s7 + $0x10] sm:$0xff] %v4959
  %4976 = vst [vmem:[%s7 + $0x18] sm:$0xff] %v4961
  %4977 = vst [vmem:[%s7 + $0x20] sm:$0xff] %v4964
  %4978 = vst [vmem:[%s7 + $0x28] sm:$0xff] %v4966
  %4979 = vst [vmem:[%s7 + $0x30] sm:$0xff] %v4969
  %4980 = vst [vmem:[%s7 + $0x38] sm:$0xff] %v4971
  // Predicated region
  $region30: #{lstm_cnn_forward.1} parent=0 // pred_check
    _
  $region31: #{lstm_cnn_forward.1} parent=0 // pred_check_branch
    %4982 = sbr.rel (0) target = $region33
  $region32: #{lstm_cnn_forward.1} parent=0 // pred_region
    _
  $region33: #{lstm_cnn_forward.1} parent=0 // pred_fallthru
    _
  // Predicated region
  $region34: #{lstm_cnn_forward.1} parent=0 // pred_check
    _
  $region35: #{lstm_cnn_forward.1} parent=0 // pred_check_branch
    %4984 = sbr.rel (0) target = $region37
  $region36: #{lstm_cnn_forward.1} parent=0 // pred_region
    _
  $region37: #{lstm_cnn_forward.1} parent=0 // pred_fallthru
    _

</llo_original>
